<compile_context>
chip_gen: v7x
topology: tpu7x:2x2x1
jax: 0.10.0
libtpu: 0.0.40
codegen_flags: <defaults>
</compile_context>

<pallas_src>
import math
import jax
import jax.numpy as jnp
from jax.experimental import pallas as pl
from jax.experimental.pallas import tpu as pltpu

EPS = 1e-6
NEG_INF = -1000000000.0


def _make_kernel(H, d_k, S, D):
    scale = 1.0 / math.sqrt(d_k)

    def kernel(x_ref, mask_ref,
               a1_ref, g1_ref,
               wq_ref, bq_ref, wk_ref, bk_ref, wv_ref, bv_ref,
               wo_ref, bo_ref,
               a2_ref, g2_ref,
               w1_ref, c1_ref, w2_ref, c2_ref,
               out_ref, attn_ref):
        bf16 = jnp.bfloat16

        x = x_ref[0]                                        # (S, D) f32
        # key mask, computed once and broadcast over heads + query positions
        mask0 = (mask_ref[0] == 0).reshape(1, 1, S)         # (1, 1, S) bool

        def norm(v, alpha, bias):
            mean = jnp.mean(v, axis=-1, keepdims=True)
            diff = v - mean
            # torch.std default is the unbiased estimator (ddof=1)
            var = jnp.sum(diff * diff, axis=-1, keepdims=True) / (D - 1)
            # exact torch eps placement: alpha*(x-mean)/(std+eps)+bias; the
            # divide runs on the EUP instead of the VALU.
            inv = pl.reciprocal(jnp.sqrt(var) + EPS, approx=True)
            return alpha * diff * inv + bias

        # ---- self-attention sublayer ----
        x2 = norm(x, a1_ref[...], g1_ref[...])
        x2b = x2.astype(bf16)                               # bf16 MXU input
        # fold 1/sqrt(d_k) into q once instead of scaling every (S,S) score tile
        q = (jnp.dot(x2b, wq_ref[...], preferred_element_type=jnp.float32)
             + bq_ref[...]) * scale
        k = jnp.dot(x2b, wk_ref[...], preferred_element_type=jnp.float32) + bk_ref[...]
        v = jnp.dot(x2b, wv_ref[...], preferred_element_type=jnp.float32) + bv_ref[...]

        # batched heads: (S, D) -> (H, S, d_k); cast to bf16 first so the
        # relayout moves half the bytes. Matches torch .view(..,H,d_k).transpose(1,2)
        qh = jnp.swapaxes(q.astype(bf16).reshape(S, H, d_k), 0, 1)   # (H, S, d_k)
        kh = jnp.swapaxes(k.astype(bf16).reshape(S, H, d_k), 0, 1)
        vh = jnp.swapaxes(v.astype(bf16).reshape(S, H, d_k), 0, 1)

        s = jnp.einsum('hqd,hkd->hqk', qh, kh,
                       preferred_element_type=jnp.float32)  # (H, S, S) f32
        # masked_fill(mask == 0, -1e9): replacement (not additive bias) so that
        # fully-masked rows give a uniform softmax, exactly as in torch.
        s = jnp.where(mask0, NEG_INF, s)
        s = s - jnp.max(s, axis=-1, keepdims=True)           # stable softmax
        e = jnp.exp(s)
        p = e * pl.reciprocal(jnp.sum(e, axis=-1, keepdims=True), approx=True)

        attn_ref[0] = p                                      # (H, S, S), one store

        oh = jnp.einsum('hqk,hkd->hqd', p.astype(bf16), vh,
                        preferred_element_type=jnp.float32)  # (H, S, d_k)
        # fused head-concat + output projection:
        #   concat(S, H*d_k) @ wo == sum_h  o[h] @ wo[h]   with wo as (H, d_k, D)
        proj = jnp.einsum('hqd,hdE->hqE', oh.astype(bf16), wo_ref[...],
                          preferred_element_type=jnp.float32)          # (H, S, D)
        attn_out = jnp.sum(proj, axis=0) + bo_ref[...]                 # (S, D)

        x = x + attn_out

        # ---- feed-forward sublayer ----
        x2 = norm(x, a2_ref[...], g2_ref[...])
        h1 = jnp.maximum(
            jnp.dot(x2.astype(bf16), w1_ref[...],
                    preferred_element_type=jnp.float32) + c1_ref[...],
            0.0)
        ff = jnp.dot(h1.astype(bf16), w2_ref[...],
                     preferred_element_type=jnp.float32) + c2_ref[...]

        out_ref[0] = x + ff

    return kernel


def encoder_layer_forward(x, mask, params, heads):
    B, S, D = x.shape
    d_k = D // heads
    kernel = _make_kernel(heads, d_k, S, D)
    bf16 = jnp.bfloat16

    # Pre-cast matmul weights to bf16 (halves HBM->VMEM DMA; MXU runs at bf16
    # peak). Biases / LayerNorm params stay f32. wo is reshaped per-head for
    # the fused concat+projection.
    wq = params["wq"].astype(bf16)
    wk = params["wk"].astype(bf16)
    wv = params["wv"].astype(bf16)
    wo = params["wo"].astype(bf16).reshape(heads, d_k, D)
    w1 = params["w1"].astype(bf16)
    w2 = params["w2"].astype(bf16)

    weight_args = [
        params["alpha1"], params["bias1"],
        wq, params["bq"], wk, params["bk"], wv, params["bv"],
        wo, params["bo"],
        params["alpha2"], params["bias2"],
        w1, params["c1"], w2, params["c2"],
    ]

    def full_spec(arr):
        nd = arr.ndim
        # batch-invariant: constant index_map, so the block is fetched once and
        # re-used across all grid steps. (Production/v7x: single-buffer these
        # with pipeline_mode=pl.Buffered(1) to halve weight VMEM.)
        return pl.BlockSpec(arr.shape, lambda b, _nd=nd: (0,) * _nd)

    in_specs = [
        pl.BlockSpec((1, S, D), lambda b: (b, 0, 0)),      # x, one batch element per step
        pl.BlockSpec((1, 1, S), lambda b: (b, 0, 0)),      # mask
    ] + [full_spec(w) for w in weight_args]                # weights: full, batch-invariant

    out_specs = [
        pl.BlockSpec((1, S, D), lambda b: (b, 0, 0)),            # x out
        pl.BlockSpec((1, heads, S, S), lambda b: (b, 0, 0, 0)),  # attention probabilities
    ]

    out_shape = [
        jax.ShapeDtypeStruct((B, S, D), jnp.float32),
        jax.ShapeDtypeStruct((B, heads, S, S), jnp.float32),
    ]

    # TODO(synk): at production S / d_ff add flash-style query-block tiling and
    # a d_ff grid axis (VMEM accumulator with pl.when init/finalize), sized for
    # v7x's 64 MiB VMEM; raise vmem_limit_bytes accordingly on v6e.
    fn = pl.pallas_call(
        kernel,
        out_shape=out_shape,
        grid_spec=pltpu.PrefetchScalarGridSpec(
            num_scalar_prefetch=0,
            grid=(B,),
            in_specs=in_specs,
            out_specs=out_specs,
        ),
        compiler_params=pltpu.CompilerParams(
            dimension_semantics=("parallel",),      # batch steps shard across TCs
            vmem_limit_bytes=32 * 1024 * 1024,      # safe on v5e/v6e/v7x at these shapes
        ),
    )
    return fn(x, mask, *weight_args)


def init_params(key, D, d_ff):
    ks = jax.random.split(key, 12)

    def lin(kw, kb, fin, fout):
        w = jax.random.normal(kw, (fin, fout), jnp.float32) * (1.0 / math.sqrt(fin))
        b = jax.random.normal(kb, (1, fout), jnp.float32) * 0.01
        return w, b

    wq, bq = lin(ks[0], ks[1], D, D)
    wk, bk = lin(ks[2], ks[3], D, D)
    wv, bv = lin(ks[4], ks[5], D, D)
    wo, bo = lin(ks[6], ks[7], D, D)
    w1, c1 = lin(ks[8], ks[9], D, d_ff)
    w2, c2 = lin(ks[10], ks[11], d_ff, D)

    return dict(
        alpha1=jnp.ones((1, D), jnp.float32), bias1=jnp.zeros((1, D), jnp.float32),
        wq=wq, bq=bq, wk=wk, bk=bk, wv=wv, bv=bv, wo=wo, bo=bo,
        alpha2=jnp.ones((1, D), jnp.float32), bias2=jnp.zeros((1, D), jnp.float32),
        w1=w1, c1=c1, w2=w2, c2=c2,
    )


if __name__ == "__main__":
    B, S, D, H = 2, 8, 32, 4          # batch, seq, embedding_dim, heads
    D_FF = 2048                       # FeedForward default d_ff

    key = jax.random.PRNGKey(0)
    k_x, k_p = jax.random.split(key)

    x = jax.random.normal(k_x, (B, S, D), jnp.float32)
    mask = jnp.ones((B, 1, S), jnp.float32)
    mask = mask.at[1, 0, S - 2:].set(0.0)   # mask out the last 2 keys of batch element 1

    params = init_params(k_p, D, D_FF)

    out, enc_attn = encoder_layer_forward(x, mask, params, heads=H)
    jax.block_until_ready((out, enc_attn))

    assert out.shape == (B, S, D)
    assert enc_attn.shape == (B, H, S, S)
    assert bool(jnp.all(jnp.isfinite(out)))
    assert bool(jnp.all(jnp.isfinite(enc_attn)))
    print("KERNEL_OK")
</pallas_src>

<mosaic_0001>
module attributes {stable_mosaic.version = 11 : i64} {
  func.func @kernel(%arg0: i32, %arg1: memref<1x8x32xf32, #tpu.memory_space<vmem>>, %arg2: memref<1x1x8xf32, #tpu.memory_space<vmem>>, %arg3: memref<1x32xf32, #tpu.memory_space<vmem>>, %arg4: memref<1x32xf32, #tpu.memory_space<vmem>>, %arg5: memref<32x32xbf16, #tpu.memory_space<vmem>>, %arg6: memref<1x32xf32, #tpu.memory_space<vmem>>, %arg7: memref<32x32xbf16, #tpu.memory_space<vmem>>, %arg8: memref<1x32xf32, #tpu.memory_space<vmem>>, %arg9: memref<32x32xbf16, #tpu.memory_space<vmem>>, %arg10: memref<1x32xf32, #tpu.memory_space<vmem>>, %arg11: memref<4x8x32xbf16, #tpu.memory_space<vmem>>, %arg12: memref<1x32xf32, #tpu.memory_space<vmem>>, %arg13: memref<1x32xf32, #tpu.memory_space<vmem>>, %arg14: memref<1x32xf32, #tpu.memory_space<vmem>>, %arg15: memref<32x2048xbf16, #tpu.memory_space<vmem>>, %arg16: memref<1x2048xf32, #tpu.memory_space<vmem>>, %arg17: memref<2048x32xbf16, #tpu.memory_space<vmem>>, %arg18: memref<1x32xf32, #tpu.memory_space<vmem>>, %arg19: memref<1x8x32xf32, #tpu.memory_space<vmem>>, %arg20: memref<1x4x8x8xf32, #tpu.memory_space<vmem>>) attributes {dimension_semantics = [#tpu.dimension_semantics<parallel>], iteration_bounds = array<i64: 2>, scalar_prefetch = 0 : i64, scratch_operands = 0 : i64, tpu.core_type = #tpu.core_type<tc>, window_params = [{transform_indices = @transform_0, window_bounds = array<i64: 1, 8, 32>}, {transform_indices = @transform_1, window_bounds = array<i64: 1, 1, 8>}, {pipeline_mode = #tpu.pipeline_mode<synchronous>, transform_indices = @transform_2, window_bounds = array<i64: 1, 32>}, {pipeline_mode = #tpu.pipeline_mode<synchronous>, transform_indices = @transform_3, window_bounds = array<i64: 1, 32>}, {pipeline_mode = #tpu.pipeline_mode<synchronous>, transform_indices = @transform_4, window_bounds = array<i64: 32, 32>}, {pipeline_mode = #tpu.pipeline_mode<synchronous>, transform_indices = @transform_5, window_bounds = array<i64: 1, 32>}, {pipeline_mode = #tpu.pipeline_mode<synchronous>, transform_indices = @transform_6, window_bounds = array<i64: 32, 32>}, {pipeline_mode = #tpu.pipeline_mode<synchronous>, transform_indices = @transform_7, window_bounds = array<i64: 1, 32>}, {pipeline_mode = #tpu.pipeline_mode<synchronous>, transform_indices = @transform_8, window_bounds = array<i64: 32, 32>}, {pipeline_mode = #tpu.pipeline_mode<synchronous>, transform_indices = @transform_9, window_bounds = array<i64: 1, 32>}, {pipeline_mode = #tpu.pipeline_mode<synchronous>, transform_indices = @transform_10, window_bounds = array<i64: 4, 8, 32>}, {pipeline_mode = #tpu.pipeline_mode<synchronous>, transform_indices = @transform_11, window_bounds = array<i64: 1, 32>}, {pipeline_mode = #tpu.pipeline_mode<synchronous>, transform_indices = @transform_12, window_bounds = array<i64: 1, 32>}, {pipeline_mode = #tpu.pipeline_mode<synchronous>, transform_indices = @transform_13, window_bounds = array<i64: 1, 32>}, {pipeline_mode = #tpu.pipeline_mode<synchronous>, transform_indices = @transform_14, window_bounds = array<i64: 32, 2048>}, {pipeline_mode = #tpu.pipeline_mode<synchronous>, transform_indices = @transform_15, window_bounds = array<i64: 1, 2048>}, {pipeline_mode = #tpu.pipeline_mode<synchronous>, transform_indices = @transform_16, window_bounds = array<i64: 2048, 32>}, {pipeline_mode = #tpu.pipeline_mode<synchronous>, transform_indices = @transform_17, window_bounds = array<i64: 1, 32>}, {transform_indices = @transform_18, window_bounds = array<i64: 1, 8, 32>}, {transform_indices = @transform_19, window_bounds = array<i64: 1, 4, 8, 8>}]} {
    %c0 = arith.constant 0 : index
    %c0_0 = arith.constant 0 : index
    %c0_1 = arith.constant 0 : index
    %0 = vector.load %arg1[%c0, %c0_0, %c0_1] : memref<1x8x32xf32, #tpu.memory_space<vmem>>, vector<1x8x32xf32>
    %1 = vector.shape_cast %0 : vector<1x8x32xf32> to vector<8x32xf32>
    %c0_2 = arith.constant 0 : index
    %c0_3 = arith.constant 0 : index
    %c0_4 = arith.constant 0 : index
    %2 = vector.load %arg2[%c0_2, %c0_3, %c0_4] : memref<1x1x8xf32, #tpu.memory_space<vmem>>, vector<1x1x8xf32>
    %3 = vector.shape_cast %2 : vector<1x1x8xf32> to vector<1x8xf32>
    %cst = arith.constant 0.000000e+00 : f32
    %4 = vector.broadcast %cst : f32 to vector<1x8xf32>
    %5 = arith.cmpf oeq, %3, %4 : vector<1x8xf32>
    %6 = vector.shape_cast %5 : vector<1x8xi1> to vector<1x1x8xi1>
    %c0_5 = arith.constant 0 : index
    %c0_6 = arith.constant 0 : index
    %7 = vector.load %arg3[%c0_5, %c0_6] : memref<1x32xf32, #tpu.memory_space<vmem>>, vector<1x32xf32>
    %c0_7 = arith.constant 0 : index
    %c0_8 = arith.constant 0 : index
    %8 = vector.load %arg4[%c0_7, %c0_8] : memref<1x32xf32, #tpu.memory_space<vmem>>, vector<1x32xf32>
    %cst_9 = arith.constant dense<0.000000e+00> : vector<8xf32>
    %9 = vector.multi_reduction <add>, %1, %cst_9 [1] : vector<8x32xf32> to vector<8xf32>
    %10 = vector.shape_cast %9 : vector<8xf32> to vector<8x1xf32>
    %cst_10 = arith.constant 3.200000e+01 : f32
    %11 = vector.broadcast %cst_10 : f32 to vector<8x1xf32>
    %12 = arith.divf %10, %11 : vector<8x1xf32>
    %13 = vector.broadcast %12 : vector<8x1xf32> to vector<8x32xf32>
    %14 = arith.subf %1, %13 : vector<8x32xf32>
    %15 = arith.mulf %14, %14 : vector<8x32xf32>
    %cst_11 = arith.constant dense<0.000000e+00> : vector<8xf32>
    %16 = vector.multi_reduction <add>, %15, %cst_11 [1] : vector<8x32xf32> to vector<8xf32>
    %17 = vector.shape_cast %16 : vector<8xf32> to vector<8x1xf32>
    %cst_12 = arith.constant 3.100000e+01 : f32
    %18 = vector.broadcast %cst_12 : f32 to vector<8x1xf32>
    %19 = arith.divf %17, %18 : vector<8x1xf32>
    %20 = math.sqrt %19 : vector<8x1xf32>
    %cst_13 = arith.constant 9.99999997E-7 : f32
    %21 = vector.broadcast %cst_13 : f32 to vector<8x1xf32>
    %22 = arith.addf %20, %21 : vector<8x1xf32>
    %23 = tpu.reciprocal %22 {approx = true} : vector<8x1xf32> -> vector<8x1xf32>
    %24 = vector.broadcast %7 : vector<1x32xf32> to vector<8x32xf32>
    %25 = arith.mulf %24, %14 : vector<8x32xf32>
    %26 = vector.broadcast %23 : vector<8x1xf32> to vector<8x32xf32>
    %27 = arith.mulf %25, %26 : vector<8x32xf32>
    %28 = vector.broadcast %8 : vector<1x32xf32> to vector<8x32xf32>
    %29 = arith.addf %27, %28 : vector<8x32xf32>
    %30 = arith.truncf %29 : vector<8x32xf32> to vector<8x32xbf16>
    %c0_14 = arith.constant 0 : index
    %c0_15 = arith.constant 0 : index
    %31 = vector.load %arg5[%c0_14, %c0_15] : memref<32x32xbf16, #tpu.memory_space<vmem>>, vector<32x32xbf16>
    %cst_16 = arith.constant dense<0.000000e+00> : vector<8x32xf32>
    %32 = tpu.matmul %30, %31, %cst_16 {dimension_numbers = #tpu.dot_dimension_numbers<[1], [0], [0], [1], [0, 0, 1, 1], [], []>} : vector<8x32xbf16>, vector<32x32xbf16>, vector<8x32xf32> -> vector<8x32xf32>
    %c0_17 = arith.constant 0 : index
    %c0_18 = arith.constant 0 : index
    %33 = vector.load %arg6[%c0_17, %c0_18] : memref<1x32xf32, #tpu.memory_space<vmem>>, vector<1x32xf32>
    %34 = vector.broadcast %33 : vector<1x32xf32> to vector<8x32xf32>
    %35 = arith.addf %32, %34 : vector<8x32xf32>
    %cst_19 = arith.constant 0.353553385 : f32
    %36 = vector.broadcast %cst_19 : f32 to vector<8x32xf32>
    %37 = arith.mulf %35, %36 : vector<8x32xf32>
    %c0_20 = arith.constant 0 : index
    %c0_21 = arith.constant 0 : index
    %38 = vector.load %arg7[%c0_20, %c0_21] : memref<32x32xbf16, #tpu.memory_space<vmem>>, vector<32x32xbf16>
    %cst_22 = arith.constant dense<0.000000e+00> : vector<8x32xf32>
    %39 = tpu.matmul %30, %38, %cst_22 {dimension_numbers = #tpu.dot_dimension_numbers<[1], [0], [0], [1], [0, 0, 1, 1], [], []>} : vector<8x32xbf16>, vector<32x32xbf16>, vector<8x32xf32> -> vector<8x32xf32>
    %c0_23 = arith.constant 0 : index
    %c0_24 = arith.constant 0 : index
    %40 = vector.load %arg8[%c0_23, %c0_24] : memref<1x32xf32, #tpu.memory_space<vmem>>, vector<1x32xf32>
    %41 = vector.broadcast %40 : vector<1x32xf32> to vector<8x32xf32>
    %42 = arith.addf %39, %41 : vector<8x32xf32>
    %c0_25 = arith.constant 0 : index
    %c0_26 = arith.constant 0 : index
    %43 = vector.load %arg9[%c0_25, %c0_26] : memref<32x32xbf16, #tpu.memory_space<vmem>>, vector<32x32xbf16>
    %cst_27 = arith.constant dense<0.000000e+00> : vector<8x32xf32>
    %44 = tpu.matmul %30, %43, %cst_27 {dimension_numbers = #tpu.dot_dimension_numbers<[1], [0], [0], [1], [0, 0, 1, 1], [], []>} : vector<8x32xbf16>, vector<32x32xbf16>, vector<8x32xf32> -> vector<8x32xf32>
    %c0_28 = arith.constant 0 : index
    %c0_29 = arith.constant 0 : index
    %45 = vector.load %arg10[%c0_28, %c0_29] : memref<1x32xf32, #tpu.memory_space<vmem>>, vector<1x32xf32>
    %46 = vector.broadcast %45 : vector<1x32xf32> to vector<8x32xf32>
    %47 = arith.addf %44, %46 : vector<8x32xf32>
    %48 = arith.truncf %37 : vector<8x32xf32> to vector<8x32xbf16>
    %49 = vector.shape_cast %48 : vector<8x32xbf16> to vector<8x4x8xbf16>
    %50 = tpu.transpose %49, [1, 0, 2] : vector<8x4x8xbf16> -> vector<4x8x8xbf16>
    %51 = arith.truncf %42 : vector<8x32xf32> to vector<8x32xbf16>
    %52 = vector.shape_cast %51 : vector<8x32xbf16> to vector<8x4x8xbf16>
    %53 = tpu.transpose %52, [1, 0, 2] : vector<8x4x8xbf16> -> vector<4x8x8xbf16>
    %54 = arith.truncf %47 : vector<8x32xf32> to vector<8x32xbf16>
    %55 = vector.shape_cast %54 : vector<8x32xbf16> to vector<8x4x8xbf16>
    %56 = tpu.transpose %55, [1, 0, 2] : vector<8x4x8xbf16> -> vector<4x8x8xbf16>
    "tpu.trace_start"() <{level = 10 : i32, message = "hqd,hkd->hqk"}> : () -> ()
    %cst_30 = arith.constant dense<0.000000e+00> : vector<4x8x8xf32>
    %57 = tpu.matmul %50, %53, %cst_30 {dimension_numbers = #tpu.dot_dimension_numbers<[2], [2], [1], [1], [0, 0, 0, 1, 1, 1], [0], [0]>} : vector<4x8x8xbf16>, vector<4x8x8xbf16>, vector<4x8x8xf32> -> vector<4x8x8xf32>
    %cst_31 = arith.constant -1.000000e+09 : f32
    "tpu.trace_stop"() : () -> ()
    %58 = vector.shape_cast %6 : vector<1x1x8xi1> to vector<1x1x8xi1>
    %59 = vector.broadcast %58 : vector<1x1x8xi1> to vector<4x8x8xi1>
    %60 = vector.broadcast %cst_31 : f32 to vector<4x8x8xf32>
    %61 = arith.select %59, %60, %57 : vector<4x8x8xi1>, vector<4x8x8xf32>
    %cst_32 = arith.constant dense<0xFF800000> : vector<4x8xf32>
    %62 = vector.multi_reduction <maximumf>, %61, %cst_32 [2] : vector<4x8x8xf32> to vector<4x8xf32>
    %63 = vector.shape_cast %62 : vector<4x8xf32> to vector<4x8x1xf32>
    %64 = vector.broadcast %63 : vector<4x8x1xf32> to vector<4x8x8xf32>
    %65 = arith.subf %61, %64 : vector<4x8x8xf32>
    %66 = math.exp %65 : vector<4x8x8xf32>
    %cst_33 = arith.constant dense<0.000000e+00> : vector<4x8xf32>
    %67 = vector.multi_reduction <add>, %66, %cst_33 [2] : vector<4x8x8xf32> to vector<4x8xf32>
    %68 = vector.shape_cast %67 : vector<4x8xf32> to vector<4x8x1xf32>
    %69 = tpu.reciprocal %68 {approx = true} : vector<4x8x1xf32> -> vector<4x8x1xf32>
    %70 = vector.broadcast %69 : vector<4x8x1xf32> to vector<4x8x8xf32>
    %71 = arith.mulf %66, %70 : vector<4x8x8xf32>
    %c0_34 = arith.constant 0 : index
    %c0_35 = arith.constant 0 : index
    %c0_36 = arith.constant 0 : index
    %c0_37 = arith.constant 0 : index
    %72 = vector.load %arg20[%c0_34, %c0_35, %c0_36, %c0_37] : memref<1x4x8x8xf32, #tpu.memory_space<vmem>>, vector<1x4x8x8xf32>
    %73 = vector.shape_cast %72 : vector<1x4x8x8xf32> to vector<4x8x8xf32>
    %74 = vector.shape_cast %71 : vector<4x8x8xf32> to vector<1x4x8x8xf32>
    tpu.vector_store %arg20[%c0_34, %c0_35, %c0_36, %c0_37], %74 {strides = array<i32>} : memref<1x4x8x8xf32, #tpu.memory_space<vmem>>, vector<1x4x8x8xf32>,
    %75 = arith.truncf %71 : vector<4x8x8xf32> to vector<4x8x8xbf16>
    "tpu.trace_start"() <{level = 10 : i32, message = "hqk,hkd->hqd"}> : () -> ()
    %cst_38 = arith.constant dense<0.000000e+00> : vector<4x8x8xf32>
    %76 = tpu.matmul %75, %56, %cst_38 {dimension_numbers = #tpu.dot_dimension_numbers<[2], [1], [1], [2], [0, 0, 0, 1, 1, 2], [0], [0]>} : vector<4x8x8xbf16>, vector<4x8x8xbf16>, vector<4x8x8xf32> -> vector<4x8x8xf32>
    "tpu.trace_stop"() : () -> ()
    %77 = arith.truncf %76 : vector<4x8x8xf32> to vector<4x8x8xbf16>
    %c0_39 = arith.constant 0 : index
    %c0_40 = arith.constant 0 : index
    %c0_41 = arith.constant 0 : index
    %78 = vector.load %arg11[%c0_39, %c0_40, %c0_41] : memref<4x8x32xbf16, #tpu.memory_space<vmem>>, vector<4x8x32xbf16>
    "tpu.trace_start"() <{level = 10 : i32, message = "hqd,hdE->hqE"}> : () -> ()
    %cst_42 = arith.constant dense<0.000000e+00> : vector<4x8x32xf32>
    %79 = tpu.matmul %77, %78, %cst_42 {dimension_numbers = #tpu.dot_dimension_numbers<[2], [1], [1], [2], [0, 0, 0, 1, 1, 2], [0], [0]>} : vector<4x8x8xbf16>, vector<4x8x32xbf16>, vector<4x8x32xf32> -> vector<4x8x32xf32>
    "tpu.trace_stop"() : () -> ()
    %cst_43 = arith.constant dense<0.000000e+00> : vector<8x32xf32>
    %80 = vector.multi_reduction <add>, %79, %cst_43 [0] : vector<4x8x32xf32> to vector<8x32xf32>
    %c0_44 = arith.constant 0 : index
    %c0_45 = arith.constant 0 : index
    %81 = vector.load %arg12[%c0_44, %c0_45] : memref<1x32xf32, #tpu.memory_space<vmem>>, vector<1x32xf32>
    %82 = vector.broadcast %81 : vector<1x32xf32> to vector<8x32xf32>
    %83 = arith.addf %80, %82 : vector<8x32xf32>
    %84 = arith.addf %1, %83 : vector<8x32xf32>
    %c0_46 = arith.constant 0 : index
    %c0_47 = arith.constant 0 : index
    %85 = vector.load %arg13[%c0_46, %c0_47] : memref<1x32xf32, #tpu.memory_space<vmem>>, vector<1x32xf32>
    %c0_48 = arith.constant 0 : index
    %c0_49 = arith.constant 0 : index
    %86 = vector.load %arg14[%c0_48, %c0_49] : memref<1x32xf32, #tpu.memory_space<vmem>>, vector<1x32xf32>
    %cst_50 = arith.constant dense<0.000000e+00> : vector<8xf32>
    %87 = vector.multi_reduction <add>, %84, %cst_50 [1] : vector<8x32xf32> to vector<8xf32>
    %88 = vector.shape_cast %87 : vector<8xf32> to vector<8x1xf32>
    %cst_51 = arith.constant 3.200000e+01 : f32
    %89 = vector.broadcast %cst_51 : f32 to vector<8x1xf32>
    %90 = arith.divf %88, %89 : vector<8x1xf32>
    %91 = vector.broadcast %90 : vector<8x1xf32> to vector<8x32xf32>
    %92 = arith.subf %84, %91 : vector<8x32xf32>
    %93 = arith.mulf %92, %92 : vector<8x32xf32>
    %cst_52 = arith.constant dense<0.000000e+00> : vector<8xf32>
    %94 = vector.multi_reduction <add>, %93, %cst_52 [1] : vector<8x32xf32> to vector<8xf32>
    %95 = vector.shape_cast %94 : vector<8xf32> to vector<8x1xf32>
    %cst_53 = arith.constant 3.100000e+01 : f32
    %96 = vector.broadcast %cst_53 : f32 to vector<8x1xf32>
    %97 = arith.divf %95, %96 : vector<8x1xf32>
    %98 = math.sqrt %97 : vector<8x1xf32>
    %cst_54 = arith.constant 9.99999997E-7 : f32
    %99 = vector.broadcast %cst_54 : f32 to vector<8x1xf32>
    %100 = arith.addf %98, %99 : vector<8x1xf32>
    %101 = tpu.reciprocal %100 {approx = true} : vector<8x1xf32> -> vector<8x1xf32>
    %102 = vector.broadcast %85 : vector<1x32xf32> to vector<8x32xf32>
    %103 = arith.mulf %102, %92 : vector<8x32xf32>
    %104 = vector.broadcast %101 : vector<8x1xf32> to vector<8x32xf32>
    %105 = arith.mulf %103, %104 : vector<8x32xf32>
    %106 = vector.broadcast %86 : vector<1x32xf32> to vector<8x32xf32>
    %107 = arith.addf %105, %106 : vector<8x32xf32>
    %108 = arith.truncf %107 : vector<8x32xf32> to vector<8x32xbf16>
    %c0_55 = arith.constant 0 : index
    %c0_56 = arith.constant 0 : index
    %109 = vector.load %arg15[%c0_55, %c0_56] : memref<32x2048xbf16, #tpu.memory_space<vmem>>, vector<32x2048xbf16>
    %cst_57 = arith.constant dense<0.000000e+00> : vector<8x2048xf32>
    %110 = tpu.matmul %108, %109, %cst_57 {dimension_numbers = #tpu.dot_dimension_numbers<[1], [0], [0], [1], [0, 0, 1, 1], [], []>} : vector<8x32xbf16>, vector<32x2048xbf16>, vector<8x2048xf32> -> vector<8x2048xf32>
    %c0_58 = arith.constant 0 : index
    %c0_59 = arith.constant 0 : index
    %111 = vector.load %arg16[%c0_58, %c0_59] : memref<1x2048xf32, #tpu.memory_space<vmem>>, vector<1x2048xf32>
    %112 = vector.broadcast %111 : vector<1x2048xf32> to vector<8x2048xf32>
    %113 = arith.addf %110, %112 : vector<8x2048xf32>
    %cst_60 = arith.constant 0.000000e+00 : f32
    %114 = vector.broadcast %cst_60 : f32 to vector<8x2048xf32>
    %115 = arith.maximumf %113, %114 : vector<8x2048xf32>
    %116 = arith.truncf %115 : vector<8x2048xf32> to vector<8x2048xbf16>
    %c0_61 = arith.constant 0 : index
    %c0_62 = arith.constant 0 : index
    %117 = vector.load %arg17[%c0_61, %c0_62] : memref<2048x32xbf16, #tpu.memory_space<vmem>>, vector<2048x32xbf16>
    %cst_63 = arith.constant dense<0.000000e+00> : vector<8x32xf32>
    %118 = tpu.matmul %116, %117, %cst_63 {dimension_numbers = #tpu.dot_dimension_numbers<[1], [0], [0], [1], [0, 0, 1, 1], [], []>} : vector<8x2048xbf16>, vector<2048x32xbf16>, vector<8x32xf32> -> vector<8x32xf32>
    %c0_64 = arith.constant 0 : index
    %c0_65 = arith.constant 0 : index
    %119 = vector.load %arg18[%c0_64, %c0_65] : memref<1x32xf32, #tpu.memory_space<vmem>>, vector<1x32xf32>
    %120 = vector.broadcast %119 : vector<1x32xf32> to vector<8x32xf32>
    %121 = arith.addf %118, %120 : vector<8x32xf32>
    %122 = arith.addf %84, %121 : vector<8x32xf32>
    %c0_66 = arith.constant 0 : index
    %c0_67 = arith.constant 0 : index
    %c0_68 = arith.constant 0 : index
    %123 = vector.load %arg19[%c0_66, %c0_67, %c0_68] : memref<1x8x32xf32, #tpu.memory_space<vmem>>, vector<1x8x32xf32>
    %124 = vector.shape_cast %123 : vector<1x8x32xf32> to vector<8x32xf32>
    %125 = vector.shape_cast %122 : vector<8x32xf32> to vector<1x8x32xf32>
    tpu.vector_store %arg19[%c0_66, %c0_67, %c0_68], %125 {strides = array<i32>} : memref<1x8x32xf32, #tpu.memory_space<vmem>>, vector<1x8x32xf32>,
    return
  }
  func.func @transform_0(%arg0: i32) -> (i32, i32, i32) {
    %c0_i32 = arith.constant 0 : i32
    %c0_i32_0 = arith.constant 0 : i32
    %c0_i32_1 = arith.constant 0 : i32
    return %arg0, %c0_i32, %c0_i32_0 : i32, i32, i32
  }
  func.func @transform_1(%arg0: i32) -> (i32, i32, i32) {
    %c0_i32 = arith.constant 0 : i32
    %c0_i32_0 = arith.constant 0 : i32
    %c0_i32_1 = arith.constant 0 : i32
    return %arg0, %c0_i32, %c0_i32_0 : i32, i32, i32
  }
  func.func @transform_2(%arg0: i32) -> (i32, i32) {
    %c0_i32 = arith.constant 0 : i32
    %c0_i32_0 = arith.constant 0 : i32
    %c0_i32_1 = arith.constant 0 : i32
    return %c0_i32, %c0_i32_0 : i32, i32
  }
  func.func @transform_3(%arg0: i32) -> (i32, i32) {
    %c0_i32 = arith.constant 0 : i32
    %c0_i32_0 = arith.constant 0 : i32
    %c0_i32_1 = arith.constant 0 : i32
    return %c0_i32, %c0_i32_0 : i32, i32
  }
  func.func @transform_4(%arg0: i32) -> (i32, i32) {
    %c0_i32 = arith.constant 0 : i32
    %c0_i32_0 = arith.constant 0 : i32
    %c0_i32_1 = arith.constant 0 : i32
    return %c0_i32, %c0_i32_0 : i32, i32
  }
  func.func @transform_5(%arg0: i32) -> (i32, i32) {
    %c0_i32 = arith.constant 0 : i32
    %c0_i32_0 = arith.constant 0 : i32
    %c0_i32_1 = arith.constant 0 : i32
    return %c0_i32, %c0_i32_0 : i32, i32
  }
  func.func @transform_6(%arg0: i32) -> (i32, i32) {
    %c0_i32 = arith.constant 0 : i32
    %c0_i32_0 = arith.constant 0 : i32
    %c0_i32_1 = arith.constant 0 : i32
    return %c0_i32, %c0_i32_0 : i32, i32
  }
  func.func @transform_7(%arg0: i32) -> (i32, i32) {
    %c0_i32 = arith.constant 0 : i32
    %c0_i32_0 = arith.constant 0 : i32
    %c0_i32_1 = arith.constant 0 : i32
    return %c0_i32, %c0_i32_0 : i32, i32
  }
  func.func @transform_8(%arg0: i32) -> (i32, i32) {
    %c0_i32 = arith.constant 0 : i32
    %c0_i32_0 = arith.constant 0 : i32
    %c0_i32_1 = arith.constant 0 : i32
    return %c0_i32, %c0_i32_0 : i32, i32
  }
  func.func @transform_9(%arg0: i32) -> (i32, i32) {
    %c0_i32 = arith.constant 0 : i32
    %c0_i32_0 = arith.constant 0 : i32
    %c0_i32_1 = arith.constant 0 : i32
    return %c0_i32, %c0_i32_0 : i32, i32
  }
  func.func @transform_10(%arg0: i32) -> (i32, i32, i32) {
    %c0_i32 = arith.constant 0 : i32
    %c0_i32_0 = arith.constant 0 : i32
    %c0_i32_1 = arith.constant 0 : i32
    %c0_i32_2 = arith.constant 0 : i32
    return %c0_i32, %c0_i32_0, %c0_i32_1 : i32, i32, i32
  }
  func.func @transform_11(%arg0: i32) -> (i32, i32) {
    %c0_i32 = arith.constant 0 : i32
    %c0_i32_0 = arith.constant 0 : i32
    %c0_i32_1 = arith.constant 0 : i32
    return %c0_i32, %c0_i32_0 : i32, i32
  }
  func.func @transform_12(%arg0: i32) -> (i32, i32) {
    %c0_i32 = arith.constant 0 : i32
    %c0_i32_0 = arith.constant 0 : i32
    %c0_i32_1 = arith.constant 0 : i32
    return %c0_i32, %c0_i32_0 : i32, i32
  }
  func.func @transform_13(%arg0: i32) -> (i32, i32) {
    %c0_i32 = arith.constant 0 : i32
    %c0_i32_0 = arith.constant 0 : i32
    %c0_i32_1 = arith.constant 0 : i32
    return %c0_i32, %c0_i32_0 : i32, i32
  }
  func.func @transform_14(%arg0: i32) -> (i32, i32) {
    %c0_i32 = arith.constant 0 : i32
    %c0_i32_0 = arith.constant 0 : i32
    %c0_i32_1 = arith.constant 0 : i32
    return %c0_i32, %c0_i32_0 : i32, i32
  }
  func.func @transform_15(%arg0: i32) -> (i32, i32) {
    %c0_i32 = arith.constant 0 : i32
    %c0_i32_0 = arith.constant 0 : i32
    %c0_i32_1 = arith.constant 0 : i32
    return %c0_i32, %c0_i32_0 : i32, i32
  }
  func.func @transform_16(%arg0: i32) -> (i32, i32) {
    %c0_i32 = arith.constant 0 : i32
    %c0_i32_0 = arith.constant 0 : i32
    %c0_i32_1 = arith.constant 0 : i32
    return %c0_i32, %c0_i32_0 : i32, i32
  }
  func.func @transform_17(%arg0: i32) -> (i32, i32) {
    %c0_i32 = arith.constant 0 : i32
    %c0_i32_0 = arith.constant 0 : i32
    %c0_i32_1 = arith.constant 0 : i32
    return %c0_i32, %c0_i32_0 : i32, i32
  }
  func.func @transform_18(%arg0: i32) -> (i32, i32, i32) {
    %c0_i32 = arith.constant 0 : i32
    %c0_i32_0 = arith.constant 0 : i32
    %c0_i32_1 = arith.constant 0 : i32
    return %arg0, %c0_i32, %c0_i32_0 : i32, i32, i32
  }
  func.func @transform_19(%arg0: i32) -> (i32, i32, i32, i32) {
    %c0_i32 = arith.constant 0 : i32
    %c0_i32_0 = arith.constant 0 : i32
    %c0_i32_1 = arith.constant 0 : i32
    %c0_i32_2 = arith.constant 0 : i32
    return %arg0, %c0_i32, %c0_i32_0, %c0_i32_1 : i32, i32, i32, i32
  }
}

</mosaic_0001>

<llo_original>
// kernel: tpu_custom_call.1
$region0: #{tpu_custom_call.1}
  #allocation0 [shape = 'u32[]', space=smem, size = 0x4, offset = 0x4, fixed_abs, tag = 'smem constant byte address 0x4 - core index']
  #allocation1 [shape = 'u32[144,128]{1,0:T(1,128)}', space=vmem, size = 0x12000, scoped, tag = 'internal scratch']
  %s0 = inlined_call_operand.vmem [shape: f32[2,8,32], index: 0, kind: input, shape index: {}]
  %s1 = inlined_call_operand.vmem [shape: f32[2,1,8], index: 1, kind: input, shape index: {}]
  %s2 = inlined_call_operand.vmem [shape: f32[1,32], index: 2, kind: input, shape index: {}]
  %s3 = inlined_call_operand.vmem [shape: f32[1,32], index: 3, kind: input, shape index: {}]
  %s4 = inlined_call_operand.vmem [shape: bf16[32,32], index: 4, kind: input, shape index: {}]
  %s5 = inlined_call_operand.vmem [shape: f32[1,32], index: 5, kind: input, shape index: {}]
  %s6 = inlined_call_operand.vmem [shape: bf16[32,32], index: 6, kind: input, shape index: {}]
  %s7 = inlined_call_operand.vmem [shape: f32[1,32], index: 7, kind: input, shape index: {}]
  %s8 = inlined_call_operand.vmem [shape: bf16[32,32], index: 8, kind: input, shape index: {}]
  %s9 = inlined_call_operand.vmem [shape: f32[1,32], index: 9, kind: input, shape index: {}]
  %s10 = inlined_call_operand.vmem [shape: bf16[4,8,32], index: 10, kind: input, shape index: {}]
  %s11 = inlined_call_operand.vmem [shape: f32[1,32], index: 11, kind: input, shape index: {}]
  %s12 = inlined_call_operand.vmem [shape: f32[1,32], index: 12, kind: input, shape index: {}]
  %s13 = inlined_call_operand.vmem [shape: f32[1,32], index: 13, kind: input, shape index: {}]
  %s14 = inlined_call_operand.vmem [shape: bf16[32,2048], index: 14, kind: input, shape index: {}]
  %s15 = inlined_call_operand.vmem [shape: f32[1,2048], index: 15, kind: input, shape index: {}]
  %s16 = inlined_call_operand.vmem [shape: bf16[2048,32], index: 16, kind: input, shape index: {}]
  %s17 = inlined_call_operand.vmem [shape: f32[1,32], index: 17, kind: input, shape index: {}]
  %s18 = inlined_call_operand.hbm [shape: f32[2,8,32], index: 18, kind: output, shape index: {0}]
  %s19 = inlined_call_operand.hbm [shape: f32[2,4,8,8], index: 19, kind: output, shape index: {1}]
  %20 = xla_tuple %s18, %s19
  %s21 = sld [smem:[#allocation0]]
  $region113: #{tpu_custom_call.1} parent=0
    _
  %s23 = ssub.s32 1, %s21
  %s24 = scalar_select 0, %s23, %s21
  $region1: #{tpu_custom_call.1} parent=0
    #allocation2 [shape = 'u8[8192]{0}', space=vmem, size = 0x2000, scoped, tag = 'output window, operand 0']
    #allocation3 [shape = 's32[2]{0}', space=sflag, size = 0x8, scoped, tag = 'scoped memory for tpu_custom_call.1']
    #allocation4 [shape = 'u8[32768]{0}', space=vmem, size = 0x8000, scoped, tag = 'output window, operand 1']
    #allocation5 [shape = 's32[2]{0}', space=sflag, size = 0x8, scoped, tag = 'scoped memory for tpu_custom_call.1']
    %25 = vsyncpa [#allocation3], 0
    %s26 = scalar_lea.sflag [#allocation3], 1
    %27 = vsyncpa %s26, 0
    %28 = vsyncpa [#allocation5], 0
    %s29 = scalar_lea.sflag [#allocation5], 1
    %30 = vsyncpa %s29, 0
    loop: start=0, step=1, limit=4
    $region2: #{tpu_custom_call.1} parent=1 // loop_pre_header
      _
    $region3: #{tpu_custom_call.1} parent=1 // loop_header
      %s32 = sphi 0, %s36
      %p33 = scmp.ge.s32.totalorder %s32, 4
      %s42 = sphi 0, %s44
      %s45 = sphi 0, %s42
      %s46 = sphi 0, %s45
      %s62 = sphi 0, %s46
      %s68 = sphi 0, %s70
      %s71 = sphi 0, %s68
      %s72 = sphi 0, %s71
      %s88 = sphi 0, %s72
      %s92 = sphi 0, %s92
      %s94 = sphi 0, %s92
      %s95 = sphi 0, %s94
      %s109 = sphi 0, %s95
      %s113 = sphi 0, %s113
      %s115 = sphi 0, %s113
      %s116 = sphi 0, %s115
      %s130 = sphi 0, %s116
      %s134 = sphi 0, %s134
      %s136 = sphi 0, %s134
      %s137 = sphi 0, %s136
      %s151 = sphi 0, %s137
      %s155 = sphi 0, %s155
      %s157 = sphi 0, %s155
      %s158 = sphi 0, %s157
      %s172 = sphi 0, %s158
      %s176 = sphi 0, %s176
      %s178 = sphi 0, %s176
      %s179 = sphi 0, %s178
      %s193 = sphi 0, %s179
      %s197 = sphi 0, %s197
      %s199 = sphi 0, %s197
      %s200 = sphi 0, %s199
      %s214 = sphi 0, %s200
      %s218 = sphi 0, %s218
      %s220 = sphi 0, %s218
      %s221 = sphi 0, %s220
      %s235 = sphi 0, %s221
      %s239 = sphi 0, %s239
      %s241 = sphi 0, %s239
      %s242 = sphi 0, %s241
      %s256 = sphi 0, %s242
      %s260 = sphi 0, %s260
      %s262 = sphi 0, %s260
      %s263 = sphi 0, %s262
      %s277 = sphi 0, %s263
      %s281 = sphi 0, %s281
      %s283 = sphi 0, %s281
      %s284 = sphi 0, %s283
      %s298 = sphi 0, %s284
      %s302 = sphi 0, %s302
      %s304 = sphi 0, %s302
      %s305 = sphi 0, %s304
      %s319 = sphi 0, %s305
      %s323 = sphi 0, %s323
      %s325 = sphi 0, %s323
      %s326 = sphi 0, %s325
      %s340 = sphi 0, %s326
      %s344 = sphi 0, %s344
      %s346 = sphi 0, %s344
      %s347 = sphi 0, %s346
      %s361 = sphi 0, %s347
      %s365 = sphi 0, %s365
      %s367 = sphi 0, %s365
      %s368 = sphi 0, %s367
      %s382 = sphi 0, %s368
      %s386 = sphi 0, %s386
      %s388 = sphi 0, %s386
      %s389 = sphi 0, %s388
      %s403 = sphi 0, %s389
      %s407 = sphi 0, %s407
      %s409 = sphi 0, %s407
      %s410 = sphi 0, %s409
      %s424 = sphi 0, %s410
      %s430 = sphi 0, %s432
      %s433 = sphi 0, %s430
      %s434 = sphi 0, %s433
      %s450 = sphi 0, %s434
      %s456 = sphi 0, %s458
      %s459 = sphi 0, %s456
      %s460 = sphi 0, %s459
      %s476 = sphi 0, %s460
    $region4: #{tpu_custom_call.1} parent=1 // loop_header_branch
      %35 = sbr.rel (%p33) target = $region8
    $region5: #{tpu_custom_call.1} parent=1 // loop_body
      %s37 = ssub.s32 %s32, 1
      %s38 = ssub.s32 %s32, 2
      %s39 = sadd.s32 %s32, 1
      %s40 = ssub.s32 %s32, %s39
      %p41 = scmp.eq.s32.totalorder %s40, 0
      %s43 = sadd.s32 %s42, 1
      %s44 = scalar_select %p41, %s42, %s43
      %p47 = pneg %p41
      %p48 = scmp.eq.s32.totalorder %s32, 1
      %p49 = por %p47, %p48
      %p50 = scmp.ne.s32.totalorder %s42, %s45
      %p51 = scmp.eq.s32.totalorder %s32, 0
      %p52 = por %p50, %p51
      %p53 = scmp.ne.s32.totalorder %s42, %s45
      %p54 = scmp.eq.s32.totalorder %s37, 1
      %p55 = por %p53, %p54
      %p56 = scmp.ne.s32.totalorder %s45, %s46
      %p57 = scmp.eq.s32.totalorder %s37, 0
      %p58 = por %p56, %p57
      %p59 = scmp.ne.s32.totalorder %s45, %s46
      %p60 = scmp.eq.s32.totalorder %s38, 1
      %p61 = por %p59, %p60
      %p63 = scmp.ne.s32.totalorder %s46, %s62
      %p64 = scmp.eq.s32.totalorder %s38, 0
      %p65 = por %p63, %p64
      %s66 = ssub.s32 %s32, %s39
      %p67 = scmp.eq.s32.totalorder %s66, 0
      %s69 = sadd.s32 %s68, 1
      %s70 = scalar_select %p67, %s68, %s69
      %p73 = pneg %p67
      %p74 = scmp.eq.s32.totalorder %s32, 1
      %p75 = por %p73, %p74
      %p76 = scmp.ne.s32.totalorder %s68, %s71
      %p77 = scmp.eq.s32.totalorder %s32, 0
      %p78 = por %p76, %p77
      %p79 = scmp.ne.s32.totalorder %s68, %s71
      %p80 = scmp.eq.s32.totalorder %s37, 1
      %p81 = por %p79, %p80
      %p82 = scmp.ne.s32.totalorder %s71, %s72
      %p83 = scmp.eq.s32.totalorder %s37, 0
      %p84 = por %p82, %p83
      %p85 = scmp.ne.s32.totalorder %s71, %s72
      %p86 = scmp.eq.s32.totalorder %s38, 1
      %p87 = por %p85, %p86
      %p89 = scmp.ne.s32.totalorder %s72, %s88
      %p90 = scmp.eq.s32.totalorder %s38, 0
      %p91 = por %p89, %p90
      %s93 = sadd.s32 %s92, 1
      %p96 = scmp.eq.s32.totalorder %s32, 1
      %p97 = scmp.ne.s32.totalorder %s92, %s94
      %p98 = scmp.eq.s32.totalorder %s32, 0
      %p99 = por %p97, %p98
      %p100 = scmp.ne.s32.totalorder %s92, %s94
      %p101 = scmp.eq.s32.totalorder %s37, 1
      %p102 = por %p100, %p101
      %p103 = scmp.ne.s32.totalorder %s94, %s95
      %p104 = scmp.eq.s32.totalorder %s37, 0
      %p105 = por %p103, %p104
      %p106 = scmp.ne.s32.totalorder %s94, %s95
      %p107 = scmp.eq.s32.totalorder %s38, 1
      %p108 = por %p106, %p107
      %p110 = scmp.ne.s32.totalorder %s95, %s109
      %p111 = scmp.eq.s32.totalorder %s38, 0
      %p112 = por %p110, %p111
      %s114 = sadd.s32 %s113, 1
      %p117 = scmp.eq.s32.totalorder %s32, 1
      %p118 = scmp.ne.s32.totalorder %s113, %s115
      %p119 = scmp.eq.s32.totalorder %s32, 0
      %p120 = por %p118, %p119
      %p121 = scmp.ne.s32.totalorder %s113, %s115
      %p122 = scmp.eq.s32.totalorder %s37, 1
      %p123 = por %p121, %p122
      %p124 = scmp.ne.s32.totalorder %s115, %s116
      %p125 = scmp.eq.s32.totalorder %s37, 0
      %p126 = por %p124, %p125
      %p127 = scmp.ne.s32.totalorder %s115, %s116
      %p128 = scmp.eq.s32.totalorder %s38, 1
      %p129 = por %p127, %p128
      %p131 = scmp.ne.s32.totalorder %s116, %s130
      %p132 = scmp.eq.s32.totalorder %s38, 0
      %p133 = por %p131, %p132
      %s135 = sadd.s32 %s134, 1
      %p138 = scmp.eq.s32.totalorder %s32, 1
      %p139 = scmp.ne.s32.totalorder %s134, %s136
      %p140 = scmp.eq.s32.totalorder %s32, 0
      %p141 = por %p139, %p140
      %p142 = scmp.ne.s32.totalorder %s134, %s136
      %p143 = scmp.eq.s32.totalorder %s37, 1
      %p144 = por %p142, %p143
      %p145 = scmp.ne.s32.totalorder %s136, %s137
      %p146 = scmp.eq.s32.totalorder %s37, 0
      %p147 = por %p145, %p146
      %p148 = scmp.ne.s32.totalorder %s136, %s137
      %p149 = scmp.eq.s32.totalorder %s38, 1
      %p150 = por %p148, %p149
      %p152 = scmp.ne.s32.totalorder %s137, %s151
      %p153 = scmp.eq.s32.totalorder %s38, 0
      %p154 = por %p152, %p153
      %s156 = sadd.s32 %s155, 1
      %p159 = scmp.eq.s32.totalorder %s32, 1
      %p160 = scmp.ne.s32.totalorder %s155, %s157
      %p161 = scmp.eq.s32.totalorder %s32, 0
      %p162 = por %p160, %p161
      %p163 = scmp.ne.s32.totalorder %s155, %s157
      %p164 = scmp.eq.s32.totalorder %s37, 1
      %p165 = por %p163, %p164
      %p166 = scmp.ne.s32.totalorder %s157, %s158
      %p167 = scmp.eq.s32.totalorder %s37, 0
      %p168 = por %p166, %p167
      %p169 = scmp.ne.s32.totalorder %s157, %s158
      %p170 = scmp.eq.s32.totalorder %s38, 1
      %p171 = por %p169, %p170
      %p173 = scmp.ne.s32.totalorder %s158, %s172
      %p174 = scmp.eq.s32.totalorder %s38, 0
      %p175 = por %p173, %p174
      %s177 = sadd.s32 %s176, 1
      %p180 = scmp.eq.s32.totalorder %s32, 1
      %p181 = scmp.ne.s32.totalorder %s176, %s178
      %p182 = scmp.eq.s32.totalorder %s32, 0
      %p183 = por %p181, %p182
      %p184 = scmp.ne.s32.totalorder %s176, %s178
      %p185 = scmp.eq.s32.totalorder %s37, 1
      %p186 = por %p184, %p185
      %p187 = scmp.ne.s32.totalorder %s178, %s179
      %p188 = scmp.eq.s32.totalorder %s37, 0
      %p189 = por %p187, %p188
      %p190 = scmp.ne.s32.totalorder %s178, %s179
      %p191 = scmp.eq.s32.totalorder %s38, 1
      %p192 = por %p190, %p191
      %p194 = scmp.ne.s32.totalorder %s179, %s193
      %p195 = scmp.eq.s32.totalorder %s38, 0
      %p196 = por %p194, %p195
      %s198 = sadd.s32 %s197, 1
      %p201 = scmp.eq.s32.totalorder %s32, 1
      %p202 = scmp.ne.s32.totalorder %s197, %s199
      %p203 = scmp.eq.s32.totalorder %s32, 0
      %p204 = por %p202, %p203
      %p205 = scmp.ne.s32.totalorder %s197, %s199
      %p206 = scmp.eq.s32.totalorder %s37, 1
      %p207 = por %p205, %p206
      %p208 = scmp.ne.s32.totalorder %s199, %s200
      %p209 = scmp.eq.s32.totalorder %s37, 0
      %p210 = por %p208, %p209
      %p211 = scmp.ne.s32.totalorder %s199, %s200
      %p212 = scmp.eq.s32.totalorder %s38, 1
      %p213 = por %p211, %p212
      %p215 = scmp.ne.s32.totalorder %s200, %s214
      %p216 = scmp.eq.s32.totalorder %s38, 0
      %p217 = por %p215, %p216
      %s219 = sadd.s32 %s218, 1
      %p222 = scmp.eq.s32.totalorder %s32, 1
      %p223 = scmp.ne.s32.totalorder %s218, %s220
      %p224 = scmp.eq.s32.totalorder %s32, 0
      %p225 = por %p223, %p224
      %p226 = scmp.ne.s32.totalorder %s218, %s220
      %p227 = scmp.eq.s32.totalorder %s37, 1
      %p228 = por %p226, %p227
      %p229 = scmp.ne.s32.totalorder %s220, %s221
      %p230 = scmp.eq.s32.totalorder %s37, 0
      %p231 = por %p229, %p230
      %p232 = scmp.ne.s32.totalorder %s220, %s221
      %p233 = scmp.eq.s32.totalorder %s38, 1
      %p234 = por %p232, %p233
      %p236 = scmp.ne.s32.totalorder %s221, %s235
      %p237 = scmp.eq.s32.totalorder %s38, 0
      %p238 = por %p236, %p237
      %s240 = sadd.s32 %s239, 1
      %p243 = scmp.eq.s32.totalorder %s32, 1
      %p244 = scmp.ne.s32.totalorder %s239, %s241
      %p245 = scmp.eq.s32.totalorder %s32, 0
      %p246 = por %p244, %p245
      %p247 = scmp.ne.s32.totalorder %s239, %s241
      %p248 = scmp.eq.s32.totalorder %s37, 1
      %p249 = por %p247, %p248
      %p250 = scmp.ne.s32.totalorder %s241, %s242
      %p251 = scmp.eq.s32.totalorder %s37, 0
      %p252 = por %p250, %p251
      %p253 = scmp.ne.s32.totalorder %s241, %s242
      %p254 = scmp.eq.s32.totalorder %s38, 1
      %p255 = por %p253, %p254
      %p257 = scmp.ne.s32.totalorder %s242, %s256
      %p258 = scmp.eq.s32.totalorder %s38, 0
      %p259 = por %p257, %p258
      %s261 = sadd.s32 %s260, 1
      %p264 = scmp.eq.s32.totalorder %s32, 1
      %p265 = scmp.ne.s32.totalorder %s260, %s262
      %p266 = scmp.eq.s32.totalorder %s32, 0
      %p267 = por %p265, %p266
      %p268 = scmp.ne.s32.totalorder %s260, %s262
      %p269 = scmp.eq.s32.totalorder %s37, 1
      %p270 = por %p268, %p269
      %p271 = scmp.ne.s32.totalorder %s262, %s263
      %p272 = scmp.eq.s32.totalorder %s37, 0
      %p273 = por %p271, %p272
      %p274 = scmp.ne.s32.totalorder %s262, %s263
      %p275 = scmp.eq.s32.totalorder %s38, 1
      %p276 = por %p274, %p275
      %p278 = scmp.ne.s32.totalorder %s263, %s277
      %p279 = scmp.eq.s32.totalorder %s38, 0
      %p280 = por %p278, %p279
      %s282 = sadd.s32 %s281, 1
      %p285 = scmp.eq.s32.totalorder %s32, 1
      %p286 = scmp.ne.s32.totalorder %s281, %s283
      %p287 = scmp.eq.s32.totalorder %s32, 0
      %p288 = por %p286, %p287
      %p289 = scmp.ne.s32.totalorder %s281, %s283
      %p290 = scmp.eq.s32.totalorder %s37, 1
      %p291 = por %p289, %p290
      %p292 = scmp.ne.s32.totalorder %s283, %s284
      %p293 = scmp.eq.s32.totalorder %s37, 0
      %p294 = por %p292, %p293
      %p295 = scmp.ne.s32.totalorder %s283, %s284
      %p296 = scmp.eq.s32.totalorder %s38, 1
      %p297 = por %p295, %p296
      %p299 = scmp.ne.s32.totalorder %s284, %s298
      %p300 = scmp.eq.s32.totalorder %s38, 0
      %p301 = por %p299, %p300
      %s303 = sadd.s32 %s302, 1
      %p306 = scmp.eq.s32.totalorder %s32, 1
      %p307 = scmp.ne.s32.totalorder %s302, %s304
      %p308 = scmp.eq.s32.totalorder %s32, 0
      %p309 = por %p307, %p308
      %p310 = scmp.ne.s32.totalorder %s302, %s304
      %p311 = scmp.eq.s32.totalorder %s37, 1
      %p312 = por %p310, %p311
      %p313 = scmp.ne.s32.totalorder %s304, %s305
      %p314 = scmp.eq.s32.totalorder %s37, 0
      %p315 = por %p313, %p314
      %p316 = scmp.ne.s32.totalorder %s304, %s305
      %p317 = scmp.eq.s32.totalorder %s38, 1
      %p318 = por %p316, %p317
      %p320 = scmp.ne.s32.totalorder %s305, %s319
      %p321 = scmp.eq.s32.totalorder %s38, 0
      %p322 = por %p320, %p321
      %s324 = sadd.s32 %s323, 1
      %p327 = scmp.eq.s32.totalorder %s32, 1
      %p328 = scmp.ne.s32.totalorder %s323, %s325
      %p329 = scmp.eq.s32.totalorder %s32, 0
      %p330 = por %p328, %p329
      %p331 = scmp.ne.s32.totalorder %s323, %s325
      %p332 = scmp.eq.s32.totalorder %s37, 1
      %p333 = por %p331, %p332
      %p334 = scmp.ne.s32.totalorder %s325, %s326
      %p335 = scmp.eq.s32.totalorder %s37, 0
      %p336 = por %p334, %p335
      %p337 = scmp.ne.s32.totalorder %s325, %s326
      %p338 = scmp.eq.s32.totalorder %s38, 1
      %p339 = por %p337, %p338
      %p341 = scmp.ne.s32.totalorder %s326, %s340
      %p342 = scmp.eq.s32.totalorder %s38, 0
      %p343 = por %p341, %p342
      %s345 = sadd.s32 %s344, 1
      %p348 = scmp.eq.s32.totalorder %s32, 1
      %p349 = scmp.ne.s32.totalorder %s344, %s346
      %p350 = scmp.eq.s32.totalorder %s32, 0
      %p351 = por %p349, %p350
      %p352 = scmp.ne.s32.totalorder %s344, %s346
      %p353 = scmp.eq.s32.totalorder %s37, 1
      %p354 = por %p352, %p353
      %p355 = scmp.ne.s32.totalorder %s346, %s347
      %p356 = scmp.eq.s32.totalorder %s37, 0
      %p357 = por %p355, %p356
      %p358 = scmp.ne.s32.totalorder %s346, %s347
      %p359 = scmp.eq.s32.totalorder %s38, 1
      %p360 = por %p358, %p359
      %p362 = scmp.ne.s32.totalorder %s347, %s361
      %p363 = scmp.eq.s32.totalorder %s38, 0
      %p364 = por %p362, %p363
      %s366 = sadd.s32 %s365, 1
      %p369 = scmp.eq.s32.totalorder %s32, 1
      %p370 = scmp.ne.s32.totalorder %s365, %s367
      %p371 = scmp.eq.s32.totalorder %s32, 0
      %p372 = por %p370, %p371
      %p373 = scmp.ne.s32.totalorder %s365, %s367
      %p374 = scmp.eq.s32.totalorder %s37, 1
      %p375 = por %p373, %p374
      %p376 = scmp.ne.s32.totalorder %s367, %s368
      %p377 = scmp.eq.s32.totalorder %s37, 0
      %p378 = por %p376, %p377
      %p379 = scmp.ne.s32.totalorder %s367, %s368
      %p380 = scmp.eq.s32.totalorder %s38, 1
      %p381 = por %p379, %p380
      %p383 = scmp.ne.s32.totalorder %s368, %s382
      %p384 = scmp.eq.s32.totalorder %s38, 0
      %p385 = por %p383, %p384
      %s387 = sadd.s32 %s386, 1
      %p390 = scmp.eq.s32.totalorder %s32, 1
      %p391 = scmp.ne.s32.totalorder %s386, %s388
      %p392 = scmp.eq.s32.totalorder %s32, 0
      %p393 = por %p391, %p392
      %p394 = scmp.ne.s32.totalorder %s386, %s388
      %p395 = scmp.eq.s32.totalorder %s37, 1
      %p396 = por %p394, %p395
      %p397 = scmp.ne.s32.totalorder %s388, %s389
      %p398 = scmp.eq.s32.totalorder %s37, 0
      %p399 = por %p397, %p398
      %p400 = scmp.ne.s32.totalorder %s388, %s389
      %p401 = scmp.eq.s32.totalorder %s38, 1
      %p402 = por %p400, %p401
      %p404 = scmp.ne.s32.totalorder %s389, %s403
      %p405 = scmp.eq.s32.totalorder %s38, 0
      %p406 = por %p404, %p405
      %s408 = sadd.s32 %s407, 1
      %p411 = scmp.eq.s32.totalorder %s32, 1
      %p412 = scmp.ne.s32.totalorder %s407, %s409
      %p413 = scmp.eq.s32.totalorder %s32, 0
      %p414 = por %p412, %p413
      %p415 = scmp.ne.s32.totalorder %s407, %s409
      %p416 = scmp.eq.s32.totalorder %s37, 1
      %p417 = por %p415, %p416
      %p418 = scmp.ne.s32.totalorder %s409, %s410
      %p419 = scmp.eq.s32.totalorder %s37, 0
      %p420 = por %p418, %p419
      %p421 = scmp.ne.s32.totalorder %s409, %s410
      %p422 = scmp.eq.s32.totalorder %s38, 1
      %p423 = por %p421, %p422
      %p425 = scmp.ne.s32.totalorder %s410, %s424
      %p426 = scmp.eq.s32.totalorder %s38, 0
      %p427 = por %p425, %p426
      %s428 = ssub.s32 %s32, %s39
      %p429 = scmp.eq.s32.totalorder %s428, 0
      %s431 = sadd.s32 %s430, 1
      %s432 = scalar_select %p429, %s430, %s431
      %p435 = pneg %p429
      %p436 = scmp.eq.s32.totalorder %s32, 1
      %p437 = por %p435, %p436
      %p438 = scmp.ne.s32.totalorder %s430, %s433
      %p439 = scmp.eq.s32.totalorder %s32, 0
      %p440 = por %p438, %p439
      %p441 = scmp.ne.s32.totalorder %s430, %s433
      %p442 = scmp.eq.s32.totalorder %s37, 1
      %p443 = por %p441, %p442
      %p444 = scmp.ne.s32.totalorder %s433, %s434
      %p445 = scmp.eq.s32.totalorder %s37, 0
      %p446 = por %p444, %p445
      %p447 = scmp.ne.s32.totalorder %s433, %s434
      %p448 = scmp.eq.s32.totalorder %s38, 1
      %p449 = por %p447, %p448
      %p451 = scmp.ne.s32.totalorder %s434, %s450
      %p452 = scmp.eq.s32.totalorder %s38, 0
      %p453 = por %p451, %p452
      %s454 = ssub.s32 %s32, %s39
      %p455 = scmp.eq.s32.totalorder %s454, 0
      %s457 = sadd.s32 %s456, 1
      %s458 = scalar_select %p455, %s456, %s457
      %p461 = pneg %p455
      %p462 = scmp.eq.s32.totalorder %s32, 1
      %p463 = por %p461, %p462
      %p464 = scmp.ne.s32.totalorder %s456, %s459
      %p465 = scmp.eq.s32.totalorder %s32, 0
      %p466 = por %p464, %p465
      %p467 = scmp.ne.s32.totalorder %s456, %s459
      %p468 = scmp.eq.s32.totalorder %s37, 1
      %p469 = por %p467, %p468
      %p470 = scmp.ne.s32.totalorder %s459, %s460
      %p471 = scmp.eq.s32.totalorder %s37, 0
      %p472 = por %p470, %p471
      %p473 = scmp.ne.s32.totalorder %s459, %s460
      %p474 = scmp.eq.s32.totalorder %s38, 1
      %p475 = por %p473, %p474
      %p477 = scmp.ne.s32.totalorder %s460, %s476
      %p478 = scmp.eq.s32.totalorder %s38, 0
      %p479 = por %p477, %p478
      %p480 = scmp.le.s32.totalorder 1, %s32
      %p481 = scmp.lt.s32.totalorder %s32, 3
      %p482 = pnand %p480, %p481
      %p483 = pneg %p482
      // Predicated region
      $region9: #{tpu_custom_call.1} parent=5 // pred_check
        _
      $region10: #{tpu_custom_call.1} parent=5 // pred_check_branch
        %485 = sbr.rel (%p482) target = $region12
      $region11: #{tpu_custom_call.1} parent=5 // pred_region
        %s486 = ssub.s32 %s32, 1
        // Predicated region
        $region13: #{tpu_custom_call.1} parent=11 // pred_check
          %p487 = pneg %p105
        $region14: #{tpu_custom_call.1} parent=11 // pred_check_branch
          %489 = sbr.rel (%p487) target = $region16
        $region15: #{tpu_custom_call.1} parent=11 // pred_region
          _
        $region16: #{tpu_custom_call.1} parent=11 // pred_fallthru
          _
        // Predicated region
        $region17: #{tpu_custom_call.1} parent=11 // pred_check
          %p490 = pneg %p126
        $region18: #{tpu_custom_call.1} parent=11 // pred_check_branch
          %492 = sbr.rel (%p490) target = $region20
        $region19: #{tpu_custom_call.1} parent=11 // pred_region
          _
        $region20: #{tpu_custom_call.1} parent=11 // pred_fallthru
          _
        // Predicated region
        $region21: #{tpu_custom_call.1} parent=11 // pred_check
          %p493 = pneg %p147
        $region22: #{tpu_custom_call.1} parent=11 // pred_check_branch
          %495 = sbr.rel (%p493) target = $region24
        $region23: #{tpu_custom_call.1} parent=11 // pred_region
          _
        $region24: #{tpu_custom_call.1} parent=11 // pred_fallthru
          _
        // Predicated region
        $region25: #{tpu_custom_call.1} parent=11 // pred_check
          %p496 = pneg %p168
        $region26: #{tpu_custom_call.1} parent=11 // pred_check_branch
          %498 = sbr.rel (%p496) target = $region28
        $region27: #{tpu_custom_call.1} parent=11 // pred_region
          _
        $region28: #{tpu_custom_call.1} parent=11 // pred_fallthru
          _
        // Predicated region
        $region29: #{tpu_custom_call.1} parent=11 // pred_check
          %p499 = pneg %p189
        $region30: #{tpu_custom_call.1} parent=11 // pred_check_branch
          %501 = sbr.rel (%p499) target = $region32
        $region31: #{tpu_custom_call.1} parent=11 // pred_region
          _
        $region32: #{tpu_custom_call.1} parent=11 // pred_fallthru
          _
        // Predicated region
        $region33: #{tpu_custom_call.1} parent=11 // pred_check
          %p502 = pneg %p210
        $region34: #{tpu_custom_call.1} parent=11 // pred_check_branch
          %504 = sbr.rel (%p502) target = $region36
        $region35: #{tpu_custom_call.1} parent=11 // pred_region
          _
        $region36: #{tpu_custom_call.1} parent=11 // pred_fallthru
          _
        // Predicated region
        $region37: #{tpu_custom_call.1} parent=11 // pred_check
          %p505 = pneg %p231
        $region38: #{tpu_custom_call.1} parent=11 // pred_check_branch
          %507 = sbr.rel (%p505) target = $region40
        $region39: #{tpu_custom_call.1} parent=11 // pred_region
          _
        $region40: #{tpu_custom_call.1} parent=11 // pred_fallthru
          _
        // Predicated region
        $region41: #{tpu_custom_call.1} parent=11 // pred_check
          %p508 = pneg %p252
        $region42: #{tpu_custom_call.1} parent=11 // pred_check_branch
          %510 = sbr.rel (%p508) target = $region44
        $region43: #{tpu_custom_call.1} parent=11 // pred_region
          _
        $region44: #{tpu_custom_call.1} parent=11 // pred_fallthru
          _
        // Predicated region
        $region45: #{tpu_custom_call.1} parent=11 // pred_check
          %p511 = pneg %p273
        $region46: #{tpu_custom_call.1} parent=11 // pred_check_branch
          %513 = sbr.rel (%p511) target = $region48
        $region47: #{tpu_custom_call.1} parent=11 // pred_region
          _
        $region48: #{tpu_custom_call.1} parent=11 // pred_fallthru
          _
        // Predicated region
        $region49: #{tpu_custom_call.1} parent=11 // pred_check
          %p514 = pneg %p294
        $region50: #{tpu_custom_call.1} parent=11 // pred_check_branch
          %516 = sbr.rel (%p514) target = $region52
        $region51: #{tpu_custom_call.1} parent=11 // pred_region
          _
        $region52: #{tpu_custom_call.1} parent=11 // pred_fallthru
          _
        // Predicated region
        $region53: #{tpu_custom_call.1} parent=11 // pred_check
          %p517 = pneg %p315
        $region54: #{tpu_custom_call.1} parent=11 // pred_check_branch
          %519 = sbr.rel (%p517) target = $region56
        $region55: #{tpu_custom_call.1} parent=11 // pred_region
          _
        $region56: #{tpu_custom_call.1} parent=11 // pred_fallthru
          _
        // Predicated region
        $region57: #{tpu_custom_call.1} parent=11 // pred_check
          %p520 = pneg %p336
        $region58: #{tpu_custom_call.1} parent=11 // pred_check_branch
          %522 = sbr.rel (%p520) target = $region60
        $region59: #{tpu_custom_call.1} parent=11 // pred_region
          _
        $region60: #{tpu_custom_call.1} parent=11 // pred_fallthru
          _
        // Predicated region
        $region61: #{tpu_custom_call.1} parent=11 // pred_check
          %p523 = pneg %p357
        $region62: #{tpu_custom_call.1} parent=11 // pred_check_branch
          %525 = sbr.rel (%p523) target = $region64
        $region63: #{tpu_custom_call.1} parent=11 // pred_region
          _
        $region64: #{tpu_custom_call.1} parent=11 // pred_fallthru
          _
        // Predicated region
        $region65: #{tpu_custom_call.1} parent=11 // pred_check
          %p526 = pneg %p378
        $region66: #{tpu_custom_call.1} parent=11 // pred_check_branch
          %528 = sbr.rel (%p526) target = $region68
        $region67: #{tpu_custom_call.1} parent=11 // pred_region
          _
        $region68: #{tpu_custom_call.1} parent=11 // pred_fallthru
          _
        // Predicated region
        $region69: #{tpu_custom_call.1} parent=11 // pred_check
          %p529 = pneg %p399
        $region70: #{tpu_custom_call.1} parent=11 // pred_check_branch
          %531 = sbr.rel (%p529) target = $region72
        $region71: #{tpu_custom_call.1} parent=11 // pred_region
          _
        $region72: #{tpu_custom_call.1} parent=11 // pred_fallthru
          _
        // Predicated region
        $region73: #{tpu_custom_call.1} parent=11 // pred_check
          %p532 = pneg %p420
        $region74: #{tpu_custom_call.1} parent=11 // pred_check_branch
          %534 = sbr.rel (%p532) target = $region76
        $region75: #{tpu_custom_call.1} parent=11 // pred_region
          _
        $region76: #{tpu_custom_call.1} parent=11 // pred_fallthru
          _
      $region12: #{tpu_custom_call.1} parent=5 // pred_fallthru
        _
      %p535 = scmp.lt.s32.totalorder %s32, 2
      // Predicated region
      $region77: #{tpu_custom_call.1} parent=5 // pred_check
        %p536 = pneg %p535
      $region78: #{tpu_custom_call.1} parent=5 // pred_check_branch
        %538 = sbr.rel (%p536) target = $region80
      $region79: #{tpu_custom_call.1} parent=5 // pred_region
        // Predicated region
        $region81: #{tpu_custom_call.1} parent=79 // pred_check
          %p539 = pneg %p52
        $region82: #{tpu_custom_call.1} parent=79 // pred_check_branch
          %541 = sbr.rel (%p539) target = $region84
        $region83: #{tpu_custom_call.1} parent=79 // pred_region
          %p542 = scmp.lt.s32.totalorder %s32, 1
          %s543 = scalar_select %p542, %s32, 1
          %s544 = smul.addr %s543, 8
          %s545 = scalar_lea.vmem %s0, %s544
        $region84: #{tpu_custom_call.1} parent=79 // pred_fallthru
          _
        // Predicated region
        $region85: #{tpu_custom_call.1} parent=79 // pred_check
          %p546 = pneg %p78
        $region86: #{tpu_custom_call.1} parent=79 // pred_check_branch
          %548 = sbr.rel (%p546) target = $region88
        $region87: #{tpu_custom_call.1} parent=79 // pred_region
          %p549 = scmp.lt.s32.totalorder %s32, 1
          %s550 = scalar_select %p549, %s32, 1
          %s551 = scalar_lea.vmem %s1, %s550
        $region88: #{tpu_custom_call.1} parent=79 // pred_fallthru
          _
      $region80: #{tpu_custom_call.1} parent=5 // pred_fallthru
        _
      %p552 = scmp.le.s32.totalorder 1, %s32
      %p553 = scmp.lt.s32.totalorder %s32, 3
      %p554 = pnand %p552, %p553
      %p555 = pneg %p554
      // Predicated region
      $region89: #{tpu_custom_call.1} parent=5 // pred_check
        _
      $region90: #{tpu_custom_call.1} parent=5 // pred_check_branch
        %557 = sbr.rel (%p554) target = $region92
      $region91: #{tpu_custom_call.1} parent=5 // pred_region
        %s558 = ssub.s32 %s32, 1
        %p559 = scmp.lt.s32.totalorder %s37, 1
        %s560 = scalar_select %p559, %s37, 1
        %s561 = smul.addr %s560, 8
        %s562 = scalar_lea.vmem %s0, %s561
        %p563 = pneg %p58
        %p564 = pneg %p55
        %p565 = scmp.lt.s32.totalorder %s37, 1
        %s566 = scalar_select %p565, %s37, 1
        %s567 = scalar_lea.vmem %s1, %s566
        %p568 = pneg %p84
        %p569 = pneg %p81
        %p570 = pneg %p105
        %p571 = pneg %p102
        %p572 = pneg %p126
        %p573 = pneg %p123
        %p574 = pneg %p147
        %p575 = pneg %p144
        %p576 = pneg %p168
        %p577 = pneg %p165
        %p578 = pneg %p189
        %p579 = pneg %p186
        %p580 = pneg %p210
        %p581 = pneg %p207
        %p582 = pneg %p231
        %p583 = pneg %p228
        %p584 = pneg %p252
        %p585 = pneg %p249
        %p586 = pneg %p273
        %p587 = pneg %p270
        %p588 = pneg %p294
        %p589 = pneg %p291
        %p590 = pneg %p315
        %p591 = pneg %p312
        %p592 = pneg %p336
        %p593 = pneg %p333
        %p594 = pneg %p357
        %p595 = pneg %p354
        %p596 = pneg %p378
        %p597 = pneg %p375
        %p598 = pneg %p399
        %p599 = pneg %p396
        %p600 = pneg %p420
        %p601 = pneg %p417
        %p602 = pneg %p446
        %p603 = pneg %p443
        %s604 = sand.u32 %s433, 1
        %s605 = scalar_lea.sflag [#allocation3], %s604
        %s606 = sand.u32 %s433, 1
        %s607 = smul.addr %s606, 8
        %s608 = scalar_lea.vmem [#allocation2], %s607
        %p609 = pneg %p472
        %p610 = pneg %p469
        %s611 = sand.u32 %s459, 1
        %s612 = scalar_lea.sflag [#allocation5], %s611
        %s613 = sand.u32 %s459, 1
        %s614 = smul.addr %s613, 32
        %s615 = scalar_lea.vmem [#allocation4], %s614
        %p616 = scmp.lt.s32.totalorder %s37, 1
        %s617 = scalar_select %p616, %s37, 1
        %s618 = smul.addr %s617, 8
        %s619 = scalar_lea.vmem %s0, %s618
        %p620 = scmp.lt.s32.totalorder %s37, 1
        %s621 = scalar_select %p620, %s37, 1
        %s622 = scalar_lea.vmem %s1, %s621
        %v624 = vld [vmem:[%s619] sm:$0xff]
        %v625 = vld [vmem:[%s622] sm:$0x1]
        %vm626 = vcmp.eq.f32.partialorder %v625, 0.0
        %v627 = vld [vmem:[%s2] sm:$0x1]
        %v628 = vld [vmem:[%s3] sm:$0x1]
        %vm629 = vcmask 261120
        %v630 = vsel %vm629, %v624, 0.0
        %631 = vadd.xlane.f32.xlu0 %v630
        %v632 = vpop.xlane.xlu0 %631
        %v633 = vrcp.pop 32.0
        %v634 = vmul.f32 %v632, %v633
        %v635 = vsub.f32 %v624, %v634
        %v636 = vmul.f32 %v635, %v635
        %v637 = vsel %vm629, %v636, 0.0
        %638 = vadd.xlane.f32.xlu0 %v637
        %v639 = vpop.xlane.xlu0 %638
        %v640 = vrcp.pop 31.0
        %v641 = vmul.f32 %v639, %v640
        %v642 = vrsqrt.pop %v641
        %v643 = vmul.f32 %v641, %v642
        %vm644 = vcmp.eq.f32.partialorder %v641, inf
        %v645 = vsel %vm644, %v641, %v643
        %vm646 = vcmp.eq.f32.partialorder %v641, 0.0
        %v647 = vand.u32 %v641, 2147483648
        %v648 = vsel %vm646, %v647, %v645
        %v649 = vadd.f32 %v648, 1e-06
        %v650 = vrcp.pop %v649
        %v652 = vlaneseq
        %v653 = vshrl.u32 %v652, 7
        %v654 = vsub.s32 0, %v653
        %v655 = vrot.slane %v627, %v654
        %v657 = vmul.f32 %v655, %v635
        %v658 = vmul.f32 %v657, %v650
        %v660 = vlaneseq
        %v661 = vshrl.u32 %v660, 7
        %v662 = vsub.s32 0, %v661
        %v663 = vrot.slane %v628, %v662
        %v665 = vadd.f32 %v658, %v663
        %v666 = vpack.c.bf16 %v665, %v665
        %v667 = vld [vmem:[%s4] sm:$0xf]
        %v668 = vld [vmem:[%s4 + $0x4] sm:$0xf]
        %v669 = vld [vmem:[%s4 + $0x8] sm:$0xf]
        %v670 = vld [vmem:[%s4 + $0xc] sm:$0xf]
        %v671 = vld [vmem:[%s5] sm:$0x1]
        %v673 = vlaneseq
        %v674 = vshrl.u32 %v673, 7
        %v675 = vsub.s32 0, %v674
        %v676 = vrot.slane %v671, %v675
        %v682 = vunpack.c.l.b16 %v667
        %v683 = vunpack.c.l.b16 %v668
        %v684 = vunpack.c.l.b16 %v669
        %v685 = vunpack.c.l.b16 %v670
        %v686 = vpack.c.b16 %v683, %v682
        %v687 = vpack.c.b16 %v685, %v684
        %v691 = vsel %vm629, %v666, 0
        %693 = vmatprep.subr.bf16.mxu0 0
        %694 = vmatpush1.bf16.msra.mxu0 %v686
        %695 = vmatprep.subr.bf16.mxu0 0
        %696 = vmatpush1.bf16.msra.mxu0 %v687
        %697 = vmatprep.subr.bf16.mxu0 0
        %698 = vmatpush1.bf16.msra.mxu0 0
        %699 = vmatprep.subr.bf16.mxu0 0
        %700 = vmatpush1.bf16.msra.mxu0 0
        %701 = vmatprep.subr.bf16.mxu0 0
        %702 = vmatpush1.bf16.msra.mxu0 0
        %703 = vmatprep.subr.bf16.mxu0 0
        %704 = vmatpush1.bf16.msra.mxu0 0
        %705 = vmatprep.subr.bf16.mxu0 0
        %706 = vmatpush1.bf16.msra.mxu0 0
        %707 = vmatprep.subr.bf16.mxu0 0
        %708 = vmatpush1.bf16.msra.mxu0 0
        %709 = vmatprep.subr.bf16.mxu0 0
        %710 = vmatpush1.bf16.msra.mxu0 0
        %711 = vmatprep.subr.bf16.mxu0 0
        %712 = vmatpush1.bf16.msra.mxu0 0
        %713 = vmatprep.subr.bf16.mxu0 0
        %714 = vmatpush1.bf16.msra.mxu0 0
        %715 = vmatprep.subr.bf16.mxu0 0
        %716 = vmatpush1.bf16.msra.mxu0 0
        %717 = vmatprep.subr.bf16.mxu0 0
        %718 = vmatpush1.bf16.msra.mxu0 0
        %719 = vmatprep.subr.bf16.mxu0 0
        %720 = vmatpush1.bf16.msra.mxu0 0
        %721 = vmatprep.subr.bf16.mxu0 0
        %722 = vmatpush1.bf16.msra.mxu0 0
        %723 = vmatprep.subr.bf16.mxu0 0
        %724 = vmatpush1.bf16.msra.mxu0 0
        %725 = vmatprep.mubr.bf16.mxu0 0
        %726 = vmatmul.mubr.bf16.gmra.mrb[0].mxu0 %v691
        %v727 = vpop.f32.mrb[0].mxu0
        %v728 = vadd.f32 %v676, %v727
        %v729 = vpop.f32.mrb[0].mxu0
        %v730 = vpop.f32.mrb[0].mxu0
        %v731 = vpop.f32.mrb[0].mxu0
        %732 = vdwg.mxu0
        %v733 = vmul.f32 %v728, 0.35355338
        %v734 = vld [vmem:[%s6] sm:$0xf]
        %v735 = vld [vmem:[%s6 + $0x4] sm:$0xf]
        %v736 = vld [vmem:[%s6 + $0x8] sm:$0xf]
        %v737 = vld [vmem:[%s6 + $0xc] sm:$0xf]
        %v738 = vld [vmem:[%s7] sm:$0x1]
        %v740 = vlaneseq
        %v741 = vshrl.u32 %v740, 7
        %v742 = vsub.s32 0, %v741
        %v743 = vrot.slane %v738, %v742
        %v749 = vunpack.c.l.b16 %v734
        %v750 = vunpack.c.l.b16 %v735
        %v751 = vunpack.c.l.b16 %v736
        %v752 = vunpack.c.l.b16 %v737
        %v753 = vpack.c.b16 %v750, %v749
        %v754 = vpack.c.b16 %v752, %v751
        %757 = vmatprep.subr.bf16.mxu0 0
        %758 = vmatpush1.bf16.msra.mxu0 %v753
        %759 = vmatprep.subr.bf16.mxu0 0
        %760 = vmatpush1.bf16.msra.mxu0 %v754
        %761 = vmatprep.subr.bf16.mxu0 0
        %762 = vmatpush1.bf16.msra.mxu0 0
        %763 = vmatprep.subr.bf16.mxu0 0
        %764 = vmatpush1.bf16.msra.mxu0 0
        %765 = vmatprep.subr.bf16.mxu0 0
        %766 = vmatpush1.bf16.msra.mxu0 0
        %767 = vmatprep.subr.bf16.mxu0 0
        %768 = vmatpush1.bf16.msra.mxu0 0
        %769 = vmatprep.subr.bf16.mxu0 0
        %770 = vmatpush1.bf16.msra.mxu0 0
        %771 = vmatprep.subr.bf16.mxu0 0
        %772 = vmatpush1.bf16.msra.mxu0 0
        %773 = vmatprep.subr.bf16.mxu0 0
        %774 = vmatpush1.bf16.msra.mxu0 0
        %775 = vmatprep.subr.bf16.mxu0 0
        %776 = vmatpush1.bf16.msra.mxu0 0
        %777 = vmatprep.subr.bf16.mxu0 0
        %778 = vmatpush1.bf16.msra.mxu0 0
        %779 = vmatprep.subr.bf16.mxu0 0
        %780 = vmatpush1.bf16.msra.mxu0 0
        %781 = vmatprep.subr.bf16.mxu0 0
        %782 = vmatpush1.bf16.msra.mxu0 0
        %783 = vmatprep.subr.bf16.mxu0 0
        %784 = vmatpush1.bf16.msra.mxu0 0
        %785 = vmatprep.subr.bf16.mxu0 0
        %786 = vmatpush1.bf16.msra.mxu0 0
        %787 = vmatprep.subr.bf16.mxu0 0
        %788 = vmatpush1.bf16.msra.mxu0 0
        %789 = vmatprep.mubr.bf16.mxu0 0
        %790 = vmatmul.mubr.bf16.gmra.mrb[0].mxu0 %v691
        %v791 = vpop.f32.mrb[0].mxu0
        %v792 = vadd.f32 %v743, %v791
        %v793 = vpop.f32.mrb[0].mxu0
        %v794 = vpop.f32.mrb[0].mxu0
        %v795 = vpop.f32.mrb[0].mxu0
        %796 = vdwg.mxu0
        %v797 = vld [vmem:[%s8] sm:$0xf]
        %v798 = vld [vmem:[%s8 + $0x4] sm:$0xf]
        %v799 = vld [vmem:[%s8 + $0x8] sm:$0xf]
        %v800 = vld [vmem:[%s8 + $0xc] sm:$0xf]
        %v801 = vld [vmem:[%s9] sm:$0x1]
        %v803 = vlaneseq
        %v804 = vshrl.u32 %v803, 7
        %v805 = vsub.s32 0, %v804
        %v806 = vrot.slane %v801, %v805
        %v812 = vunpack.c.l.b16 %v797
        %v813 = vunpack.c.l.b16 %v798
        %v814 = vunpack.c.l.b16 %v799
        %v815 = vunpack.c.l.b16 %v800
        %v816 = vpack.c.b16 %v813, %v812
        %v817 = vpack.c.b16 %v815, %v814
        %820 = vmatprep.subr.bf16.mxu0 0
        %821 = vmatpush1.bf16.msra.mxu0 %v816
        %822 = vmatprep.subr.bf16.mxu0 0
        %823 = vmatpush1.bf16.msra.mxu0 %v817
        %824 = vmatprep.subr.bf16.mxu0 0
        %825 = vmatpush1.bf16.msra.mxu0 0
        %826 = vmatprep.subr.bf16.mxu0 0
        %827 = vmatpush1.bf16.msra.mxu0 0
        %828 = vmatprep.subr.bf16.mxu0 0
        %829 = vmatpush1.bf16.msra.mxu0 0
        %830 = vmatprep.subr.bf16.mxu0 0
        %831 = vmatpush1.bf16.msra.mxu0 0
        %832 = vmatprep.subr.bf16.mxu0 0
        %833 = vmatpush1.bf16.msra.mxu0 0
        %834 = vmatprep.subr.bf16.mxu0 0
        %835 = vmatpush1.bf16.msra.mxu0 0
        %836 = vmatprep.subr.bf16.mxu0 0
        %837 = vmatpush1.bf16.msra.mxu0 0
        %838 = vmatprep.subr.bf16.mxu0 0
        %839 = vmatpush1.bf16.msra.mxu0 0
        %840 = vmatprep.subr.bf16.mxu0 0
        %841 = vmatpush1.bf16.msra.mxu0 0
        %842 = vmatprep.subr.bf16.mxu0 0
        %843 = vmatpush1.bf16.msra.mxu0 0
        %844 = vmatprep.subr.bf16.mxu0 0
        %845 = vmatpush1.bf16.msra.mxu0 0
        %846 = vmatprep.subr.bf16.mxu0 0
        %847 = vmatpush1.bf16.msra.mxu0 0
        %848 = vmatprep.subr.bf16.mxu0 0
        %849 = vmatpush1.bf16.msra.mxu0 0
        %850 = vmatprep.subr.bf16.mxu0 0
        %851 = vmatpush1.bf16.msra.mxu0 0
        %852 = vmatprep.mubr.bf16.mxu0 0
        %853 = vmatmul.mubr.bf16.gmra.mrb[0].mxu0 %v691
        %v854 = vpop.f32.mrb[0].mxu0
        %v855 = vadd.f32 %v806, %v854
        %v856 = vpop.f32.mrb[0].mxu0
        %v857 = vpop.f32.mrb[0].mxu0
        %v858 = vpop.f32.mrb[0].mxu0
        %859 = vdwg.mxu0
        %v860 = vpack.c.bf16 %v733, %v733
        %862 = vrot.lane.b32.xlu0 %v860, 120
        %v863 = vpop.permute.xlu0 %862
        %864 = vrot.lane.b32.xlu0 %v860, 112
        %v865 = vpop.permute.xlu0 %864
        %866 = vrot.lane.b32.xlu0 %v860, 104
        %v867 = vpop.permute.xlu0 %866
        %v869 = vunpack.c.l.s4 1983009808
        %v870 = vunpack.c.0.s8 %v869
        %v871 = vlaneseq
        %v872 = vshrl.u32 %v871, 7
        %v873 = vsub.s32 %v870, %v872
        %v874 = vrot.slane %v860, %v873
        %v877 = vunpack.c.l.s4 1983009808
        %v878 = vunpack.c.0.s8 %v877
        %v879 = vlaneseq
        %v880 = vshrl.u32 %v879, 7
        %v881 = vsub.s32 %v878, %v880
        %v882 = vrot.slane %v865, %v881
        %v883 = vcombine.low %v874, %v882
        %v884 = vcombine.high %v874, %v882
        %v886 = vunpack.c.l.s4 1934713408
        %v887 = vunpack.c.0.s8 %v886
        %v888 = vlaneseq
        %v889 = vshrl.u32 %v888, 7
        %v890 = vsub.s32 %v887, %v889
        %v891 = vrot.slane %v883, %v890
        %v893 = vunpack.c.l.s4 1934713408
        %v894 = vunpack.c.0.s8 %v893
        %v895 = vlaneseq
        %v896 = vshrl.u32 %v895, 7
        %v897 = vsub.s32 %v894, %v896
        %v898 = vrot.slane %v884, %v897
        %v899 = vcombine.high %v891, 0
        %v900 = vcombine.high %v898, 0
        %v903 = vunpack.c.l.s4 1983009808
        %v904 = vunpack.c.0.s8 %v903
        %v905 = vlaneseq
        %v906 = vshrl.u32 %v905, 7
        %v907 = vsub.s32 %v904, %v906
        %v908 = vrot.slane %v863, %v907
        %v911 = vunpack.c.l.s4 1983009808
        %v912 = vunpack.c.0.s8 %v911
        %v913 = vlaneseq
        %v914 = vshrl.u32 %v913, 7
        %v915 = vsub.s32 %v912, %v914
        %v916 = vrot.slane %v867, %v915
        %v917 = vcombine.low %v908, %v916
        %v918 = vcombine.high %v908, %v916
        %v920 = vunpack.c.l.s4 1934713408
        %v921 = vunpack.c.0.s8 %v920
        %v922 = vlaneseq
        %v923 = vshrl.u32 %v922, 7
        %v924 = vsub.s32 %v921, %v923
        %v925 = vrot.slane %v917, %v924
        %v927 = vunpack.c.l.s4 1934713408
        %v928 = vunpack.c.0.s8 %v927
        %v929 = vlaneseq
        %v930 = vshrl.u32 %v929, 7
        %v931 = vsub.s32 %v928, %v930
        %v932 = vrot.slane %v918, %v931
        %v933 = vcombine.high %v925, 0
        %v934 = vcombine.high %v932, 0
        %v937 = vpack.i.b16 %v925, %v891
        %v939 = vshrl.u32 %v891, 16
        %v940 = vshrl.u32 %v925, 16
        %v941 = vpack.i.b16 %v940, %v939
        %v945 = vpack.i.b16 %v933, %v899
        %v947 = vshrl.u32 %v899, 16
        %v948 = vshrl.u32 %v933, 16
        %v949 = vpack.i.b16 %v948, %v947
        %v953 = vpack.i.b16 %v932, %v898
        %v955 = vshrl.u32 %v898, 16
        %v956 = vshrl.u32 %v932, 16
        %v957 = vpack.i.b16 %v956, %v955
        %v961 = vpack.i.b16 %v934, %v900
        %v963 = vshrl.u32 %v900, 16
        %v964 = vshrl.u32 %v934, 16
        %v965 = vpack.i.b16 %v964, %v963
        %v967 = vcombine.low %v937, %v953
        %v969 = vunpack.c.l.s4 1983009808
        %v970 = vunpack.c.0.s8 %v969
        %v971 = vlaneseq
        %v972 = vshrl.u32 %v971, 7
        %v973 = vsub.s32 %v970, %v972
        %v974 = vrot.slane %v967, %v973
        %v975 = vcombine.low %v945, %v961
        %v977 = vunpack.c.l.s4 1983009808
        %v978 = vunpack.c.0.s8 %v977
        %v979 = vlaneseq
        %v980 = vshrl.u32 %v979, 7
        %v981 = vsub.s32 %v978, %v980
        %v982 = vrot.slane %v975, %v981
        %v983 = vcombine.low %v974, %v982
        %v985 = vunpack.c.l.s4 1934713408
        %v986 = vunpack.c.0.s8 %v985
        %v987 = vlaneseq
        %v988 = vshrl.u32 %v987, 7
        %v989 = vsub.s32 %v986, %v988
        %v990 = vrot.slane %v983, %v989
        %v991 = vcombine.high %v990, 0
        %v992 = vcombine.low %v941, %v957
        %v994 = vunpack.c.l.s4 1983009808
        %v995 = vunpack.c.0.s8 %v994
        %v996 = vlaneseq
        %v997 = vshrl.u32 %v996, 7
        %v998 = vsub.s32 %v995, %v997
        %v999 = vrot.slane %v992, %v998
        %v1000 = vcombine.low %v949, %v965
        %v1002 = vunpack.c.l.s4 1983009808
        %v1003 = vunpack.c.0.s8 %v1002
        %v1004 = vlaneseq
        %v1005 = vshrl.u32 %v1004, 7
        %v1006 = vsub.s32 %v1003, %v1005
        %v1007 = vrot.slane %v1000, %v1006
        %v1008 = vcombine.low %v999, %v1007
        %v1010 = vunpack.c.l.s4 1934713408
        %v1011 = vunpack.c.0.s8 %v1010
        %v1012 = vlaneseq
        %v1013 = vshrl.u32 %v1012, 7
        %v1014 = vsub.s32 %v1011, %v1013
        %v1015 = vrot.slane %v1008, %v1014
        %v1016 = vcombine.high %v1015, 0
        %v1019 = vpack.i.b16 %v1015, %v990
        %v1020 = vshrl.u32 %v990, 16
        %v1021 = vshrl.u32 %v1015, 16
        %v1022 = vpack.i.b16 %v1021, %v1020
        %v1025 = vpack.i.b16 %v1016, %v991
        %v1026 = vshrl.u32 %v991, 16
        %v1027 = vshrl.u32 %v1016, 16
        %v1028 = vpack.i.b16 %v1027, %v1026
        %v1029 = vpack.c.bf16 %v792, %v792
        %1031 = vrot.lane.b32.xlu0 %v1029, 120
        %v1032 = vpop.permute.xlu0 %1031
        %1033 = vrot.lane.b32.xlu0 %v1029, 112
        %v1034 = vpop.permute.xlu0 %1033
        %1035 = vrot.lane.b32.xlu0 %v1029, 104
        %v1036 = vpop.permute.xlu0 %1035
        %v1038 = vunpack.c.l.s4 1983009808
        %v1039 = vunpack.c.0.s8 %v1038
        %v1040 = vlaneseq
        %v1041 = vshrl.u32 %v1040, 7
        %v1042 = vsub.s32 %v1039, %v1041
        %v1043 = vrot.slane %v1029, %v1042
        %v1046 = vunpack.c.l.s4 1983009808
        %v1047 = vunpack.c.0.s8 %v1046
        %v1048 = vlaneseq
        %v1049 = vshrl.u32 %v1048, 7
        %v1050 = vsub.s32 %v1047, %v1049
        %v1051 = vrot.slane %v1034, %v1050
        %v1052 = vcombine.low %v1043, %v1051
        %v1053 = vcombine.high %v1043, %v1051
        %v1055 = vunpack.c.l.s4 1934713408
        %v1056 = vunpack.c.0.s8 %v1055
        %v1057 = vlaneseq
        %v1058 = vshrl.u32 %v1057, 7
        %v1059 = vsub.s32 %v1056, %v1058
        %v1060 = vrot.slane %v1052, %v1059
        %v1062 = vunpack.c.l.s4 1934713408
        %v1063 = vunpack.c.0.s8 %v1062
        %v1064 = vlaneseq
        %v1065 = vshrl.u32 %v1064, 7
        %v1066 = vsub.s32 %v1063, %v1065
        %v1067 = vrot.slane %v1053, %v1066
        %v1068 = vcombine.high %v1060, 0
        %v1069 = vcombine.high %v1067, 0
        %v1072 = vunpack.c.l.s4 1983009808
        %v1073 = vunpack.c.0.s8 %v1072
        %v1074 = vlaneseq
        %v1075 = vshrl.u32 %v1074, 7
        %v1076 = vsub.s32 %v1073, %v1075
        %v1077 = vrot.slane %v1032, %v1076
        %v1080 = vunpack.c.l.s4 1983009808
        %v1081 = vunpack.c.0.s8 %v1080
        %v1082 = vlaneseq
        %v1083 = vshrl.u32 %v1082, 7
        %v1084 = vsub.s32 %v1081, %v1083
        %v1085 = vrot.slane %v1036, %v1084
        %v1086 = vcombine.low %v1077, %v1085
        %v1087 = vcombine.high %v1077, %v1085
        %v1089 = vunpack.c.l.s4 1934713408
        %v1090 = vunpack.c.0.s8 %v1089
        %v1091 = vlaneseq
        %v1092 = vshrl.u32 %v1091, 7
        %v1093 = vsub.s32 %v1090, %v1092
        %v1094 = vrot.slane %v1086, %v1093
        %v1096 = vunpack.c.l.s4 1934713408
        %v1097 = vunpack.c.0.s8 %v1096
        %v1098 = vlaneseq
        %v1099 = vshrl.u32 %v1098, 7
        %v1100 = vsub.s32 %v1097, %v1099
        %v1101 = vrot.slane %v1087, %v1100
        %v1102 = vcombine.high %v1094, 0
        %v1103 = vcombine.high %v1101, 0
        %v1106 = vpack.i.b16 %v1094, %v1060
        %v1108 = vshrl.u32 %v1060, 16
        %v1109 = vshrl.u32 %v1094, 16
        %v1110 = vpack.i.b16 %v1109, %v1108
        %v1114 = vpack.i.b16 %v1102, %v1068
        %v1116 = vshrl.u32 %v1068, 16
        %v1117 = vshrl.u32 %v1102, 16
        %v1118 = vpack.i.b16 %v1117, %v1116
        %v1122 = vpack.i.b16 %v1101, %v1067
        %v1124 = vshrl.u32 %v1067, 16
        %v1125 = vshrl.u32 %v1101, 16
        %v1126 = vpack.i.b16 %v1125, %v1124
        %v1130 = vpack.i.b16 %v1103, %v1069
        %v1132 = vshrl.u32 %v1069, 16
        %v1133 = vshrl.u32 %v1103, 16
        %v1134 = vpack.i.b16 %v1133, %v1132
        %v1136 = vcombine.low %v1106, %v1122
        %v1138 = vunpack.c.l.s4 1983009808
        %v1139 = vunpack.c.0.s8 %v1138
        %v1140 = vlaneseq
        %v1141 = vshrl.u32 %v1140, 7
        %v1142 = vsub.s32 %v1139, %v1141
        %v1143 = vrot.slane %v1136, %v1142
        %v1144 = vcombine.low %v1114, %v1130
        %v1146 = vunpack.c.l.s4 1983009808
        %v1147 = vunpack.c.0.s8 %v1146
        %v1148 = vlaneseq
        %v1149 = vshrl.u32 %v1148, 7
        %v1150 = vsub.s32 %v1147, %v1149
        %v1151 = vrot.slane %v1144, %v1150
        %v1152 = vcombine.low %v1143, %v1151
        %v1154 = vunpack.c.l.s4 1934713408
        %v1155 = vunpack.c.0.s8 %v1154
        %v1156 = vlaneseq
        %v1157 = vshrl.u32 %v1156, 7
        %v1158 = vsub.s32 %v1155, %v1157
        %v1159 = vrot.slane %v1152, %v1158
        %v1160 = vcombine.high %v1159, 0
        %v1161 = vcombine.low %v1110, %v1126
        %v1163 = vunpack.c.l.s4 1983009808
        %v1164 = vunpack.c.0.s8 %v1163
        %v1165 = vlaneseq
        %v1166 = vshrl.u32 %v1165, 7
        %v1167 = vsub.s32 %v1164, %v1166
        %v1168 = vrot.slane %v1161, %v1167
        %v1169 = vcombine.low %v1118, %v1134
        %v1171 = vunpack.c.l.s4 1983009808
        %v1172 = vunpack.c.0.s8 %v1171
        %v1173 = vlaneseq
        %v1174 = vshrl.u32 %v1173, 7
        %v1175 = vsub.s32 %v1172, %v1174
        %v1176 = vrot.slane %v1169, %v1175
        %v1177 = vcombine.low %v1168, %v1176
        %v1179 = vunpack.c.l.s4 1934713408
        %v1180 = vunpack.c.0.s8 %v1179
        %v1181 = vlaneseq
        %v1182 = vshrl.u32 %v1181, 7
        %v1183 = vsub.s32 %v1180, %v1182
        %v1184 = vrot.slane %v1177, %v1183
        %v1185 = vcombine.high %v1184, 0
        %v1188 = vpack.i.b16 %v1184, %v1159
        %v1189 = vshrl.u32 %v1159, 16
        %v1190 = vshrl.u32 %v1184, 16
        %v1191 = vpack.i.b16 %v1190, %v1189
        %v1194 = vpack.i.b16 %v1185, %v1160
        %v1195 = vshrl.u32 %v1160, 16
        %v1196 = vshrl.u32 %v1185, 16
        %v1197 = vpack.i.b16 %v1196, %v1195
        %v1198 = vpack.c.bf16 %v855, %v855
        %1200 = vrot.lane.b32.xlu0 %v1198, 120
        %v1201 = vpop.permute.xlu0 %1200
        %1202 = vrot.lane.b32.xlu0 %v1198, 112
        %v1203 = vpop.permute.xlu0 %1202
        %1204 = vrot.lane.b32.xlu0 %v1198, 104
        %v1205 = vpop.permute.xlu0 %1204
        %v1207 = vunpack.c.l.s4 1983009808
        %v1208 = vunpack.c.0.s8 %v1207
        %v1209 = vlaneseq
        %v1210 = vshrl.u32 %v1209, 7
        %v1211 = vsub.s32 %v1208, %v1210
        %v1212 = vrot.slane %v1198, %v1211
        %v1215 = vunpack.c.l.s4 1983009808
        %v1216 = vunpack.c.0.s8 %v1215
        %v1217 = vlaneseq
        %v1218 = vshrl.u32 %v1217, 7
        %v1219 = vsub.s32 %v1216, %v1218
        %v1220 = vrot.slane %v1203, %v1219
        %v1221 = vcombine.low %v1212, %v1220
        %v1222 = vcombine.high %v1212, %v1220
        %v1224 = vunpack.c.l.s4 1934713408
        %v1225 = vunpack.c.0.s8 %v1224
        %v1226 = vlaneseq
        %v1227 = vshrl.u32 %v1226, 7
        %v1228 = vsub.s32 %v1225, %v1227
        %v1229 = vrot.slane %v1221, %v1228
        %v1231 = vunpack.c.l.s4 1934713408
        %v1232 = vunpack.c.0.s8 %v1231
        %v1233 = vlaneseq
        %v1234 = vshrl.u32 %v1233, 7
        %v1235 = vsub.s32 %v1232, %v1234
        %v1236 = vrot.slane %v1222, %v1235
        %v1237 = vcombine.high %v1229, 0
        %v1238 = vcombine.high %v1236, 0
        %v1241 = vunpack.c.l.s4 1983009808
        %v1242 = vunpack.c.0.s8 %v1241
        %v1243 = vlaneseq
        %v1244 = vshrl.u32 %v1243, 7
        %v1245 = vsub.s32 %v1242, %v1244
        %v1246 = vrot.slane %v1201, %v1245
        %v1249 = vunpack.c.l.s4 1983009808
        %v1250 = vunpack.c.0.s8 %v1249
        %v1251 = vlaneseq
        %v1252 = vshrl.u32 %v1251, 7
        %v1253 = vsub.s32 %v1250, %v1252
        %v1254 = vrot.slane %v1205, %v1253
        %v1255 = vcombine.low %v1246, %v1254
        %v1256 = vcombine.high %v1246, %v1254
        %v1258 = vunpack.c.l.s4 1934713408
        %v1259 = vunpack.c.0.s8 %v1258
        %v1260 = vlaneseq
        %v1261 = vshrl.u32 %v1260, 7
        %v1262 = vsub.s32 %v1259, %v1261
        %v1263 = vrot.slane %v1255, %v1262
        %v1265 = vunpack.c.l.s4 1934713408
        %v1266 = vunpack.c.0.s8 %v1265
        %v1267 = vlaneseq
        %v1268 = vshrl.u32 %v1267, 7
        %v1269 = vsub.s32 %v1266, %v1268
        %v1270 = vrot.slane %v1256, %v1269
        %v1271 = vcombine.high %v1263, 0
        %v1272 = vcombine.high %v1270, 0
        %v1275 = vpack.i.b16 %v1263, %v1229
        %v1277 = vshrl.u32 %v1229, 16
        %v1278 = vshrl.u32 %v1263, 16
        %v1279 = vpack.i.b16 %v1278, %v1277
        %v1283 = vpack.i.b16 %v1271, %v1237
        %v1285 = vshrl.u32 %v1237, 16
        %v1286 = vshrl.u32 %v1271, 16
        %v1287 = vpack.i.b16 %v1286, %v1285
        %v1291 = vpack.i.b16 %v1270, %v1236
        %v1293 = vshrl.u32 %v1236, 16
        %v1294 = vshrl.u32 %v1270, 16
        %v1295 = vpack.i.b16 %v1294, %v1293
        %v1299 = vpack.i.b16 %v1272, %v1238
        %v1301 = vshrl.u32 %v1238, 16
        %v1302 = vshrl.u32 %v1272, 16
        %v1303 = vpack.i.b16 %v1302, %v1301
        %v1305 = vcombine.low %v1275, %v1291
        %v1307 = vunpack.c.l.s4 1983009808
        %v1308 = vunpack.c.0.s8 %v1307
        %v1309 = vlaneseq
        %v1310 = vshrl.u32 %v1309, 7
        %v1311 = vsub.s32 %v1308, %v1310
        %v1312 = vrot.slane %v1305, %v1311
        %v1313 = vcombine.low %v1283, %v1299
        %v1315 = vunpack.c.l.s4 1983009808
        %v1316 = vunpack.c.0.s8 %v1315
        %v1317 = vlaneseq
        %v1318 = vshrl.u32 %v1317, 7
        %v1319 = vsub.s32 %v1316, %v1318
        %v1320 = vrot.slane %v1313, %v1319
        %v1321 = vcombine.low %v1312, %v1320
        %v1323 = vunpack.c.l.s4 1934713408
        %v1324 = vunpack.c.0.s8 %v1323
        %v1325 = vlaneseq
        %v1326 = vshrl.u32 %v1325, 7
        %v1327 = vsub.s32 %v1324, %v1326
        %v1328 = vrot.slane %v1321, %v1327
        %v1329 = vcombine.high %v1328, 0
        %v1330 = vcombine.low %v1279, %v1295
        %v1332 = vunpack.c.l.s4 1983009808
        %v1333 = vunpack.c.0.s8 %v1332
        %v1334 = vlaneseq
        %v1335 = vshrl.u32 %v1334, 7
        %v1336 = vsub.s32 %v1333, %v1335
        %v1337 = vrot.slane %v1330, %v1336
        %v1338 = vcombine.low %v1287, %v1303
        %v1340 = vunpack.c.l.s4 1983009808
        %v1341 = vunpack.c.0.s8 %v1340
        %v1342 = vlaneseq
        %v1343 = vshrl.u32 %v1342, 7
        %v1344 = vsub.s32 %v1341, %v1343
        %v1345 = vrot.slane %v1338, %v1344
        %v1346 = vcombine.low %v1337, %v1345
        %v1348 = vunpack.c.l.s4 1934713408
        %v1349 = vunpack.c.0.s8 %v1348
        %v1350 = vlaneseq
        %v1351 = vshrl.u32 %v1350, 7
        %v1352 = vsub.s32 %v1349, %v1351
        %v1353 = vrot.slane %v1346, %v1352
        %v1354 = vcombine.high %v1353, 0
        %v1357 = vpack.i.b16 %v1353, %v1328
        %v1358 = vshrl.u32 %v1328, 16
        %v1359 = vshrl.u32 %v1353, 16
        %v1360 = vpack.i.b16 %v1359, %v1358
        %v1363 = vpack.i.b16 %v1354, %v1329
        %v1364 = vshrl.u32 %v1329, 16
        %v1365 = vshrl.u32 %v1354, 16
        %v1366 = vpack.i.b16 %v1365, %v1364
        %vm1367 = vcmask 64512
        %v1369 = vsel %vm1367, %v1019, 0
        %v1372 = vsel %vm1367, %v1188, 0
        %1374 = vmatprep.subr.bf16.mxu0 0
        %1375 = vmatpush1.bf16.xpose.msra.mxu0 %v1372
        %1376 = vmatprep.subr.bf16.mxu0 0
        %1377 = vmatpush1.bf16.xpose.msra.mxu0 0
        %1378 = vmatprep.subr.bf16.mxu0 0
        %1379 = vmatpush1.bf16.xpose.msra.mxu0 0
        %1380 = vmatprep.subr.bf16.mxu0 0
        %1381 = vmatpush1.bf16.xpose.msra.mxu0 0
        %1382 = vmatprep.subr.bf16.mxu0 0
        %1383 = vmatpush1.bf16.xpose.msra.mxu0 0
        %1384 = vmatprep.subr.bf16.mxu0 0
        %1385 = vmatpush1.bf16.xpose.msra.mxu0 0
        %1386 = vmatprep.subr.bf16.mxu0 0
        %1387 = vmatpush1.bf16.xpose.msra.mxu0 0
        %1388 = vmatprep.subr.bf16.mxu0 0
        %1389 = vmatpush1.bf16.xpose.msra.mxu0 0
        %1390 = vmatprep.subr.bf16.mxu0 0
        %1391 = vmatpush1.bf16.xpose.msra.mxu0 0
        %1392 = vmatprep.subr.bf16.mxu0 0
        %1393 = vmatpush1.bf16.xpose.msra.mxu0 0
        %1394 = vmatprep.subr.bf16.mxu0 0
        %1395 = vmatpush1.bf16.xpose.msra.mxu0 0
        %1396 = vmatprep.subr.bf16.mxu0 0
        %1397 = vmatpush1.bf16.xpose.msra.mxu0 0
        %1398 = vmatprep.subr.bf16.mxu0 0
        %1399 = vmatpush1.bf16.xpose.msra.mxu0 0
        %1400 = vmatprep.subr.bf16.mxu0 0
        %1401 = vmatpush1.bf16.xpose.msra.mxu0 0
        %1402 = vmatprep.subr.bf16.mxu0 0
        %1403 = vmatpush1.bf16.xpose.msra.mxu0 0
        %1404 = vmatprep.subr.bf16.mxu0 0
        %1405 = vmatpush1.bf16.xpose.msra.mxu0 0
        %1406 = vmatprep.mubr.bf16.mxu0 0
        %1407 = vmatmul.mubr.bf16.gmra.mrb[0].mxu0 %v1369
        %v1408 = vpop.f32.mrb[0].mxu0
        %v1409 = vadd.f32 0.0, %v1408
        %v1410 = vpop.f32.mrb[0].mxu0
        %v1411 = vpop.f32.mrb[0].mxu0
        %v1412 = vpop.f32.mrb[0].mxu0
        %1413 = vdwg.mxu0
        %v1415 = vsel %vm1367, %v1022, 0
        %v1418 = vsel %vm1367, %v1191, 0
        %1420 = vmatprep.subr.bf16.mxu0 0
        %1421 = vmatpush1.bf16.xpose.msra.mxu0 %v1418
        %1422 = vmatprep.subr.bf16.mxu0 0
        %1423 = vmatpush1.bf16.xpose.msra.mxu0 0
        %1424 = vmatprep.subr.bf16.mxu0 0
        %1425 = vmatpush1.bf16.xpose.msra.mxu0 0
        %1426 = vmatprep.subr.bf16.mxu0 0
        %1427 = vmatpush1.bf16.xpose.msra.mxu0 0
        %1428 = vmatprep.subr.bf16.mxu0 0
        %1429 = vmatpush1.bf16.xpose.msra.mxu0 0
        %1430 = vmatprep.subr.bf16.mxu0 0
        %1431 = vmatpush1.bf16.xpose.msra.mxu0 0
        %1432 = vmatprep.subr.bf16.mxu0 0
        %1433 = vmatpush1.bf16.xpose.msra.mxu0 0
        %1434 = vmatprep.subr.bf16.mxu0 0
        %1435 = vmatpush1.bf16.xpose.msra.mxu0 0
        %1436 = vmatprep.subr.bf16.mxu0 0
        %1437 = vmatpush1.bf16.xpose.msra.mxu0 0
        %1438 = vmatprep.subr.bf16.mxu0 0
        %1439 = vmatpush1.bf16.xpose.msra.mxu0 0
        %1440 = vmatprep.subr.bf16.mxu0 0
        %1441 = vmatpush1.bf16.xpose.msra.mxu0 0
        %1442 = vmatprep.subr.bf16.mxu0 0
        %1443 = vmatpush1.bf16.xpose.msra.mxu0 0
        %1444 = vmatprep.subr.bf16.mxu0 0
        %1445 = vmatpush1.bf16.xpose.msra.mxu0 0
        %1446 = vmatprep.subr.bf16.mxu0 0
        %1447 = vmatpush1.bf16.xpose.msra.mxu0 0
        %1448 = vmatprep.subr.bf16.mxu0 0
        %1449 = vmatpush1.bf16.xpose.msra.mxu0 0
        %1450 = vmatprep.subr.bf16.mxu0 0
        %1451 = vmatpush1.bf16.xpose.msra.mxu0 0
        %1452 = vmatprep.mubr.bf16.mxu0 0
        %1453 = vmatmul.mubr.bf16.gmra.mrb[0].mxu0 %v1415
        %v1454 = vpop.f32.mrb[0].mxu0
        %v1455 = vadd.f32 0.0, %v1454
        %v1456 = vpop.f32.mrb[0].mxu0
        %v1457 = vpop.f32.mrb[0].mxu0
        %v1458 = vpop.f32.mrb[0].mxu0
        %1459 = vdwg.mxu0
        %v1461 = vsel %vm1367, %v1025, 0
        %v1464 = vsel %vm1367, %v1194, 0
        %1466 = vmatprep.subr.bf16.mxu0 0
        %1467 = vmatpush1.bf16.xpose.msra.mxu0 %v1464
        %1468 = vmatprep.subr.bf16.mxu0 0
        %1469 = vmatpush1.bf16.xpose.msra.mxu0 0
        %1470 = vmatprep.subr.bf16.mxu0 0
        %1471 = vmatpush1.bf16.xpose.msra.mxu0 0
        %1472 = vmatprep.subr.bf16.mxu0 0
        %1473 = vmatpush1.bf16.xpose.msra.mxu0 0
        %1474 = vmatprep.subr.bf16.mxu0 0
        %1475 = vmatpush1.bf16.xpose.msra.mxu0 0
        %1476 = vmatprep.subr.bf16.mxu0 0
        %1477 = vmatpush1.bf16.xpose.msra.mxu0 0
        %1478 = vmatprep.subr.bf16.mxu0 0
        %1479 = vmatpush1.bf16.xpose.msra.mxu0 0
        %1480 = vmatprep.subr.bf16.mxu0 0
        %1481 = vmatpush1.bf16.xpose.msra.mxu0 0
        %1482 = vmatprep.subr.bf16.mxu0 0
        %1483 = vmatpush1.bf16.xpose.msra.mxu0 0
        %1484 = vmatprep.subr.bf16.mxu0 0
        %1485 = vmatpush1.bf16.xpose.msra.mxu0 0
        %1486 = vmatprep.subr.bf16.mxu0 0
        %1487 = vmatpush1.bf16.xpose.msra.mxu0 0
        %1488 = vmatprep.subr.bf16.mxu0 0
        %1489 = vmatpush1.bf16.xpose.msra.mxu0 0
        %1490 = vmatprep.subr.bf16.mxu0 0
        %1491 = vmatpush1.bf16.xpose.msra.mxu0 0
        %1492 = vmatprep.subr.bf16.mxu0 0
        %1493 = vmatpush1.bf16.xpose.msra.mxu0 0
        %1494 = vmatprep.subr.bf16.mxu0 0
        %1495 = vmatpush1.bf16.xpose.msra.mxu0 0
        %1496 = vmatprep.subr.bf16.mxu0 0
        %1497 = vmatpush1.bf16.xpose.msra.mxu0 0
        %1498 = vmatprep.mubr.bf16.mxu0 0
        %1499 = vmatmul.mubr.bf16.gmra.mrb[0].mxu0 %v1461
        %v1500 = vpop.f32.mrb[0].mxu0
        %v1501 = vadd.f32 0.0, %v1500
        %v1502 = vpop.f32.mrb[0].mxu0
        %v1503 = vpop.f32.mrb[0].mxu0
        %v1504 = vpop.f32.mrb[0].mxu0
        %1505 = vdwg.mxu0
        %v1507 = vsel %vm1367, %v1028, 0
        %v1510 = vsel %vm1367, %v1197, 0
        %1512 = vmatprep.subr.bf16.mxu0 0
        %1513 = vmatpush1.bf16.xpose.msra.mxu0 %v1510
        %1514 = vmatprep.subr.bf16.mxu0 0
        %1515 = vmatpush1.bf16.xpose.msra.mxu0 0
        %1516 = vmatprep.subr.bf16.mxu0 0
        %1517 = vmatpush1.bf16.xpose.msra.mxu0 0
        %1518 = vmatprep.subr.bf16.mxu0 0
        %1519 = vmatpush1.bf16.xpose.msra.mxu0 0
        %1520 = vmatprep.subr.bf16.mxu0 0
        %1521 = vmatpush1.bf16.xpose.msra.mxu0 0
        %1522 = vmatprep.subr.bf16.mxu0 0
        %1523 = vmatpush1.bf16.xpose.msra.mxu0 0
        %1524 = vmatprep.subr.bf16.mxu0 0
        %1525 = vmatpush1.bf16.xpose.msra.mxu0 0
        %1526 = vmatprep.subr.bf16.mxu0 0
        %1527 = vmatpush1.bf16.xpose.msra.mxu0 0
        %1528 = vmatprep.subr.bf16.mxu0 0
        %1529 = vmatpush1.bf16.xpose.msra.mxu0 0
        %1530 = vmatprep.subr.bf16.mxu0 0
        %1531 = vmatpush1.bf16.xpose.msra.mxu0 0
        %1532 = vmatprep.subr.bf16.mxu0 0
        %1533 = vmatpush1.bf16.xpose.msra.mxu0 0
        %1534 = vmatprep.subr.bf16.mxu0 0
        %1535 = vmatpush1.bf16.xpose.msra.mxu0 0
        %1536 = vmatprep.subr.bf16.mxu0 0
        %1537 = vmatpush1.bf16.xpose.msra.mxu0 0
        %1538 = vmatprep.subr.bf16.mxu0 0
        %1539 = vmatpush1.bf16.xpose.msra.mxu0 0
        %1540 = vmatprep.subr.bf16.mxu0 0
        %1541 = vmatpush1.bf16.xpose.msra.mxu0 0
        %1542 = vmatprep.subr.bf16.mxu0 0
        %1543 = vmatpush1.bf16.xpose.msra.mxu0 0
        %1544 = vmatprep.mubr.bf16.mxu0 0
        %1545 = vmatmul.mubr.bf16.gmra.mrb[0].mxu0 %v1507
        %v1546 = vpop.f32.mrb[0].mxu0
        %v1547 = vadd.f32 0.0, %v1546
        %v1548 = vpop.f32.mrb[0].mxu0
        %v1549 = vpop.f32.mrb[0].mxu0
        %v1550 = vpop.f32.mrb[0].mxu0
        %1551 = vdwg.mxu0
        %v1552 = vsel %vm626, 1, 0
        %v1553 = vlaneseq
        %v1554 = vshrl.u32 %v1553, 7
        %v1555 = vsub.s32 0, %v1554
        %v1556 = vrot.slane %v1552, %v1555
        %vm1557 = vcmp.eq.s32.totalorder %v1556, 1
        %v1558 = vsel %vm1557, -1e+09, %v1409
        %v1559 = vsel %vm1557, -1e+09, %v1455
        %v1560 = vsel %vm1557, -1e+09, %v1501
        %v1561 = vsel %vm1557, -1e+09, %v1547
        %v1562 = vsel %vm1367, %v1558, -inf
        %1563 = vmax.xlane.f32.xlu0 %v1562
        %v1564 = vpop.xlane.xlu0 %1563
        %v1565 = vsel %vm1367, %v1559, -inf
        %1566 = vmax.xlane.f32.xlu0 %v1565
        %v1567 = vpop.xlane.xlu0 %1566
        %v1568 = vsel %vm1367, %v1560, -inf
        %1569 = vmax.xlane.f32.xlu0 %v1568
        %v1570 = vpop.xlane.xlu0 %1569
        %v1571 = vsel %vm1367, %v1561, -inf
        %1572 = vmax.xlane.f32.xlu0 %v1571
        %v1573 = vpop.xlane.xlu0 %1572
        %v1574 = vsub.f32 %v1558, %v1564
        %v1575 = vsub.f32 %v1559, %v1567
        %v1576 = vsub.f32 %v1560, %v1570
        %v1577 = vsub.f32 %v1561, %v1573
        %v1578 = vmul.f32 %v1574, 1.442695
        %v1579 = vpow.pop %v1578
        %v1580 = vmul.f32 %v1575, 1.442695
        %v1581 = vpow.pop %v1580
        %v1582 = vmul.f32 %v1576, 1.442695
        %v1583 = vpow.pop %v1582
        %v1584 = vmul.f32 %v1577, 1.442695
        %v1585 = vpow.pop %v1584
        %v1586 = vsel %vm1367, %v1579, 0.0
        %1587 = vadd.xlane.f32.xlu0 %v1586
        %v1588 = vpop.xlane.xlu0 %1587
        %v1589 = vsel %vm1367, %v1581, 0.0
        %1590 = vadd.xlane.f32.xlu0 %v1589
        %v1591 = vpop.xlane.xlu0 %1590
        %v1592 = vsel %vm1367, %v1583, 0.0
        %1593 = vadd.xlane.f32.xlu0 %v1592
        %v1594 = vpop.xlane.xlu0 %1593
        %v1595 = vsel %vm1367, %v1585, 0.0
        %1596 = vadd.xlane.f32.xlu0 %v1595
        %v1597 = vpop.xlane.xlu0 %1596
        %v1598 = vrcp.pop %v1588
        %v1599 = vrcp.pop %v1591
        %v1600 = vrcp.pop %v1594
        %v1601 = vrcp.pop %v1597
        %v1602 = vmul.f32 %v1579, %v1598
        %v1603 = vmul.f32 %v1581, %v1599
        %v1604 = vmul.f32 %v1583, %v1600
        %v1605 = vmul.f32 %v1585, %v1601
        %1606 = vst.msk [vmem:[%s615] sm:$0xff] %vm1367, %v1602
        %1607 = vst.msk [vmem:[%s615 + $0x8] sm:$0xff] %vm1367, %v1603
        %1608 = vst.msk [vmem:[%s615 + $0x10] sm:$0xff] %vm1367, %v1604
        %1609 = vst.msk [vmem:[%s615 + $0x18] sm:$0xff] %vm1367, %v1605
        %v1610 = vpack.c.bf16 %v1602, %v1602
        %v1611 = vpack.c.bf16 %v1603, %v1603
        %v1612 = vpack.c.bf16 %v1604, %v1604
        %v1613 = vpack.c.bf16 %v1605, %v1605
        %v1615 = vsel %vm1367, %v1610, 0
        %vm1617 = vcmask 1043456
        %v1619 = vsel %vm1617, %v1357, 0
        %1621 = vmatprep.subr.bf16.mxu0 0
        %1622 = vmatpush1.bf16.msra.mxu0 %v1619
        %1623 = vmatprep.subr.bf16.mxu0 0
        %1624 = vmatpush1.bf16.msra.mxu0 0
        %1625 = vmatprep.subr.bf16.mxu0 0
        %1626 = vmatpush1.bf16.msra.mxu0 0
        %1627 = vmatprep.subr.bf16.mxu0 0
        %1628 = vmatpush1.bf16.msra.mxu0 0
        %1629 = vmatprep.subr.bf16.mxu0 0
        %1630 = vmatpush1.bf16.msra.mxu0 0
        %1631 = vmatprep.subr.bf16.mxu0 0
        %1632 = vmatpush1.bf16.msra.mxu0 0
        %1633 = vmatprep.subr.bf16.mxu0 0
        %1634 = vmatpush1.bf16.msra.mxu0 0
        %1635 = vmatprep.subr.bf16.mxu0 0
        %1636 = vmatpush1.bf16.msra.mxu0 0
        %1637 = vmatprep.subr.bf16.mxu0 0
        %1638 = vmatpush1.bf16.msra.mxu0 0
        %1639 = vmatprep.subr.bf16.mxu0 0
        %1640 = vmatpush1.bf16.msra.mxu0 0
        %1641 = vmatprep.subr.bf16.mxu0 0
        %1642 = vmatpush1.bf16.msra.mxu0 0
        %1643 = vmatprep.subr.bf16.mxu0 0
        %1644 = vmatpush1.bf16.msra.mxu0 0
        %1645 = vmatprep.subr.bf16.mxu0 0
        %1646 = vmatpush1.bf16.msra.mxu0 0
        %1647 = vmatprep.subr.bf16.mxu0 0
        %1648 = vmatpush1.bf16.msra.mxu0 0
        %1649 = vmatprep.subr.bf16.mxu0 0
        %1650 = vmatpush1.bf16.msra.mxu0 0
        %1651 = vmatprep.subr.bf16.mxu0 0
        %1652 = vmatpush1.bf16.msra.mxu0 0
        %1653 = vmatprep.mubr.bf16.mxu0 0
        %1654 = vmatmul.mubr.bf16.gmra.mrb[0].mxu0 %v1615
        %v1655 = vpop.f32.mrb[0].mxu0
        %v1656 = vadd.f32 0.0, %v1655
        %v1657 = vpop.f32.mrb[0].mxu0
        %v1658 = vpop.f32.mrb[0].mxu0
        %v1659 = vpop.f32.mrb[0].mxu0
        %1660 = vdwg.mxu0
        %v1662 = vsel %vm1367, %v1611, 0
        %v1665 = vsel %vm1617, %v1360, 0
        %1667 = vmatprep.subr.bf16.mxu0 0
        %1668 = vmatpush1.bf16.msra.mxu0 %v1665
        %1669 = vmatprep.subr.bf16.mxu0 0
        %1670 = vmatpush1.bf16.msra.mxu0 0
        %1671 = vmatprep.subr.bf16.mxu0 0
        %1672 = vmatpush1.bf16.msra.mxu0 0
        %1673 = vmatprep.subr.bf16.mxu0 0
        %1674 = vmatpush1.bf16.msra.mxu0 0
        %1675 = vmatprep.subr.bf16.mxu0 0
        %1676 = vmatpush1.bf16.msra.mxu0 0
        %1677 = vmatprep.subr.bf16.mxu0 0
        %1678 = vmatpush1.bf16.msra.mxu0 0
        %1679 = vmatprep.subr.bf16.mxu0 0
        %1680 = vmatpush1.bf16.msra.mxu0 0
        %1681 = vmatprep.subr.bf16.mxu0 0
        %1682 = vmatpush1.bf16.msra.mxu0 0
        %1683 = vmatprep.subr.bf16.mxu0 0
        %1684 = vmatpush1.bf16.msra.mxu0 0
        %1685 = vmatprep.subr.bf16.mxu0 0
        %1686 = vmatpush1.bf16.msra.mxu0 0
        %1687 = vmatprep.subr.bf16.mxu0 0
        %1688 = vmatpush1.bf16.msra.mxu0 0
        %1689 = vmatprep.subr.bf16.mxu0 0
        %1690 = vmatpush1.bf16.msra.mxu0 0
        %1691 = vmatprep.subr.bf16.mxu0 0
        %1692 = vmatpush1.bf16.msra.mxu0 0
        %1693 = vmatprep.subr.bf16.mxu0 0
        %1694 = vmatpush1.bf16.msra.mxu0 0
        %1695 = vmatprep.subr.bf16.mxu0 0
        %1696 = vmatpush1.bf16.msra.mxu0 0
        %1697 = vmatprep.subr.bf16.mxu0 0
        %1698 = vmatpush1.bf16.msra.mxu0 0
        %1699 = vmatprep.mubr.bf16.mxu0 0
        %1700 = vmatmul.mubr.bf16.gmra.mrb[0].mxu0 %v1662
        %v1701 = vpop.f32.mrb[0].mxu0
        %v1702 = vadd.f32 0.0, %v1701
        %v1703 = vpop.f32.mrb[0].mxu0
        %v1704 = vpop.f32.mrb[0].mxu0
        %v1705 = vpop.f32.mrb[0].mxu0
        %1706 = vdwg.mxu0
        %v1708 = vsel %vm1367, %v1612, 0
        %v1711 = vsel %vm1617, %v1363, 0
        %1713 = vmatprep.subr.bf16.mxu0 0
        %1714 = vmatpush1.bf16.msra.mxu0 %v1711
        %1715 = vmatprep.subr.bf16.mxu0 0
        %1716 = vmatpush1.bf16.msra.mxu0 0
        %1717 = vmatprep.subr.bf16.mxu0 0
        %1718 = vmatpush1.bf16.msra.mxu0 0
        %1719 = vmatprep.subr.bf16.mxu0 0
        %1720 = vmatpush1.bf16.msra.mxu0 0
        %1721 = vmatprep.subr.bf16.mxu0 0
        %1722 = vmatpush1.bf16.msra.mxu0 0
        %1723 = vmatprep.subr.bf16.mxu0 0
        %1724 = vmatpush1.bf16.msra.mxu0 0
        %1725 = vmatprep.subr.bf16.mxu0 0
        %1726 = vmatpush1.bf16.msra.mxu0 0
        %1727 = vmatprep.subr.bf16.mxu0 0
        %1728 = vmatpush1.bf16.msra.mxu0 0
        %1729 = vmatprep.subr.bf16.mxu0 0
        %1730 = vmatpush1.bf16.msra.mxu0 0
        %1731 = vmatprep.subr.bf16.mxu0 0
        %1732 = vmatpush1.bf16.msra.mxu0 0
        %1733 = vmatprep.subr.bf16.mxu0 0
        %1734 = vmatpush1.bf16.msra.mxu0 0
        %1735 = vmatprep.subr.bf16.mxu0 0
        %1736 = vmatpush1.bf16.msra.mxu0 0
        %1737 = vmatprep.subr.bf16.mxu0 0
        %1738 = vmatpush1.bf16.msra.mxu0 0
        %1739 = vmatprep.subr.bf16.mxu0 0
        %1740 = vmatpush1.bf16.msra.mxu0 0
        %1741 = vmatprep.subr.bf16.mxu0 0
        %1742 = vmatpush1.bf16.msra.mxu0 0
        %1743 = vmatprep.subr.bf16.mxu0 0
        %1744 = vmatpush1.bf16.msra.mxu0 0
        %1745 = vmatprep.mubr.bf16.mxu0 0
        %1746 = vmatmul.mubr.bf16.gmra.mrb[0].mxu0 %v1708
        %v1747 = vpop.f32.mrb[0].mxu0
        %v1748 = vadd.f32 0.0, %v1747
        %v1749 = vpop.f32.mrb[0].mxu0
        %v1750 = vpop.f32.mrb[0].mxu0
        %v1751 = vpop.f32.mrb[0].mxu0
        %1752 = vdwg.mxu0
        %v1754 = vsel %vm1367, %v1613, 0
        %v1757 = vsel %vm1617, %v1366, 0
        %1759 = vmatprep.subr.bf16.mxu0 0
        %1760 = vmatpush1.bf16.msra.mxu0 %v1757
        %1761 = vmatprep.subr.bf16.mxu0 0
        %1762 = vmatpush1.bf16.msra.mxu0 0
        %1763 = vmatprep.subr.bf16.mxu0 0
        %1764 = vmatpush1.bf16.msra.mxu0 0
        %1765 = vmatprep.subr.bf16.mxu0 0
        %1766 = vmatpush1.bf16.msra.mxu0 0
        %1767 = vmatprep.subr.bf16.mxu0 0
        %1768 = vmatpush1.bf16.msra.mxu0 0
        %1769 = vmatprep.subr.bf16.mxu0 0
        %1770 = vmatpush1.bf16.msra.mxu0 0
        %1771 = vmatprep.subr.bf16.mxu0 0
        %1772 = vmatpush1.bf16.msra.mxu0 0
        %1773 = vmatprep.subr.bf16.mxu0 0
        %1774 = vmatpush1.bf16.msra.mxu0 0
        %1775 = vmatprep.subr.bf16.mxu0 0
        %1776 = vmatpush1.bf16.msra.mxu0 0
        %1777 = vmatprep.subr.bf16.mxu0 0
        %1778 = vmatpush1.bf16.msra.mxu0 0
        %1779 = vmatprep.subr.bf16.mxu0 0
        %1780 = vmatpush1.bf16.msra.mxu0 0
        %1781 = vmatprep.subr.bf16.mxu0 0
        %1782 = vmatpush1.bf16.msra.mxu0 0
        %1783 = vmatprep.subr.bf16.mxu0 0
        %1784 = vmatpush1.bf16.msra.mxu0 0
        %1785 = vmatprep.subr.bf16.mxu0 0
        %1786 = vmatpush1.bf16.msra.mxu0 0
        %1787 = vmatprep.subr.bf16.mxu0 0
        %1788 = vmatpush1.bf16.msra.mxu0 0
        %1789 = vmatprep.subr.bf16.mxu0 0
        %1790 = vmatpush1.bf16.msra.mxu0 0
        %1791 = vmatprep.mubr.bf16.mxu0 0
        %1792 = vmatmul.mubr.bf16.gmra.mrb[0].mxu0 %v1754
        %v1793 = vpop.f32.mrb[0].mxu0
        %v1794 = vadd.f32 0.0, %v1793
        %v1795 = vpop.f32.mrb[0].mxu0
        %v1796 = vpop.f32.mrb[0].mxu0
        %v1797 = vpop.f32.mrb[0].mxu0
        %1798 = vdwg.mxu0
        %v1799 = vpack.c.bf16 %v1656, %v1656
        %v1800 = vpack.c.bf16 %v1702, %v1702
        %v1801 = vpack.c.bf16 %v1748, %v1748
        %v1802 = vpack.c.bf16 %v1794, %v1794
        %v1803 = vld [vmem:[%s10] sm:$0xf]
        %v1804 = vld [vmem:[%s10 + $0x4] sm:$0xf]
        %v1805 = vld [vmem:[%s10 + $0x8] sm:$0xf]
        %v1806 = vld [vmem:[%s10 + $0xc] sm:$0xf]
        %v1808 = vsel %vm1367, %v1799, 0
        %v1811 = vsel %vm1617, %v1803, 0
        %1813 = vmatprep.subr.bf16.mxu0 0
        %1814 = vmatpush1.bf16.msra.mxu0 %v1811
        %1815 = vmatprep.subr.bf16.mxu0 0
        %1816 = vmatpush1.bf16.msra.mxu0 0
        %1817 = vmatprep.subr.bf16.mxu0 0
        %1818 = vmatpush1.bf16.msra.mxu0 0
        %1819 = vmatprep.subr.bf16.mxu0 0
        %1820 = vmatpush1.bf16.msra.mxu0 0
        %1821 = vmatprep.subr.bf16.mxu0 0
        %1822 = vmatpush1.bf16.msra.mxu0 0
        %1823 = vmatprep.subr.bf16.mxu0 0
        %1824 = vmatpush1.bf16.msra.mxu0 0
        %1825 = vmatprep.subr.bf16.mxu0 0
        %1826 = vmatpush1.bf16.msra.mxu0 0
        %1827 = vmatprep.subr.bf16.mxu0 0
        %1828 = vmatpush1.bf16.msra.mxu0 0
        %1829 = vmatprep.subr.bf16.mxu0 0
        %1830 = vmatpush1.bf16.msra.mxu0 0
        %1831 = vmatprep.subr.bf16.mxu0 0
        %1832 = vmatpush1.bf16.msra.mxu0 0
        %1833 = vmatprep.subr.bf16.mxu0 0
        %1834 = vmatpush1.bf16.msra.mxu0 0
        %1835 = vmatprep.subr.bf16.mxu0 0
        %1836 = vmatpush1.bf16.msra.mxu0 0
        %1837 = vmatprep.subr.bf16.mxu0 0
        %1838 = vmatpush1.bf16.msra.mxu0 0
        %1839 = vmatprep.subr.bf16.mxu0 0
        %1840 = vmatpush1.bf16.msra.mxu0 0
        %1841 = vmatprep.subr.bf16.mxu0 0
        %1842 = vmatpush1.bf16.msra.mxu0 0
        %1843 = vmatprep.subr.bf16.mxu0 0
        %1844 = vmatpush1.bf16.msra.mxu0 0
        %1845 = vmatprep.mubr.bf16.mxu0 0
        %1846 = vmatmul.mubr.bf16.gmra.mrb[0].mxu0 %v1808
        %v1847 = vpop.f32.mrb[0].mxu0
        %v1848 = vadd.f32 0.0, %v1847
        %v1849 = vpop.f32.mrb[0].mxu0
        %v1850 = vpop.f32.mrb[0].mxu0
        %v1851 = vpop.f32.mrb[0].mxu0
        %1852 = vdwg.mxu0
        %v1854 = vsel %vm1367, %v1800, 0
        %v1857 = vsel %vm1617, %v1804, 0
        %1859 = vmatprep.subr.bf16.mxu0 0
        %1860 = vmatpush1.bf16.msra.mxu0 %v1857
        %1861 = vmatprep.subr.bf16.mxu0 0
        %1862 = vmatpush1.bf16.msra.mxu0 0
        %1863 = vmatprep.subr.bf16.mxu0 0
        %1864 = vmatpush1.bf16.msra.mxu0 0
        %1865 = vmatprep.subr.bf16.mxu0 0
        %1866 = vmatpush1.bf16.msra.mxu0 0
        %1867 = vmatprep.subr.bf16.mxu0 0
        %1868 = vmatpush1.bf16.msra.mxu0 0
        %1869 = vmatprep.subr.bf16.mxu0 0
        %1870 = vmatpush1.bf16.msra.mxu0 0
        %1871 = vmatprep.subr.bf16.mxu0 0
        %1872 = vmatpush1.bf16.msra.mxu0 0
        %1873 = vmatprep.subr.bf16.mxu0 0
        %1874 = vmatpush1.bf16.msra.mxu0 0
        %1875 = vmatprep.subr.bf16.mxu0 0
        %1876 = vmatpush1.bf16.msra.mxu0 0
        %1877 = vmatprep.subr.bf16.mxu0 0
        %1878 = vmatpush1.bf16.msra.mxu0 0
        %1879 = vmatprep.subr.bf16.mxu0 0
        %1880 = vmatpush1.bf16.msra.mxu0 0
        %1881 = vmatprep.subr.bf16.mxu0 0
        %1882 = vmatpush1.bf16.msra.mxu0 0
        %1883 = vmatprep.subr.bf16.mxu0 0
        %1884 = vmatpush1.bf16.msra.mxu0 0
        %1885 = vmatprep.subr.bf16.mxu0 0
        %1886 = vmatpush1.bf16.msra.mxu0 0
        %1887 = vmatprep.subr.bf16.mxu0 0
        %1888 = vmatpush1.bf16.msra.mxu0 0
        %1889 = vmatprep.subr.bf16.mxu0 0
        %1890 = vmatpush1.bf16.msra.mxu0 0
        %1891 = vmatprep.mubr.bf16.mxu0 0
        %1892 = vmatmul.mubr.bf16.gmra.mrb[0].mxu0 %v1854
        %v1893 = vpop.f32.mrb[0].mxu0
        %v1894 = vadd.f32 0.0, %v1893
        %v1895 = vpop.f32.mrb[0].mxu0
        %v1896 = vpop.f32.mrb[0].mxu0
        %v1897 = vpop.f32.mrb[0].mxu0
        %1898 = vdwg.mxu0
        %v1900 = vsel %vm1367, %v1801, 0
        %v1903 = vsel %vm1617, %v1805, 0
        %1905 = vmatprep.subr.bf16.mxu0 0
        %1906 = vmatpush1.bf16.msra.mxu0 %v1903
        %1907 = vmatprep.subr.bf16.mxu0 0
        %1908 = vmatpush1.bf16.msra.mxu0 0
        %1909 = vmatprep.subr.bf16.mxu0 0
        %1910 = vmatpush1.bf16.msra.mxu0 0
        %1911 = vmatprep.subr.bf16.mxu0 0
        %1912 = vmatpush1.bf16.msra.mxu0 0
        %1913 = vmatprep.subr.bf16.mxu0 0
        %1914 = vmatpush1.bf16.msra.mxu0 0
        %1915 = vmatprep.subr.bf16.mxu0 0
        %1916 = vmatpush1.bf16.msra.mxu0 0
        %1917 = vmatprep.subr.bf16.mxu0 0
        %1918 = vmatpush1.bf16.msra.mxu0 0
        %1919 = vmatprep.subr.bf16.mxu0 0
        %1920 = vmatpush1.bf16.msra.mxu0 0
        %1921 = vmatprep.subr.bf16.mxu0 0
        %1922 = vmatpush1.bf16.msra.mxu0 0
        %1923 = vmatprep.subr.bf16.mxu0 0
        %1924 = vmatpush1.bf16.msra.mxu0 0
        %1925 = vmatprep.subr.bf16.mxu0 0
        %1926 = vmatpush1.bf16.msra.mxu0 0
        %1927 = vmatprep.subr.bf16.mxu0 0
        %1928 = vmatpush1.bf16.msra.mxu0 0
        %1929 = vmatprep.subr.bf16.mxu0 0
        %1930 = vmatpush1.bf16.msra.mxu0 0
        %1931 = vmatprep.subr.bf16.mxu0 0
        %1932 = vmatpush1.bf16.msra.mxu0 0
        %1933 = vmatprep.subr.bf16.mxu0 0
        %1934 = vmatpush1.bf16.msra.mxu0 0
        %1935 = vmatprep.subr.bf16.mxu0 0
        %1936 = vmatpush1.bf16.msra.mxu0 0
        %1937 = vmatprep.mubr.bf16.mxu0 0
        %1938 = vmatmul.mubr.bf16.gmra.mrb[0].mxu0 %v1900
        %v1939 = vpop.f32.mrb[0].mxu0
        %v1940 = vadd.f32 0.0, %v1939
        %v1941 = vpop.f32.mrb[0].mxu0
        %v1942 = vpop.f32.mrb[0].mxu0
        %v1943 = vpop.f32.mrb[0].mxu0
        %1944 = vdwg.mxu0
        %v1946 = vsel %vm1367, %v1802, 0
        %v1949 = vsel %vm1617, %v1806, 0
        %1951 = vmatprep.subr.bf16.mxu0 0
        %1952 = vmatpush1.bf16.msra.mxu0 %v1949
        %1953 = vmatprep.subr.bf16.mxu0 0
        %1954 = vmatpush1.bf16.msra.mxu0 0
        %1955 = vmatprep.subr.bf16.mxu0 0
        %1956 = vmatpush1.bf16.msra.mxu0 0
        %1957 = vmatprep.subr.bf16.mxu0 0
        %1958 = vmatpush1.bf16.msra.mxu0 0
        %1959 = vmatprep.subr.bf16.mxu0 0
        %1960 = vmatpush1.bf16.msra.mxu0 0
        %1961 = vmatprep.subr.bf16.mxu0 0
        %1962 = vmatpush1.bf16.msra.mxu0 0
        %1963 = vmatprep.subr.bf16.mxu0 0
        %1964 = vmatpush1.bf16.msra.mxu0 0
        %1965 = vmatprep.subr.bf16.mxu0 0
        %1966 = vmatpush1.bf16.msra.mxu0 0
        %1967 = vmatprep.subr.bf16.mxu0 0
        %1968 = vmatpush1.bf16.msra.mxu0 0
        %1969 = vmatprep.subr.bf16.mxu0 0
        %1970 = vmatpush1.bf16.msra.mxu0 0
        %1971 = vmatprep.subr.bf16.mxu0 0
        %1972 = vmatpush1.bf16.msra.mxu0 0
        %1973 = vmatprep.subr.bf16.mxu0 0
        %1974 = vmatpush1.bf16.msra.mxu0 0
        %1975 = vmatprep.subr.bf16.mxu0 0
        %1976 = vmatpush1.bf16.msra.mxu0 0
        %1977 = vmatprep.subr.bf16.mxu0 0
        %1978 = vmatpush1.bf16.msra.mxu0 0
        %1979 = vmatprep.subr.bf16.mxu0 0
        %1980 = vmatpush1.bf16.msra.mxu0 0
        %1981 = vmatprep.subr.bf16.mxu0 0
        %1982 = vmatpush1.bf16.msra.mxu0 0
        %1983 = vmatprep.mubr.bf16.mxu0 0
        %1984 = vmatmul.mubr.bf16.gmra.mrb[0].mxu0 %v1946
        %v1985 = vpop.f32.mrb[0].mxu0
        %v1986 = vadd.f32 0.0, %v1985
        %v1987 = vpop.f32.mrb[0].mxu0
        %v1988 = vpop.f32.mrb[0].mxu0
        %v1989 = vpop.f32.mrb[0].mxu0
        %1990 = vdwg.mxu0
        %v1991 = vsel %vm629, %v1848, 0.0
        %v1992 = vsel %vm629, %v1894, 0.0
        %v1993 = vadd.f32 %v1991, %v1992
        %v1994 = vsel %vm629, %v1940, 0.0
        %v1995 = vadd.f32 %v1993, %v1994
        %v1996 = vsel %vm629, %v1986, 0.0
        %v1997 = vadd.f32 %v1995, %v1996
        %v1998 = vld [vmem:[%s11] sm:$0x1]
        %v2000 = vlaneseq
        %v2001 = vshrl.u32 %v2000, 7
        %v2002 = vsub.s32 0, %v2001
        %v2003 = vrot.slane %v1998, %v2002
        %v2005 = vadd.f32 %v1997, %v2003
        %v2006 = vadd.f32 %v624, %v2005
        %v2007 = vld [vmem:[%s12] sm:$0x1]
        %v2008 = vld [vmem:[%s13] sm:$0x1]
        %v2009 = vsel %vm629, %v2006, 0.0
        %2010 = vadd.xlane.f32.xlu0 %v2009
        %v2011 = vpop.xlane.xlu0 %2010
        %v2012 = vmul.f32 %v2011, %v633
        %v2013 = vsub.f32 %v2006, %v2012
        %v2014 = vmul.f32 %v2013, %v2013
        %v2015 = vsel %vm629, %v2014, 0.0
        %2016 = vadd.xlane.f32.xlu0 %v2015
        %v2017 = vpop.xlane.xlu0 %2016
        %v2018 = vmul.f32 %v2017, %v640
        %v2019 = vrsqrt.pop %v2018
        %v2020 = vmul.f32 %v2018, %v2019
        %vm2021 = vcmp.eq.f32.partialorder %v2018, inf
        %v2022 = vsel %vm2021, %v2018, %v2020
        %vm2023 = vcmp.eq.f32.partialorder %v2018, 0.0
        %v2024 = vand.u32 %v2018, 2147483648
        %v2025 = vsel %vm2023, %v2024, %v2022
        %v2026 = vadd.f32 %v2025, 1e-06
        %v2027 = vrcp.pop %v2026
        %v2029 = vlaneseq
        %v2030 = vshrl.u32 %v2029, 7
        %v2031 = vsub.s32 0, %v2030
        %v2032 = vrot.slane %v2007, %v2031
        %v2034 = vmul.f32 %v2032, %v2013
        %v2035 = vmul.f32 %v2034, %v2027
        %v2037 = vlaneseq
        %v2038 = vshrl.u32 %v2037, 7
        %v2039 = vsub.s32 0, %v2038
        %v2040 = vrot.slane %v2008, %v2039
        %v2042 = vadd.f32 %v2035, %v2040
        %v2043 = vpack.c.bf16 %v2042, %v2042
        %v2044 = vld [vmem:[%s14] sm:$0xff]
        %v2045 = vld [vmem:[%s14 + $0x8] sm:$0xff]
        %v2046 = vld [vmem:[%s14 + $0x10] sm:$0xff]
        %v2047 = vld [vmem:[%s14 + $0x18] sm:$0xff]
        %v2048 = vld [vmem:[%s14 + $0x20] sm:$0xff]
        %v2049 = vld [vmem:[%s14 + $0x28] sm:$0xff]
        %v2050 = vld [vmem:[%s14 + $0x30] sm:$0xff]
        %v2051 = vld [vmem:[%s14 + $0x38] sm:$0xff]
        %v2052 = vld [vmem:[%s14 + $0x40] sm:$0xff]
        %v2053 = vld [vmem:[%s14 + $0x48] sm:$0xff]
        %v2054 = vld [vmem:[%s14 + $0x50] sm:$0xff]
        %v2055 = vld [vmem:[%s14 + $0x58] sm:$0xff]
        %v2056 = vld [vmem:[%s14 + $0x60] sm:$0xff]
        %v2057 = vld [vmem:[%s14 + $0x68] sm:$0xff]
        %v2058 = vld [vmem:[%s14 + $0x70] sm:$0xff]
        %v2059 = vld [vmem:[%s14 + $0x78] sm:$0xff]
        %v2060 = vld [vmem:[%s14 + $0x80] sm:$0xff]
        %v2061 = vld [vmem:[%s14 + $0x88] sm:$0xff]
        %v2062 = vld [vmem:[%s14 + $0x90] sm:$0xff]
        %v2063 = vld [vmem:[%s14 + $0x98] sm:$0xff]
        %v2064 = vld [vmem:[%s14 + $0xa0] sm:$0xff]
        %v2065 = vld [vmem:[%s14 + $0xa8] sm:$0xff]
        %v2066 = vld [vmem:[%s14 + $0xb0] sm:$0xff]
        %v2067 = vld [vmem:[%s14 + $0xb8] sm:$0xff]
        %v2068 = vld [vmem:[%s14 + $0xc0] sm:$0xff]
        %v2069 = vld [vmem:[%s14 + $0xc8] sm:$0xff]
        %v2070 = vld [vmem:[%s14 + $0xd0] sm:$0xff]
        %v2071 = vld [vmem:[%s14 + $0xd8] sm:$0xff]
        %v2072 = vld [vmem:[%s14 + $0xe0] sm:$0xff]
        %v2073 = vld [vmem:[%s14 + $0xe8] sm:$0xff]
        %v2074 = vld [vmem:[%s14 + $0xf0] sm:$0xff]
        %v2075 = vld [vmem:[%s14 + $0xf8] sm:$0xff]
        %v2076 = vld [vmem:[%s15] sm:$0xff]
        %v2077 = vld [vmem:[%s15 + $0x8] sm:$0xff]
        %v2080 = vlaneseq
        %v2081 = vshrl.u32 %v2080, 7
        %v2082 = vsub.s32 0, %v2081
        %v2083 = vrot.slane %v2076, %v2082
        %v2084 = vlaneseq
        %v2085 = vshrl.u32 %v2084, 7
        %v2086 = vsub.s32 1, %v2085
        %v2087 = vrot.slane %v2076, %v2086
        %v2088 = vlaneseq
        %v2089 = vshrl.u32 %v2088, 7
        %v2090 = vsub.s32 2, %v2089
        %v2091 = vrot.slane %v2076, %v2090
        %v2092 = vlaneseq
        %v2093 = vshrl.u32 %v2092, 7
        %v2094 = vsub.s32 3, %v2093
        %v2095 = vrot.slane %v2076, %v2094
        %v2096 = vlaneseq
        %v2097 = vshrl.u32 %v2096, 7
        %v2098 = vsub.s32 4, %v2097
        %v2099 = vrot.slane %v2076, %v2098
        %v2100 = vlaneseq
        %v2101 = vshrl.u32 %v2100, 7
        %v2102 = vsub.s32 5, %v2101
        %v2103 = vrot.slane %v2076, %v2102
        %v2104 = vlaneseq
        %v2105 = vshrl.u32 %v2104, 7
        %v2106 = vsub.s32 6, %v2105
        %v2107 = vrot.slane %v2076, %v2106
        %v2108 = vlaneseq
        %v2109 = vshrl.u32 %v2108, 7
        %v2110 = vsub.s32 7, %v2109
        %v2111 = vrot.slane %v2076, %v2110
        %v2112 = vlaneseq
        %v2113 = vshrl.u32 %v2112, 7
        %v2114 = vsub.s32 0, %v2113
        %v2115 = vrot.slane %v2077, %v2114
        %v2116 = vlaneseq
        %v2117 = vshrl.u32 %v2116, 7
        %v2118 = vsub.s32 1, %v2117
        %v2119 = vrot.slane %v2077, %v2118
        %v2120 = vlaneseq
        %v2121 = vshrl.u32 %v2120, 7
        %v2122 = vsub.s32 2, %v2121
        %v2123 = vrot.slane %v2077, %v2122
        %v2124 = vlaneseq
        %v2125 = vshrl.u32 %v2124, 7
        %v2126 = vsub.s32 3, %v2125
        %v2127 = vrot.slane %v2077, %v2126
        %v2128 = vlaneseq
        %v2129 = vshrl.u32 %v2128, 7
        %v2130 = vsub.s32 4, %v2129
        %v2131 = vrot.slane %v2077, %v2130
        %v2132 = vlaneseq
        %v2133 = vshrl.u32 %v2132, 7
        %v2134 = vsub.s32 5, %v2133
        %v2135 = vrot.slane %v2077, %v2134
        %v2136 = vlaneseq
        %v2137 = vshrl.u32 %v2136, 7
        %v2138 = vsub.s32 6, %v2137
        %v2139 = vrot.slane %v2077, %v2138
        %v2140 = vlaneseq
        %v2141 = vshrl.u32 %v2140, 7
        %v2142 = vsub.s32 7, %v2141
        %v2143 = vrot.slane %v2077, %v2142
        %v2192 = vunpack.c.l.b16 %v2044
        %v2193 = vunpack.c.h.b16 %v2044
        %v2194 = vunpack.c.l.b16 %v2045
        %v2195 = vunpack.c.h.b16 %v2045
        %v2196 = vunpack.c.l.b16 %v2046
        %v2197 = vunpack.c.h.b16 %v2046
        %v2198 = vunpack.c.l.b16 %v2047
        %v2199 = vunpack.c.h.b16 %v2047
        %v2200 = vunpack.c.l.b16 %v2048
        %v2201 = vunpack.c.h.b16 %v2048
        %v2202 = vunpack.c.l.b16 %v2049
        %v2203 = vunpack.c.h.b16 %v2049
        %v2204 = vunpack.c.l.b16 %v2050
        %v2205 = vunpack.c.h.b16 %v2050
        %v2206 = vunpack.c.l.b16 %v2051
        %v2207 = vunpack.c.h.b16 %v2051
        %v2208 = vunpack.c.l.b16 %v2052
        %v2209 = vunpack.c.h.b16 %v2052
        %v2210 = vunpack.c.l.b16 %v2053
        %v2211 = vunpack.c.h.b16 %v2053
        %v2212 = vunpack.c.l.b16 %v2054
        %v2213 = vunpack.c.h.b16 %v2054
        %v2214 = vunpack.c.l.b16 %v2055
        %v2215 = vunpack.c.h.b16 %v2055
        %v2216 = vunpack.c.l.b16 %v2056
        %v2217 = vunpack.c.h.b16 %v2056
        %v2218 = vunpack.c.l.b16 %v2057
        %v2219 = vunpack.c.h.b16 %v2057
        %v2220 = vunpack.c.l.b16 %v2058
        %v2221 = vunpack.c.h.b16 %v2058
        %v2222 = vunpack.c.l.b16 %v2059
        %v2223 = vunpack.c.h.b16 %v2059
        %v2224 = vunpack.c.l.b16 %v2060
        %v2225 = vunpack.c.h.b16 %v2060
        %v2226 = vunpack.c.l.b16 %v2061
        %v2227 = vunpack.c.h.b16 %v2061
        %v2228 = vunpack.c.l.b16 %v2062
        %v2229 = vunpack.c.h.b16 %v2062
        %v2230 = vunpack.c.l.b16 %v2063
        %v2231 = vunpack.c.h.b16 %v2063
        %v2232 = vunpack.c.l.b16 %v2064
        %v2233 = vunpack.c.h.b16 %v2064
        %v2234 = vunpack.c.l.b16 %v2065
        %v2235 = vunpack.c.h.b16 %v2065
        %v2236 = vunpack.c.l.b16 %v2066
        %v2237 = vunpack.c.h.b16 %v2066
        %v2238 = vunpack.c.l.b16 %v2067
        %v2239 = vunpack.c.h.b16 %v2067
        %v2240 = vunpack.c.l.b16 %v2068
        %v2241 = vunpack.c.h.b16 %v2068
        %v2242 = vunpack.c.l.b16 %v2069
        %v2243 = vunpack.c.h.b16 %v2069
        %v2244 = vunpack.c.l.b16 %v2070
        %v2245 = vunpack.c.h.b16 %v2070
        %v2246 = vunpack.c.l.b16 %v2071
        %v2247 = vunpack.c.h.b16 %v2071
        %v2248 = vunpack.c.l.b16 %v2072
        %v2249 = vunpack.c.h.b16 %v2072
        %v2250 = vunpack.c.l.b16 %v2073
        %v2251 = vunpack.c.h.b16 %v2073
        %v2252 = vunpack.c.l.b16 %v2074
        %v2253 = vunpack.c.h.b16 %v2074
        %v2254 = vunpack.c.l.b16 %v2075
        %v2255 = vunpack.c.h.b16 %v2075
        %v2256 = vpack.c.b16 %v2208, %v2192
        %v2257 = vpack.c.b16 %v2209, %v2193
        %v2258 = vpack.c.b16 %v2210, %v2194
        %v2259 = vpack.c.b16 %v2211, %v2195
        %v2260 = vpack.c.b16 %v2212, %v2196
        %v2261 = vpack.c.b16 %v2213, %v2197
        %v2262 = vpack.c.b16 %v2214, %v2198
        %v2263 = vpack.c.b16 %v2215, %v2199
        %v2264 = vpack.c.b16 %v2216, %v2200
        %v2265 = vpack.c.b16 %v2217, %v2201
        %v2266 = vpack.c.b16 %v2218, %v2202
        %v2267 = vpack.c.b16 %v2219, %v2203
        %v2268 = vpack.c.b16 %v2220, %v2204
        %v2269 = vpack.c.b16 %v2221, %v2205
        %v2270 = vpack.c.b16 %v2222, %v2206
        %v2271 = vpack.c.b16 %v2223, %v2207
        %v2272 = vpack.c.b16 %v2240, %v2224
        %v2273 = vpack.c.b16 %v2241, %v2225
        %v2274 = vpack.c.b16 %v2242, %v2226
        %v2275 = vpack.c.b16 %v2243, %v2227
        %v2276 = vpack.c.b16 %v2244, %v2228
        %v2277 = vpack.c.b16 %v2245, %v2229
        %v2278 = vpack.c.b16 %v2246, %v2230
        %v2279 = vpack.c.b16 %v2247, %v2231
        %v2280 = vpack.c.b16 %v2248, %v2232
        %v2281 = vpack.c.b16 %v2249, %v2233
        %v2282 = vpack.c.b16 %v2250, %v2234
        %v2283 = vpack.c.b16 %v2251, %v2235
        %v2284 = vpack.c.b16 %v2252, %v2236
        %v2285 = vpack.c.b16 %v2253, %v2237
        %v2286 = vpack.c.b16 %v2254, %v2238
        %v2287 = vpack.c.b16 %v2255, %v2239
        %v2321 = vsel %vm629, %v2043, 0
        %2323 = vmatprep.subr.bf16.mxu0 %v2257
        %2324 = vmatpush1.bf16.msra.mxu0 %v2256
        %2325 = vmatprep.subr.bf16.mxu0 %v2273
        %2326 = vmatpush1.bf16.msra.mxu0 %v2272
        %2327 = vmatprep.subr.bf16.mxu0 0
        %2328 = vmatpush1.bf16.msra.mxu0 0
        %2329 = vmatprep.subr.bf16.mxu0 0
        %2330 = vmatpush1.bf16.msra.mxu0 0
        %2331 = vmatprep.subr.bf16.mxu0 0
        %2332 = vmatpush1.bf16.msra.mxu0 0
        %2333 = vmatprep.subr.bf16.mxu0 0
        %2334 = vmatpush1.bf16.msra.mxu0 0
        %2335 = vmatprep.subr.bf16.mxu0 0
        %2336 = vmatpush1.bf16.msra.mxu0 0
        %2337 = vmatprep.subr.bf16.mxu0 0
        %2338 = vmatpush1.bf16.msra.mxu0 0
        %2339 = vmatprep.subr.bf16.mxu0 0
        %2340 = vmatpush1.bf16.msra.mxu0 0
        %2341 = vmatprep.subr.bf16.mxu0 0
        %2342 = vmatpush1.bf16.msra.mxu0 0
        %2343 = vmatprep.subr.bf16.mxu0 0
        %2344 = vmatpush1.bf16.msra.mxu0 0
        %2345 = vmatprep.subr.bf16.mxu0 0
        %2346 = vmatpush1.bf16.msra.mxu0 0
        %2347 = vmatprep.subr.bf16.mxu0 0
        %2348 = vmatpush1.bf16.msra.mxu0 0
        %2349 = vmatprep.subr.bf16.mxu0 0
        %2350 = vmatpush1.bf16.msra.mxu0 0
        %2351 = vmatprep.subr.bf16.mxu0 0
        %2352 = vmatpush1.bf16.msra.mxu0 0
        %2353 = vmatprep.subr.bf16.mxu0 0
        %2354 = vmatpush1.bf16.msra.mxu0 0
        %2355 = vmatprep.mubr.bf16.mxu0 0
        %2356 = vmatmul.mubr.bf16.gmra.mrb[0].mxu0 %v2321
        %v2357 = vpop.f32.mrb[0].mxu0
        %v2358 = vadd.f32 %v2083, %v2357
        %v2359 = vpop.f32.mrb[0].mxu0
        %v2360 = vadd.f32 %v2087, %v2359
        %v2361 = vpop.f32.mrb[0].mxu0
        %v2362 = vpop.f32.mrb[0].mxu0
        %2363 = vdwg.mxu0
        %2364 = vmatprep.subr.bf16.mxu0 %v2259
        %2365 = vmatpush1.bf16.msra.mxu0 %v2258
        %2366 = vmatprep.subr.bf16.mxu0 %v2275
        %2367 = vmatpush1.bf16.msra.mxu0 %v2274
        %2368 = vmatprep.subr.bf16.mxu0 0
        %2369 = vmatpush1.bf16.msra.mxu0 0
        %2370 = vmatprep.subr.bf16.mxu0 0
        %2371 = vmatpush1.bf16.msra.mxu0 0
        %2372 = vmatprep.subr.bf16.mxu0 0
        %2373 = vmatpush1.bf16.msra.mxu0 0
        %2374 = vmatprep.subr.bf16.mxu0 0
        %2375 = vmatpush1.bf16.msra.mxu0 0
        %2376 = vmatprep.subr.bf16.mxu0 0
        %2377 = vmatpush1.bf16.msra.mxu0 0
        %2378 = vmatprep.subr.bf16.mxu0 0
        %2379 = vmatpush1.bf16.msra.mxu0 0
        %2380 = vmatprep.subr.bf16.mxu0 0
        %2381 = vmatpush1.bf16.msra.mxu0 0
        %2382 = vmatprep.subr.bf16.mxu0 0
        %2383 = vmatpush1.bf16.msra.mxu0 0
        %2384 = vmatprep.subr.bf16.mxu0 0
        %2385 = vmatpush1.bf16.msra.mxu0 0
        %2386 = vmatprep.subr.bf16.mxu0 0
        %2387 = vmatpush1.bf16.msra.mxu0 0
        %2388 = vmatprep.subr.bf16.mxu0 0
        %2389 = vmatpush1.bf16.msra.mxu0 0
        %2390 = vmatprep.subr.bf16.mxu0 0
        %2391 = vmatpush1.bf16.msra.mxu0 0
        %2392 = vmatprep.subr.bf16.mxu0 0
        %2393 = vmatpush1.bf16.msra.mxu0 0
        %2394 = vmatprep.subr.bf16.mxu0 0
        %2395 = vmatpush1.bf16.msra.mxu0 0
        %2396 = vmatprep.mubr.bf16.mxu0 0
        %2397 = vmatmul.mubr.bf16.gmra.mrb[0].mxu0 %v2321
        %v2398 = vpop.f32.mrb[0].mxu0
        %v2399 = vadd.f32 %v2091, %v2398
        %v2400 = vpop.f32.mrb[0].mxu0
        %v2401 = vadd.f32 %v2095, %v2400
        %v2402 = vpop.f32.mrb[0].mxu0
        %v2403 = vpop.f32.mrb[0].mxu0
        %2404 = vdwg.mxu0
        %2405 = vmatprep.subr.bf16.mxu0 %v2261
        %2406 = vmatpush1.bf16.msra.mxu0 %v2260
        %2407 = vmatprep.subr.bf16.mxu0 %v2277
        %2408 = vmatpush1.bf16.msra.mxu0 %v2276
        %2409 = vmatprep.subr.bf16.mxu0 0
        %2410 = vmatpush1.bf16.msra.mxu0 0
        %2411 = vmatprep.subr.bf16.mxu0 0
        %2412 = vmatpush1.bf16.msra.mxu0 0
        %2413 = vmatprep.subr.bf16.mxu0 0
        %2414 = vmatpush1.bf16.msra.mxu0 0
        %2415 = vmatprep.subr.bf16.mxu0 0
        %2416 = vmatpush1.bf16.msra.mxu0 0
        %2417 = vmatprep.subr.bf16.mxu0 0
        %2418 = vmatpush1.bf16.msra.mxu0 0
        %2419 = vmatprep.subr.bf16.mxu0 0
        %2420 = vmatpush1.bf16.msra.mxu0 0
        %2421 = vmatprep.subr.bf16.mxu0 0
        %2422 = vmatpush1.bf16.msra.mxu0 0
        %2423 = vmatprep.subr.bf16.mxu0 0
        %2424 = vmatpush1.bf16.msra.mxu0 0
        %2425 = vmatprep.subr.bf16.mxu0 0
        %2426 = vmatpush1.bf16.msra.mxu0 0
        %2427 = vmatprep.subr.bf16.mxu0 0
        %2428 = vmatpush1.bf16.msra.mxu0 0
        %2429 = vmatprep.subr.bf16.mxu0 0
        %2430 = vmatpush1.bf16.msra.mxu0 0
        %2431 = vmatprep.subr.bf16.mxu0 0
        %2432 = vmatpush1.bf16.msra.mxu0 0
        %2433 = vmatprep.subr.bf16.mxu0 0
        %2434 = vmatpush1.bf16.msra.mxu0 0
        %2435 = vmatprep.subr.bf16.mxu0 0
        %2436 = vmatpush1.bf16.msra.mxu0 0
        %2437 = vmatprep.mubr.bf16.mxu0 0
        %2438 = vmatmul.mubr.bf16.gmra.mrb[0].mxu0 %v2321
        %v2439 = vpop.f32.mrb[0].mxu0
        %v2440 = vadd.f32 %v2099, %v2439
        %v2441 = vpop.f32.mrb[0].mxu0
        %v2442 = vadd.f32 %v2103, %v2441
        %v2443 = vpop.f32.mrb[0].mxu0
        %v2444 = vpop.f32.mrb[0].mxu0
        %2445 = vdwg.mxu0
        %2446 = vmatprep.subr.bf16.mxu0 %v2263
        %2447 = vmatpush1.bf16.msra.mxu0 %v2262
        %2448 = vmatprep.subr.bf16.mxu0 %v2279
        %2449 = vmatpush1.bf16.msra.mxu0 %v2278
        %2450 = vmatprep.subr.bf16.mxu0 0
        %2451 = vmatpush1.bf16.msra.mxu0 0
        %2452 = vmatprep.subr.bf16.mxu0 0
        %2453 = vmatpush1.bf16.msra.mxu0 0
        %2454 = vmatprep.subr.bf16.mxu0 0
        %2455 = vmatpush1.bf16.msra.mxu0 0
        %2456 = vmatprep.subr.bf16.mxu0 0
        %2457 = vmatpush1.bf16.msra.mxu0 0
        %2458 = vmatprep.subr.bf16.mxu0 0
        %2459 = vmatpush1.bf16.msra.mxu0 0
        %2460 = vmatprep.subr.bf16.mxu0 0
        %2461 = vmatpush1.bf16.msra.mxu0 0
        %2462 = vmatprep.subr.bf16.mxu0 0
        %2463 = vmatpush1.bf16.msra.mxu0 0
        %2464 = vmatprep.subr.bf16.mxu0 0
        %2465 = vmatpush1.bf16.msra.mxu0 0
        %2466 = vmatprep.subr.bf16.mxu0 0
        %2467 = vmatpush1.bf16.msra.mxu0 0
        %2468 = vmatprep.subr.bf16.mxu0 0
        %2469 = vmatpush1.bf16.msra.mxu0 0
        %2470 = vmatprep.subr.bf16.mxu0 0
        %2471 = vmatpush1.bf16.msra.mxu0 0
        %2472 = vmatprep.subr.bf16.mxu0 0
        %2473 = vmatpush1.bf16.msra.mxu0 0
        %2474 = vmatprep.subr.bf16.mxu0 0
        %2475 = vmatpush1.bf16.msra.mxu0 0
        %2476 = vmatprep.subr.bf16.mxu0 0
        %2477 = vmatpush1.bf16.msra.mxu0 0
        %2478 = vmatprep.mubr.bf16.mxu0 0
        %2479 = vmatmul.mubr.bf16.gmra.mrb[0].mxu0 %v2321
        %v2480 = vpop.f32.mrb[0].mxu0
        %v2481 = vadd.f32 %v2107, %v2480
        %v2482 = vpop.f32.mrb[0].mxu0
        %v2483 = vadd.f32 %v2111, %v2482
        %v2484 = vpop.f32.mrb[0].mxu0
        %v2485 = vpop.f32.mrb[0].mxu0
        %2486 = vdwg.mxu0
        %2487 = vmatprep.subr.bf16.mxu0 %v2265
        %2488 = vmatpush1.bf16.msra.mxu0 %v2264
        %2489 = vmatprep.subr.bf16.mxu0 %v2281
        %2490 = vmatpush1.bf16.msra.mxu0 %v2280
        %2491 = vmatprep.subr.bf16.mxu0 0
        %2492 = vmatpush1.bf16.msra.mxu0 0
        %2493 = vmatprep.subr.bf16.mxu0 0
        %2494 = vmatpush1.bf16.msra.mxu0 0
        %2495 = vmatprep.subr.bf16.mxu0 0
        %2496 = vmatpush1.bf16.msra.mxu0 0
        %2497 = vmatprep.subr.bf16.mxu0 0
        %2498 = vmatpush1.bf16.msra.mxu0 0
        %2499 = vmatprep.subr.bf16.mxu0 0
        %2500 = vmatpush1.bf16.msra.mxu0 0
        %2501 = vmatprep.subr.bf16.mxu0 0
        %2502 = vmatpush1.bf16.msra.mxu0 0
        %2503 = vmatprep.subr.bf16.mxu0 0
        %2504 = vmatpush1.bf16.msra.mxu0 0
        %2505 = vmatprep.subr.bf16.mxu0 0
        %2506 = vmatpush1.bf16.msra.mxu0 0
        %2507 = vmatprep.subr.bf16.mxu0 0
        %2508 = vmatpush1.bf16.msra.mxu0 0
        %2509 = vmatprep.subr.bf16.mxu0 0
        %2510 = vmatpush1.bf16.msra.mxu0 0
        %2511 = vmatprep.subr.bf16.mxu0 0
        %2512 = vmatpush1.bf16.msra.mxu0 0
        %2513 = vmatprep.subr.bf16.mxu0 0
        %2514 = vmatpush1.bf16.msra.mxu0 0
        %2515 = vmatprep.subr.bf16.mxu0 0
        %2516 = vmatpush1.bf16.msra.mxu0 0
        %2517 = vmatprep.subr.bf16.mxu0 0
        %2518 = vmatpush1.bf16.msra.mxu0 0
        %2519 = vmatprep.mubr.bf16.mxu0 0
        %2520 = vmatmul.mubr.bf16.gmra.mrb[0].mxu0 %v2321
        %v2521 = vpop.f32.mrb[0].mxu0
        %v2522 = vadd.f32 %v2115, %v2521
        %v2523 = vpop.f32.mrb[0].mxu0
        %v2524 = vadd.f32 %v2119, %v2523
        %v2525 = vpop.f32.mrb[0].mxu0
        %v2526 = vpop.f32.mrb[0].mxu0
        %2527 = vdwg.mxu0
        %2528 = vmatprep.subr.bf16.mxu0 %v2267
        %2529 = vmatpush1.bf16.msra.mxu0 %v2266
        %2530 = vmatprep.subr.bf16.mxu0 %v2283
        %2531 = vmatpush1.bf16.msra.mxu0 %v2282
        %2532 = vmatprep.subr.bf16.mxu0 0
        %2533 = vmatpush1.bf16.msra.mxu0 0
        %2534 = vmatprep.subr.bf16.mxu0 0
        %2535 = vmatpush1.bf16.msra.mxu0 0
        %2536 = vmatprep.subr.bf16.mxu0 0
        %2537 = vmatpush1.bf16.msra.mxu0 0
        %2538 = vmatprep.subr.bf16.mxu0 0
        %2539 = vmatpush1.bf16.msra.mxu0 0
        %2540 = vmatprep.subr.bf16.mxu0 0
        %2541 = vmatpush1.bf16.msra.mxu0 0
        %2542 = vmatprep.subr.bf16.mxu0 0
        %2543 = vmatpush1.bf16.msra.mxu0 0
        %2544 = vmatprep.subr.bf16.mxu0 0
        %2545 = vmatpush1.bf16.msra.mxu0 0
        %2546 = vmatprep.subr.bf16.mxu0 0
        %2547 = vmatpush1.bf16.msra.mxu0 0
        %2548 = vmatprep.subr.bf16.mxu0 0
        %2549 = vmatpush1.bf16.msra.mxu0 0
        %2550 = vmatprep.subr.bf16.mxu0 0
        %2551 = vmatpush1.bf16.msra.mxu0 0
        %2552 = vmatprep.subr.bf16.mxu0 0
        %2553 = vmatpush1.bf16.msra.mxu0 0
        %2554 = vmatprep.subr.bf16.mxu0 0
        %2555 = vmatpush1.bf16.msra.mxu0 0
        %2556 = vmatprep.subr.bf16.mxu0 0
        %2557 = vmatpush1.bf16.msra.mxu0 0
        %2558 = vmatprep.subr.bf16.mxu0 0
        %2559 = vmatpush1.bf16.msra.mxu0 0
        %2560 = vmatprep.mubr.bf16.mxu0 0
        %2561 = vmatmul.mubr.bf16.gmra.mrb[0].mxu0 %v2321
        %v2562 = vpop.f32.mrb[0].mxu0
        %v2563 = vadd.f32 %v2123, %v2562
        %v2564 = vpop.f32.mrb[0].mxu0
        %v2565 = vadd.f32 %v2127, %v2564
        %v2566 = vpop.f32.mrb[0].mxu0
        %v2567 = vpop.f32.mrb[0].mxu0
        %2568 = vdwg.mxu0
        %2569 = vmatprep.subr.bf16.mxu0 %v2269
        %2570 = vmatpush1.bf16.msra.mxu0 %v2268
        %2571 = vmatprep.subr.bf16.mxu0 %v2285
        %2572 = vmatpush1.bf16.msra.mxu0 %v2284
        %2573 = vmatprep.subr.bf16.mxu0 0
        %2574 = vmatpush1.bf16.msra.mxu0 0
        %2575 = vmatprep.subr.bf16.mxu0 0
        %2576 = vmatpush1.bf16.msra.mxu0 0
        %2577 = vmatprep.subr.bf16.mxu0 0
        %2578 = vmatpush1.bf16.msra.mxu0 0
        %2579 = vmatprep.subr.bf16.mxu0 0
        %2580 = vmatpush1.bf16.msra.mxu0 0
        %2581 = vmatprep.subr.bf16.mxu0 0
        %2582 = vmatpush1.bf16.msra.mxu0 0
        %2583 = vmatprep.subr.bf16.mxu0 0
        %2584 = vmatpush1.bf16.msra.mxu0 0
        %2585 = vmatprep.subr.bf16.mxu0 0
        %2586 = vmatpush1.bf16.msra.mxu0 0
        %2587 = vmatprep.subr.bf16.mxu0 0
        %2588 = vmatpush1.bf16.msra.mxu0 0
        %2589 = vmatprep.subr.bf16.mxu0 0
        %2590 = vmatpush1.bf16.msra.mxu0 0
        %2591 = vmatprep.subr.bf16.mxu0 0
        %2592 = vmatpush1.bf16.msra.mxu0 0
        %2593 = vmatprep.subr.bf16.mxu0 0
        %2594 = vmatpush1.bf16.msra.mxu0 0
        %2595 = vmatprep.subr.bf16.mxu0 0
        %2596 = vmatpush1.bf16.msra.mxu0 0
        %2597 = vmatprep.subr.bf16.mxu0 0
        %2598 = vmatpush1.bf16.msra.mxu0 0
        %2599 = vmatprep.subr.bf16.mxu0 0
        %2600 = vmatpush1.bf16.msra.mxu0 0
        %2601 = vmatprep.mubr.bf16.mxu0 0
        %2602 = vmatmul.mubr.bf16.gmra.mrb[0].mxu0 %v2321
        %v2603 = vpop.f32.mrb[0].mxu0
        %v2604 = vadd.f32 %v2131, %v2603
        %v2605 = vpop.f32.mrb[0].mxu0
        %v2606 = vadd.f32 %v2135, %v2605
        %v2607 = vpop.f32.mrb[0].mxu0
        %v2608 = vpop.f32.mrb[0].mxu0
        %2609 = vdwg.mxu0
        %2610 = vmatprep.subr.bf16.mxu0 %v2271
        %2611 = vmatpush1.bf16.msra.mxu0 %v2270
        %2612 = vmatprep.subr.bf16.mxu0 %v2287
        %2613 = vmatpush1.bf16.msra.mxu0 %v2286
        %2614 = vmatprep.subr.bf16.mxu0 0
        %2615 = vmatpush1.bf16.msra.mxu0 0
        %2616 = vmatprep.subr.bf16.mxu0 0
        %2617 = vmatpush1.bf16.msra.mxu0 0
        %2618 = vmatprep.subr.bf16.mxu0 0
        %2619 = vmatpush1.bf16.msra.mxu0 0
        %2620 = vmatprep.subr.bf16.mxu0 0
        %2621 = vmatpush1.bf16.msra.mxu0 0
        %2622 = vmatprep.subr.bf16.mxu0 0
        %2623 = vmatpush1.bf16.msra.mxu0 0
        %2624 = vmatprep.subr.bf16.mxu0 0
        %2625 = vmatpush1.bf16.msra.mxu0 0
        %2626 = vmatprep.subr.bf16.mxu0 0
        %2627 = vmatpush1.bf16.msra.mxu0 0
        %2628 = vmatprep.subr.bf16.mxu0 0
        %2629 = vmatpush1.bf16.msra.mxu0 0
        %2630 = vmatprep.subr.bf16.mxu0 0
        %2631 = vmatpush1.bf16.msra.mxu0 0
        %2632 = vmatprep.subr.bf16.mxu0 0
        %2633 = vmatpush1.bf16.msra.mxu0 0
        %2634 = vmatprep.subr.bf16.mxu0 0
        %2635 = vmatpush1.bf16.msra.mxu0 0
        %2636 = vmatprep.subr.bf16.mxu0 0
        %2637 = vmatpush1.bf16.msra.mxu0 0
        %2638 = vmatprep.subr.bf16.mxu0 0
        %2639 = vmatpush1.bf16.msra.mxu0 0
        %2640 = vmatprep.subr.bf16.mxu0 0
        %2641 = vmatpush1.bf16.msra.mxu0 0
        %2642 = vmatprep.mubr.bf16.mxu0 0
        %2643 = vmatmul.mubr.bf16.gmra.mrb[0].mxu0 %v2321
        %v2644 = vpop.f32.mrb[0].mxu0
        %v2645 = vadd.f32 %v2139, %v2644
        %v2646 = vpop.f32.mrb[0].mxu0
        %v2647 = vadd.f32 %v2143, %v2646
        %v2648 = vpop.f32.mrb[0].mxu0
        %v2649 = vpop.f32.mrb[0].mxu0
        %2650 = vdwg.mxu0
        %v2651 = vmax.f32 %v2358, 0.0
        %v2652 = vmax.f32 %v2360, 0.0
        %v2653 = vmax.f32 %v2399, 0.0
        %v2654 = vmax.f32 %v2401, 0.0
        %v2655 = vmax.f32 %v2440, 0.0
        %v2656 = vmax.f32 %v2442, 0.0
        %v2657 = vmax.f32 %v2481, 0.0
        %v2658 = vmax.f32 %v2483, 0.0
        %v2659 = vmax.f32 %v2522, 0.0
        %v2660 = vmax.f32 %v2524, 0.0
        %v2661 = vmax.f32 %v2563, 0.0
        %v2662 = vmax.f32 %v2565, 0.0
        %v2663 = vmax.f32 %v2604, 0.0
        %v2664 = vmax.f32 %v2606, 0.0
        %v2665 = vmax.f32 %v2645, 0.0
        %v2666 = vmax.f32 %v2647, 0.0
        %v2667 = vpack.c.bf16 %v2651, %v2651
        %v2668 = vpack.c.bf16 %v2652, %v2652
        %v2669 = vpack.c.bf16 %v2653, %v2653
        %v2670 = vpack.c.bf16 %v2654, %v2654
        %v2671 = vpack.c.bf16 %v2655, %v2655
        %v2672 = vpack.c.bf16 %v2656, %v2656
        %v2673 = vpack.c.bf16 %v2657, %v2657
        %v2674 = vpack.c.bf16 %v2658, %v2658
        %v2675 = vpack.c.bf16 %v2659, %v2659
        %v2676 = vpack.c.bf16 %v2660, %v2660
        %v2677 = vpack.c.bf16 %v2661, %v2661
        %v2678 = vpack.c.bf16 %v2662, %v2662
        %v2679 = vpack.c.bf16 %v2663, %v2663
        %v2680 = vpack.c.bf16 %v2664, %v2664
        %v2681 = vpack.c.bf16 %v2665, %v2665
        %v2682 = vpack.c.bf16 %v2666, %v2666
        %v2683 = vld [vmem:[%s16] sm:$0xf]
        %v2684 = vld [vmem:[%s16 + $0x4] sm:$0xf]
        %v2685 = vld [vmem:[%s16 + $0x8] sm:$0xf]
        %v2686 = vld [vmem:[%s16 + $0xc] sm:$0xf]
        %v2687 = vld [vmem:[%s16 + $0x10] sm:$0xf]
        %v2688 = vld [vmem:[%s16 + $0x14] sm:$0xf]
        %v2689 = vld [vmem:[%s16 + $0x18] sm:$0xf]
        %v2690 = vld [vmem:[%s16 + $0x1c] sm:$0xf]
        %v2691 = vld [vmem:[%s16 + $0x20] sm:$0xf]
        %v2692 = vld [vmem:[%s16 + $0x24] sm:$0xf]
        %v2693 = vld [vmem:[%s16 + $0x28] sm:$0xf]
        %v2694 = vld [vmem:[%s16 + $0x2c] sm:$0xf]
        %v2695 = vld [vmem:[%s16 + $0x30] sm:$0xf]
        %v2696 = vld [vmem:[%s16 + $0x34] sm:$0xf]
        %v2697 = vld [vmem:[%s16 + $0x38] sm:$0xf]
        %v2698 = vld [vmem:[%s16 + $0x3c] sm:$0xf]
        %v2699 = vld [vmem:[%s16 + $0x40] sm:$0xf]
        %v2700 = vld [vmem:[%s16 + $0x44] sm:$0xf]
        %v2701 = vld [vmem:[%s16 + $0x48] sm:$0xf]
        %v2702 = vld [vmem:[%s16 + $0x4c] sm:$0xf]
        %v2703 = vld [vmem:[%s16 + $0x50] sm:$0xf]
        %v2704 = vld [vmem:[%s16 + $0x54] sm:$0xf]
        %v2705 = vld [vmem:[%s16 + $0x58] sm:$0xf]
        %v2706 = vld [vmem:[%s16 + $0x5c] sm:$0xf]
        %v2707 = vld [vmem:[%s16 + $0x60] sm:$0xf]
        %v2708 = vld [vmem:[%s16 + $0x64] sm:$0xf]
        %v2709 = vld [vmem:[%s16 + $0x68] sm:$0xf]
        %v2710 = vld [vmem:[%s16 + $0x6c] sm:$0xf]
        %v2711 = vld [vmem:[%s16 + $0x70] sm:$0xf]
        %v2712 = vld [vmem:[%s16 + $0x74] sm:$0xf]
        %v2713 = vld [vmem:[%s16 + $0x78] sm:$0xf]
        %v2714 = vld [vmem:[%s16 + $0x7c] sm:$0xf]
        %v2715 = vld [vmem:[%s16 + $0x80] sm:$0xf]
        %v2716 = vld [vmem:[%s16 + $0x84] sm:$0xf]
        %v2717 = vld [vmem:[%s16 + $0x88] sm:$0xf]
        %v2718 = vld [vmem:[%s16 + $0x8c] sm:$0xf]
        %v2719 = vld [vmem:[%s16 + $0x90] sm:$0xf]
        %v2720 = vld [vmem:[%s16 + $0x94] sm:$0xf]
        %v2721 = vld [vmem:[%s16 + $0x98] sm:$0xf]
        %v2722 = vld [vmem:[%s16 + $0x9c] sm:$0xf]
        %v2723 = vld [vmem:[%s16 + $0xa0] sm:$0xf]
        %v2724 = vld [vmem:[%s16 + $0xa4] sm:$0xf]
        %v2725 = vld [vmem:[%s16 + $0xa8] sm:$0xf]
        %v2726 = vld [vmem:[%s16 + $0xac] sm:$0xf]
        %v2727 = vld [vmem:[%s16 + $0xb0] sm:$0xf]
        %v2728 = vld [vmem:[%s16 + $0xb4] sm:$0xf]
        %v2729 = vld [vmem:[%s16 + $0xb8] sm:$0xf]
        %v2730 = vld [vmem:[%s16 + $0xbc] sm:$0xf]
        %v2731 = vld [vmem:[%s16 + $0xc0] sm:$0xf]
        %v2732 = vld [vmem:[%s16 + $0xc4] sm:$0xf]
        %v2733 = vld [vmem:[%s16 + $0xc8] sm:$0xf]
        %v2734 = vld [vmem:[%s16 + $0xcc] sm:$0xf]
        %v2735 = vld [vmem:[%s16 + $0xd0] sm:$0xf]
        %v2736 = vld [vmem:[%s16 + $0xd4] sm:$0xf]
        %v2737 = vld [vmem:[%s16 + $0xd8] sm:$0xf]
        %v2738 = vld [vmem:[%s16 + $0xdc] sm:$0xf]
        %v2739 = vld [vmem:[%s16 + $0xe0] sm:$0xf]
        %v2740 = vld [vmem:[%s16 + $0xe4] sm:$0xf]
        %v2741 = vld [vmem:[%s16 + $0xe8] sm:$0xf]
        %v2742 = vld [vmem:[%s16 + $0xec] sm:$0xf]
        %v2743 = vld [vmem:[%s16 + $0xf0] sm:$0xf]
        %v2744 = vld [vmem:[%s16 + $0xf4] sm:$0xf]
        %v2745 = vld [vmem:[%s16 + $0xf8] sm:$0xf]
        %v2746 = vld [vmem:[%s16 + $0xfc] sm:$0xf]
        %v2747 = vld [vmem:[%s16 + $0x100] sm:$0xf]
        %v2748 = vld [vmem:[%s16 + $0x104] sm:$0xf]
        %v2749 = vld [vmem:[%s16 + $0x108] sm:$0xf]
        %v2750 = vld [vmem:[%s16 + $0x10c] sm:$0xf]
        %v2751 = vld [vmem:[%s16 + $0x110] sm:$0xf]
        %v2752 = vld [vmem:[%s16 + $0x114] sm:$0xf]
        %v2753 = vld [vmem:[%s16 + $0x118] sm:$0xf]
        %v2754 = vld [vmem:[%s16 + $0x11c] sm:$0xf]
        %v2755 = vld [vmem:[%s16 + $0x120] sm:$0xf]
        %v2756 = vld [vmem:[%s16 + $0x124] sm:$0xf]
        %v2757 = vld [vmem:[%s16 + $0x128] sm:$0xf]
        %v2758 = vld [vmem:[%s16 + $0x12c] sm:$0xf]
        %v2759 = vld [vmem:[%s16 + $0x130] sm:$0xf]
        %v2760 = vld [vmem:[%s16 + $0x134] sm:$0xf]
        %v2761 = vld [vmem:[%s16 + $0x138] sm:$0xf]
        %v2762 = vld [vmem:[%s16 + $0x13c] sm:$0xf]
        %v2763 = vld [vmem:[%s16 + $0x140] sm:$0xf]
        %v2764 = vld [vmem:[%s16 + $0x144] sm:$0xf]
        %v2765 = vld [vmem:[%s16 + $0x148] sm:$0xf]
        %v2766 = vld [vmem:[%s16 + $0x14c] sm:$0xf]
        %v2767 = vld [vmem:[%s16 + $0x150] sm:$0xf]
        %v2768 = vld [vmem:[%s16 + $0x154] sm:$0xf]
        %v2769 = vld [vmem:[%s16 + $0x158] sm:$0xf]
        %v2770 = vld [vmem:[%s16 + $0x15c] sm:$0xf]
        %v2771 = vld [vmem:[%s16 + $0x160] sm:$0xf]
        %v2772 = vld [vmem:[%s16 + $0x164] sm:$0xf]
        %v2773 = vld [vmem:[%s16 + $0x168] sm:$0xf]
        %v2774 = vld [vmem:[%s16 + $0x16c] sm:$0xf]
        %v2775 = vld [vmem:[%s16 + $0x170] sm:$0xf]
        %v2776 = vld [vmem:[%s16 + $0x174] sm:$0xf]
        %v2777 = vld [vmem:[%s16 + $0x178] sm:$0xf]
        %v2778 = vld [vmem:[%s16 + $0x17c] sm:$0xf]
        %v2779 = vld [vmem:[%s16 + $0x180] sm:$0xf]
        %v2780 = vld [vmem:[%s16 + $0x184] sm:$0xf]
        %v2781 = vld [vmem:[%s16 + $0x188] sm:$0xf]
        %v2782 = vld [vmem:[%s16 + $0x18c] sm:$0xf]
        %v2783 = vld [vmem:[%s16 + $0x190] sm:$0xf]
        %v2784 = vld [vmem:[%s16 + $0x194] sm:$0xf]
        %v2785 = vld [vmem:[%s16 + $0x198] sm:$0xf]
        %v2786 = vld [vmem:[%s16 + $0x19c] sm:$0xf]
        %v2787 = vld [vmem:[%s16 + $0x1a0] sm:$0xf]
        %v2788 = vld [vmem:[%s16 + $0x1a4] sm:$0xf]
        %v2789 = vld [vmem:[%s16 + $0x1a8] sm:$0xf]
        %v2790 = vld [vmem:[%s16 + $0x1ac] sm:$0xf]
        %v2791 = vld [vmem:[%s16 + $0x1b0] sm:$0xf]
        %v2792 = vld [vmem:[%s16 + $0x1b4] sm:$0xf]
        %v2793 = vld [vmem:[%s16 + $0x1b8] sm:$0xf]
        %v2794 = vld [vmem:[%s16 + $0x1bc] sm:$0xf]
        %v2795 = vld [vmem:[%s16 + $0x1c0] sm:$0xf]
        %v2796 = vld [vmem:[%s16 + $0x1c4] sm:$0xf]
        %v2797 = vld [vmem:[%s16 + $0x1c8] sm:$0xf]
        %v2798 = vld [vmem:[%s16 + $0x1cc] sm:$0xf]
        %v2799 = vld [vmem:[%s16 + $0x1d0] sm:$0xf]
        %v2800 = vld [vmem:[%s16 + $0x1d4] sm:$0xf]
        %v2801 = vld [vmem:[%s16 + $0x1d8] sm:$0xf]
        %v2802 = vld [vmem:[%s16 + $0x1dc] sm:$0xf]
        %v2803 = vld [vmem:[%s16 + $0x1e0] sm:$0xf]
        %v2804 = vld [vmem:[%s16 + $0x1e4] sm:$0xf]
        %v2805 = vld [vmem:[%s16 + $0x1e8] sm:$0xf]
        %v2806 = vld [vmem:[%s16 + $0x1ec] sm:$0xf]
        %v2807 = vld [vmem:[%s16 + $0x1f0] sm:$0xf]
        %v2808 = vld [vmem:[%s16 + $0x1f4] sm:$0xf]
        %v2809 = vld [vmem:[%s16 + $0x1f8] sm:$0xf]
        %v2810 = vld [vmem:[%s16 + $0x1fc] sm:$0xf]
        %v2811 = vld [vmem:[%s16 + $0x200] sm:$0xf]
        %v2812 = vld [vmem:[%s16 + $0x204] sm:$0xf]
        %v2813 = vld [vmem:[%s16 + $0x208] sm:$0xf]
        %v2814 = vld [vmem:[%s16 + $0x20c] sm:$0xf]
        %v2815 = vld [vmem:[%s16 + $0x210] sm:$0xf]
        %v2816 = vld [vmem:[%s16 + $0x214] sm:$0xf]
        %v2817 = vld [vmem:[%s16 + $0x218] sm:$0xf]
        %v2818 = vld [vmem:[%s16 + $0x21c] sm:$0xf]
        %v2819 = vld [vmem:[%s16 + $0x220] sm:$0xf]
        %v2820 = vld [vmem:[%s16 + $0x224] sm:$0xf]
        %v2821 = vld [vmem:[%s16 + $0x228] sm:$0xf]
        %v2822 = vld [vmem:[%s16 + $0x22c] sm:$0xf]
        %v2823 = vld [vmem:[%s16 + $0x230] sm:$0xf]
        %v2824 = vld [vmem:[%s16 + $0x234] sm:$0xf]
        %v2825 = vld [vmem:[%s16 + $0x238] sm:$0xf]
        %v2826 = vld [vmem:[%s16 + $0x23c] sm:$0xf]
        %v2827 = vld [vmem:[%s16 + $0x240] sm:$0xf]
        %v2828 = vld [vmem:[%s16 + $0x244] sm:$0xf]
        %v2829 = vld [vmem:[%s16 + $0x248] sm:$0xf]
        %v2830 = vld [vmem:[%s16 + $0x24c] sm:$0xf]
        %v2831 = vld [vmem:[%s16 + $0x250] sm:$0xf]
        %v2832 = vld [vmem:[%s16 + $0x254] sm:$0xf]
        %v2833 = vld [vmem:[%s16 + $0x258] sm:$0xf]
        %v2834 = vld [vmem:[%s16 + $0x25c] sm:$0xf]
        %v2835 = vld [vmem:[%s16 + $0x260] sm:$0xf]
        %v2836 = vld [vmem:[%s16 + $0x264] sm:$0xf]
        %v2837 = vld [vmem:[%s16 + $0x268] sm:$0xf]
        %v2838 = vld [vmem:[%s16 + $0x26c] sm:$0xf]
        %v2839 = vld [vmem:[%s16 + $0x270] sm:$0xf]
        %v2840 = vld [vmem:[%s16 + $0x274] sm:$0xf]
        %v2841 = vld [vmem:[%s16 + $0x278] sm:$0xf]
        %v2842 = vld [vmem:[%s16 + $0x27c] sm:$0xf]
        %v2843 = vld [vmem:[%s16 + $0x280] sm:$0xf]
        %v2844 = vld [vmem:[%s16 + $0x284] sm:$0xf]
        %v2845 = vld [vmem:[%s16 + $0x288] sm:$0xf]
        %v2846 = vld [vmem:[%s16 + $0x28c] sm:$0xf]
        %v2847 = vld [vmem:[%s16 + $0x290] sm:$0xf]
        %v2848 = vld [vmem:[%s16 + $0x294] sm:$0xf]
        %v2849 = vld [vmem:[%s16 + $0x298] sm:$0xf]
        %v2850 = vld [vmem:[%s16 + $0x29c] sm:$0xf]
        %v2851 = vld [vmem:[%s16 + $0x2a0] sm:$0xf]
        %v2852 = vld [vmem:[%s16 + $0x2a4] sm:$0xf]
        %v2853 = vld [vmem:[%s16 + $0x2a8] sm:$0xf]
        %v2854 = vld [vmem:[%s16 + $0x2ac] sm:$0xf]
        %v2855 = vld [vmem:[%s16 + $0x2b0] sm:$0xf]
        %v2856 = vld [vmem:[%s16 + $0x2b4] sm:$0xf]
        %v2857 = vld [vmem:[%s16 + $0x2b8] sm:$0xf]
        %v2858 = vld [vmem:[%s16 + $0x2bc] sm:$0xf]
        %v2859 = vld [vmem:[%s16 + $0x2c0] sm:$0xf]
        %v2860 = vld [vmem:[%s16 + $0x2c4] sm:$0xf]
        %v2861 = vld [vmem:[%s16 + $0x2c8] sm:$0xf]
        %v2862 = vld [vmem:[%s16 + $0x2cc] sm:$0xf]
        %v2863 = vld [vmem:[%s16 + $0x2d0] sm:$0xf]
        %v2864 = vld [vmem:[%s16 + $0x2d4] sm:$0xf]
        %v2865 = vld [vmem:[%s16 + $0x2d8] sm:$0xf]
        %v2866 = vld [vmem:[%s16 + $0x2dc] sm:$0xf]
        %v2867 = vld [vmem:[%s16 + $0x2e0] sm:$0xf]
        %v2868 = vld [vmem:[%s16 + $0x2e4] sm:$0xf]
        %v2869 = vld [vmem:[%s16 + $0x2e8] sm:$0xf]
        %v2870 = vld [vmem:[%s16 + $0x2ec] sm:$0xf]
        %v2871 = vld [vmem:[%s16 + $0x2f0] sm:$0xf]
        %v2872 = vld [vmem:[%s16 + $0x2f4] sm:$0xf]
        %v2873 = vld [vmem:[%s16 + $0x2f8] sm:$0xf]
        %v2874 = vld [vmem:[%s16 + $0x2fc] sm:$0xf]
        %v2875 = vld [vmem:[%s16 + $0x300] sm:$0xf]
        %v2876 = vld [vmem:[%s16 + $0x304] sm:$0xf]
        %v2877 = vld [vmem:[%s16 + $0x308] sm:$0xf]
        %v2878 = vld [vmem:[%s16 + $0x30c] sm:$0xf]
        %v2879 = vld [vmem:[%s16 + $0x310] sm:$0xf]
        %v2880 = vld [vmem:[%s16 + $0x314] sm:$0xf]
        %v2881 = vld [vmem:[%s16 + $0x318] sm:$0xf]
        %v2882 = vld [vmem:[%s16 + $0x31c] sm:$0xf]
        %v2883 = vld [vmem:[%s16 + $0x320] sm:$0xf]
        %v2884 = vld [vmem:[%s16 + $0x324] sm:$0xf]
        %v2885 = vld [vmem:[%s16 + $0x328] sm:$0xf]
        %v2886 = vld [vmem:[%s16 + $0x32c] sm:$0xf]
        %v2887 = vld [vmem:[%s16 + $0x330] sm:$0xf]
        %v2888 = vld [vmem:[%s16 + $0x334] sm:$0xf]
        %v2889 = vld [vmem:[%s16 + $0x338] sm:$0xf]
        %v2890 = vld [vmem:[%s16 + $0x33c] sm:$0xf]
        %v2891 = vld [vmem:[%s16 + $0x340] sm:$0xf]
        %v2892 = vld [vmem:[%s16 + $0x344] sm:$0xf]
        %v2893 = vld [vmem:[%s16 + $0x348] sm:$0xf]
        %v2894 = vld [vmem:[%s16 + $0x34c] sm:$0xf]
        %v2895 = vld [vmem:[%s16 + $0x350] sm:$0xf]
        %v2896 = vld [vmem:[%s16 + $0x354] sm:$0xf]
        %v2897 = vld [vmem:[%s16 + $0x358] sm:$0xf]
        %v2898 = vld [vmem:[%s16 + $0x35c] sm:$0xf]
        %v2899 = vld [vmem:[%s16 + $0x360] sm:$0xf]
        %v2900 = vld [vmem:[%s16 + $0x364] sm:$0xf]
        %v2901 = vld [vmem:[%s16 + $0x368] sm:$0xf]
        %v2902 = vld [vmem:[%s16 + $0x36c] sm:$0xf]
        %v2903 = vld [vmem:[%s16 + $0x370] sm:$0xf]
        %v2904 = vld [vmem:[%s16 + $0x374] sm:$0xf]
        %v2905 = vld [vmem:[%s16 + $0x378] sm:$0xf]
        %v2906 = vld [vmem:[%s16 + $0x37c] sm:$0xf]
        %v2907 = vld [vmem:[%s16 + $0x380] sm:$0xf]
        %v2908 = vld [vmem:[%s16 + $0x384] sm:$0xf]
        %v2909 = vld [vmem:[%s16 + $0x388] sm:$0xf]
        %v2910 = vld [vmem:[%s16 + $0x38c] sm:$0xf]
        %v2911 = vld [vmem:[%s16 + $0x390] sm:$0xf]
        %v2912 = vld [vmem:[%s16 + $0x394] sm:$0xf]
        %v2913 = vld [vmem:[%s16 + $0x398] sm:$0xf]
        %v2914 = vld [vmem:[%s16 + $0x39c] sm:$0xf]
        %v2915 = vld [vmem:[%s16 + $0x3a0] sm:$0xf]
        %v2916 = vld [vmem:[%s16 + $0x3a4] sm:$0xf]
        %v2917 = vld [vmem:[%s16 + $0x3a8] sm:$0xf]
        %v2918 = vld [vmem:[%s16 + $0x3ac] sm:$0xf]
        %v2919 = vld [vmem:[%s16 + $0x3b0] sm:$0xf]
        %v2920 = vld [vmem:[%s16 + $0x3b4] sm:$0xf]
        %v2921 = vld [vmem:[%s16 + $0x3b8] sm:$0xf]
        %v2922 = vld [vmem:[%s16 + $0x3bc] sm:$0xf]
        %v2923 = vld [vmem:[%s16 + $0x3c0] sm:$0xf]
        %v2924 = vld [vmem:[%s16 + $0x3c4] sm:$0xf]
        %v2925 = vld [vmem:[%s16 + $0x3c8] sm:$0xf]
        %v2926 = vld [vmem:[%s16 + $0x3cc] sm:$0xf]
        %v2927 = vld [vmem:[%s16 + $0x3d0] sm:$0xf]
        %v2928 = vld [vmem:[%s16 + $0x3d4] sm:$0xf]
        %v2929 = vld [vmem:[%s16 + $0x3d8] sm:$0xf]
        %v2930 = vld [vmem:[%s16 + $0x3dc] sm:$0xf]
        %v2931 = vld [vmem:[%s16 + $0x3e0] sm:$0xf]
        %v2932 = vld [vmem:[%s16 + $0x3e4] sm:$0xf]
        %v2933 = vld [vmem:[%s16 + $0x3e8] sm:$0xf]
        %v2934 = vld [vmem:[%s16 + $0x3ec] sm:$0xf]
        %v2935 = vld [vmem:[%s16 + $0x3f0] sm:$0xf]
        %v2936 = vld [vmem:[%s16 + $0x3f4] sm:$0xf]
        %v2937 = vld [vmem:[%s16 + $0x3f8] sm:$0xf]
        %v2938 = vld [vmem:[%s16 + $0x3fc] sm:$0xf]
        %v2939 = vld [vmem:[%s17] sm:$0x1]
        %v2941 = vlaneseq
        %v2942 = vshrl.u32 %v2941, 7
        %v2943 = vsub.s32 0, %v2942
        %v2944 = vrot.slane %v2939, %v2943
        %v3202 = vunpack.c.l.b16 %v2683
        %v3203 = vunpack.c.l.b16 %v2684
        %v3204 = vunpack.c.l.b16 %v2685
        %v3205 = vunpack.c.l.b16 %v2686
        %v3206 = vunpack.c.l.b16 %v2687
        %v3207 = vunpack.c.l.b16 %v2688
        %v3208 = vunpack.c.l.b16 %v2689
        %v3209 = vunpack.c.l.b16 %v2690
        %v3210 = vunpack.c.l.b16 %v2691
        %v3211 = vunpack.c.l.b16 %v2692
        %v3212 = vunpack.c.l.b16 %v2693
        %v3213 = vunpack.c.l.b16 %v2694
        %v3214 = vunpack.c.l.b16 %v2695
        %v3215 = vunpack.c.l.b16 %v2696
        %v3216 = vunpack.c.l.b16 %v2697
        %v3217 = vunpack.c.l.b16 %v2698
        %v3218 = vunpack.c.l.b16 %v2699
        %v3219 = vunpack.c.l.b16 %v2700
        %v3220 = vunpack.c.l.b16 %v2701
        %v3221 = vunpack.c.l.b16 %v2702
        %v3222 = vunpack.c.l.b16 %v2703
        %v3223 = vunpack.c.l.b16 %v2704
        %v3224 = vunpack.c.l.b16 %v2705
        %v3225 = vunpack.c.l.b16 %v2706
        %v3226 = vunpack.c.l.b16 %v2707
        %v3227 = vunpack.c.l.b16 %v2708
        %v3228 = vunpack.c.l.b16 %v2709
        %v3229 = vunpack.c.l.b16 %v2710
        %v3230 = vunpack.c.l.b16 %v2711
        %v3231 = vunpack.c.l.b16 %v2712
        %v3232 = vunpack.c.l.b16 %v2713
        %v3233 = vunpack.c.l.b16 %v2714
        %v3234 = vunpack.c.l.b16 %v2715
        %v3235 = vunpack.c.l.b16 %v2716
        %v3236 = vunpack.c.l.b16 %v2717
        %v3237 = vunpack.c.l.b16 %v2718
        %v3238 = vunpack.c.l.b16 %v2719
        %v3239 = vunpack.c.l.b16 %v2720
        %v3240 = vunpack.c.l.b16 %v2721
        %v3241 = vunpack.c.l.b16 %v2722
        %v3242 = vunpack.c.l.b16 %v2723
        %v3243 = vunpack.c.l.b16 %v2724
        %v3244 = vunpack.c.l.b16 %v2725
        %v3245 = vunpack.c.l.b16 %v2726
        %v3246 = vunpack.c.l.b16 %v2727
        %v3247 = vunpack.c.l.b16 %v2728
        %v3248 = vunpack.c.l.b16 %v2729
        %v3249 = vunpack.c.l.b16 %v2730
        %v3250 = vunpack.c.l.b16 %v2731
        %v3251 = vunpack.c.l.b16 %v2732
        %v3252 = vunpack.c.l.b16 %v2733
        %v3253 = vunpack.c.l.b16 %v2734
        %v3254 = vunpack.c.l.b16 %v2735
        %v3255 = vunpack.c.l.b16 %v2736
        %v3256 = vunpack.c.l.b16 %v2737
        %v3257 = vunpack.c.l.b16 %v2738
        %v3258 = vunpack.c.l.b16 %v2739
        %v3259 = vunpack.c.l.b16 %v2740
        %v3260 = vunpack.c.l.b16 %v2741
        %v3261 = vunpack.c.l.b16 %v2742
        %v3262 = vunpack.c.l.b16 %v2743
        %v3263 = vunpack.c.l.b16 %v2744
        %v3264 = vunpack.c.l.b16 %v2745
        %v3265 = vunpack.c.l.b16 %v2746
        %v3266 = vunpack.c.l.b16 %v2747
        %v3267 = vunpack.c.l.b16 %v2748
        %v3268 = vunpack.c.l.b16 %v2749
        %v3269 = vunpack.c.l.b16 %v2750
        %v3270 = vunpack.c.l.b16 %v2751
        %v3271 = vunpack.c.l.b16 %v2752
        %v3272 = vunpack.c.l.b16 %v2753
        %v3273 = vunpack.c.l.b16 %v2754
        %v3274 = vunpack.c.l.b16 %v2755
        %v3275 = vunpack.c.l.b16 %v2756
        %v3276 = vunpack.c.l.b16 %v2757
        %v3277 = vunpack.c.l.b16 %v2758
        %v3278 = vunpack.c.l.b16 %v2759
        %v3279 = vunpack.c.l.b16 %v2760
        %v3280 = vunpack.c.l.b16 %v2761
        %v3281 = vunpack.c.l.b16 %v2762
        %v3282 = vunpack.c.l.b16 %v2763
        %v3283 = vunpack.c.l.b16 %v2764
        %v3284 = vunpack.c.l.b16 %v2765
        %v3285 = vunpack.c.l.b16 %v2766
        %v3286 = vunpack.c.l.b16 %v2767
        %v3287 = vunpack.c.l.b16 %v2768
        %v3288 = vunpack.c.l.b16 %v2769
        %v3289 = vunpack.c.l.b16 %v2770
        %v3290 = vunpack.c.l.b16 %v2771
        %v3291 = vunpack.c.l.b16 %v2772
        %v3292 = vunpack.c.l.b16 %v2773
        %v3293 = vunpack.c.l.b16 %v2774
        %v3294 = vunpack.c.l.b16 %v2775
        %v3295 = vunpack.c.l.b16 %v2776
        %v3296 = vunpack.c.l.b16 %v2777
        %v3297 = vunpack.c.l.b16 %v2778
        %v3298 = vunpack.c.l.b16 %v2779
        %v3299 = vunpack.c.l.b16 %v2780
        %v3300 = vunpack.c.l.b16 %v2781
        %v3301 = vunpack.c.l.b16 %v2782
        %v3302 = vunpack.c.l.b16 %v2783
        %v3303 = vunpack.c.l.b16 %v2784
        %v3304 = vunpack.c.l.b16 %v2785
        %v3305 = vunpack.c.l.b16 %v2786
        %v3306 = vunpack.c.l.b16 %v2787
        %v3307 = vunpack.c.l.b16 %v2788
        %v3308 = vunpack.c.l.b16 %v2789
        %v3309 = vunpack.c.l.b16 %v2790
        %v3310 = vunpack.c.l.b16 %v2791
        %v3311 = vunpack.c.l.b16 %v2792
        %v3312 = vunpack.c.l.b16 %v2793
        %v3313 = vunpack.c.l.b16 %v2794
        %v3314 = vunpack.c.l.b16 %v2795
        %v3315 = vunpack.c.l.b16 %v2796
        %v3316 = vunpack.c.l.b16 %v2797
        %v3317 = vunpack.c.l.b16 %v2798
        %v3318 = vunpack.c.l.b16 %v2799
        %v3319 = vunpack.c.l.b16 %v2800
        %v3320 = vunpack.c.l.b16 %v2801
        %v3321 = vunpack.c.l.b16 %v2802
        %v3322 = vunpack.c.l.b16 %v2803
        %v3323 = vunpack.c.l.b16 %v2804
        %v3324 = vunpack.c.l.b16 %v2805
        %v3325 = vunpack.c.l.b16 %v2806
        %v3326 = vunpack.c.l.b16 %v2807
        %v3327 = vunpack.c.l.b16 %v2808
        %v3328 = vunpack.c.l.b16 %v2809
        %v3329 = vunpack.c.l.b16 %v2810
        %v3330 = vunpack.c.l.b16 %v2811
        %v3331 = vunpack.c.l.b16 %v2812
        %v3332 = vunpack.c.l.b16 %v2813
        %v3333 = vunpack.c.l.b16 %v2814
        %v3334 = vunpack.c.l.b16 %v2815
        %v3335 = vunpack.c.l.b16 %v2816
        %v3336 = vunpack.c.l.b16 %v2817
        %v3337 = vunpack.c.l.b16 %v2818
        %v3338 = vunpack.c.l.b16 %v2819
        %v3339 = vunpack.c.l.b16 %v2820
        %v3340 = vunpack.c.l.b16 %v2821
        %v3341 = vunpack.c.l.b16 %v2822
        %v3342 = vunpack.c.l.b16 %v2823
        %v3343 = vunpack.c.l.b16 %v2824
        %v3344 = vunpack.c.l.b16 %v2825
        %v3345 = vunpack.c.l.b16 %v2826
        %v3346 = vunpack.c.l.b16 %v2827
        %v3347 = vunpack.c.l.b16 %v2828
        %v3348 = vunpack.c.l.b16 %v2829
        %v3349 = vunpack.c.l.b16 %v2830
        %v3350 = vunpack.c.l.b16 %v2831
        %v3351 = vunpack.c.l.b16 %v2832
        %v3352 = vunpack.c.l.b16 %v2833
        %v3353 = vunpack.c.l.b16 %v2834
        %v3354 = vunpack.c.l.b16 %v2835
        %v3355 = vunpack.c.l.b16 %v2836
        %v3356 = vunpack.c.l.b16 %v2837
        %v3357 = vunpack.c.l.b16 %v2838
        %v3358 = vunpack.c.l.b16 %v2839
        %v3359 = vunpack.c.l.b16 %v2840
        %v3360 = vunpack.c.l.b16 %v2841
        %v3361 = vunpack.c.l.b16 %v2842
        %v3362 = vunpack.c.l.b16 %v2843
        %v3363 = vunpack.c.l.b16 %v2844
        %v3364 = vunpack.c.l.b16 %v2845
        %v3365 = vunpack.c.l.b16 %v2846
        %v3366 = vunpack.c.l.b16 %v2847
        %v3367 = vunpack.c.l.b16 %v2848
        %v3368 = vunpack.c.l.b16 %v2849
        %v3369 = vunpack.c.l.b16 %v2850
        %v3370 = vunpack.c.l.b16 %v2851
        %v3371 = vunpack.c.l.b16 %v2852
        %v3372 = vunpack.c.l.b16 %v2853
        %v3373 = vunpack.c.l.b16 %v2854
        %v3374 = vunpack.c.l.b16 %v2855
        %v3375 = vunpack.c.l.b16 %v2856
        %v3376 = vunpack.c.l.b16 %v2857
        %v3377 = vunpack.c.l.b16 %v2858
        %v3378 = vunpack.c.l.b16 %v2859
        %v3379 = vunpack.c.l.b16 %v2860
        %v3380 = vunpack.c.l.b16 %v2861
        %v3381 = vunpack.c.l.b16 %v2862
        %v3382 = vunpack.c.l.b16 %v2863
        %v3383 = vunpack.c.l.b16 %v2864
        %v3384 = vunpack.c.l.b16 %v2865
        %v3385 = vunpack.c.l.b16 %v2866
        %v3386 = vunpack.c.l.b16 %v2867
        %v3387 = vunpack.c.l.b16 %v2868
        %v3388 = vunpack.c.l.b16 %v2869
        %v3389 = vunpack.c.l.b16 %v2870
        %v3390 = vunpack.c.l.b16 %v2871
        %v3391 = vunpack.c.l.b16 %v2872
        %v3392 = vunpack.c.l.b16 %v2873
        %v3393 = vunpack.c.l.b16 %v2874
        %v3394 = vunpack.c.l.b16 %v2875
        %v3395 = vunpack.c.l.b16 %v2876
        %v3396 = vunpack.c.l.b16 %v2877
        %v3397 = vunpack.c.l.b16 %v2878
        %v3398 = vunpack.c.l.b16 %v2879
        %v3399 = vunpack.c.l.b16 %v2880
        %v3400 = vunpack.c.l.b16 %v2881
        %v3401 = vunpack.c.l.b16 %v2882
        %v3402 = vunpack.c.l.b16 %v2883
        %v3403 = vunpack.c.l.b16 %v2884
        %v3404 = vunpack.c.l.b16 %v2885
        %v3405 = vunpack.c.l.b16 %v2886
        %v3406 = vunpack.c.l.b16 %v2887
        %v3407 = vunpack.c.l.b16 %v2888
        %v3408 = vunpack.c.l.b16 %v2889
        %v3409 = vunpack.c.l.b16 %v2890
        %v3410 = vunpack.c.l.b16 %v2891
        %v3411 = vunpack.c.l.b16 %v2892
        %v3412 = vunpack.c.l.b16 %v2893
        %v3413 = vunpack.c.l.b16 %v2894
        %v3414 = vunpack.c.l.b16 %v2895
        %v3415 = vunpack.c.l.b16 %v2896
        %v3416 = vunpack.c.l.b16 %v2897
        %v3417 = vunpack.c.l.b16 %v2898
        %v3418 = vunpack.c.l.b16 %v2899
        %v3419 = vunpack.c.l.b16 %v2900
        %v3420 = vunpack.c.l.b16 %v2901
        %v3421 = vunpack.c.l.b16 %v2902
        %v3422 = vunpack.c.l.b16 %v2903
        %v3423 = vunpack.c.l.b16 %v2904
        %v3424 = vunpack.c.l.b16 %v2905
        %v3425 = vunpack.c.l.b16 %v2906
        %v3426 = vunpack.c.l.b16 %v2907
        %v3427 = vunpack.c.l.b16 %v2908
        %v3428 = vunpack.c.l.b16 %v2909
        %v3429 = vunpack.c.l.b16 %v2910
        %v3430 = vunpack.c.l.b16 %v2911
        %v3431 = vunpack.c.l.b16 %v2912
        %v3432 = vunpack.c.l.b16 %v2913
        %v3433 = vunpack.c.l.b16 %v2914
        %v3434 = vunpack.c.l.b16 %v2915
        %v3435 = vunpack.c.l.b16 %v2916
        %v3436 = vunpack.c.l.b16 %v2917
        %v3437 = vunpack.c.l.b16 %v2918
        %v3438 = vunpack.c.l.b16 %v2919
        %v3439 = vunpack.c.l.b16 %v2920
        %v3440 = vunpack.c.l.b16 %v2921
        %v3441 = vunpack.c.l.b16 %v2922
        %v3442 = vunpack.c.l.b16 %v2923
        %v3443 = vunpack.c.l.b16 %v2924
        %v3444 = vunpack.c.l.b16 %v2925
        %v3445 = vunpack.c.l.b16 %v2926
        %v3446 = vunpack.c.l.b16 %v2927
        %v3447 = vunpack.c.l.b16 %v2928
        %v3448 = vunpack.c.l.b16 %v2929
        %v3449 = vunpack.c.l.b16 %v2930
        %v3450 = vunpack.c.l.b16 %v2931
        %v3451 = vunpack.c.l.b16 %v2932
        %v3452 = vunpack.c.l.b16 %v2933
        %v3453 = vunpack.c.l.b16 %v2934
        %v3454 = vunpack.c.l.b16 %v2935
        %v3455 = vunpack.c.l.b16 %v2936
        %v3456 = vunpack.c.l.b16 %v2937
        %v3457 = vunpack.c.l.b16 %v2938
        %v3458 = vpack.c.b16 %v3203, %v3202
        %v3459 = vpack.c.b16 %v3205, %v3204
        %v3460 = vpack.c.b16 %v3207, %v3206
        %v3461 = vpack.c.b16 %v3209, %v3208
        %v3462 = vpack.c.b16 %v3211, %v3210
        %v3463 = vpack.c.b16 %v3213, %v3212
        %v3464 = vpack.c.b16 %v3215, %v3214
        %v3465 = vpack.c.b16 %v3217, %v3216
        %v3466 = vpack.c.b16 %v3219, %v3218
        %v3467 = vpack.c.b16 %v3221, %v3220
        %v3468 = vpack.c.b16 %v3223, %v3222
        %v3469 = vpack.c.b16 %v3225, %v3224
        %v3470 = vpack.c.b16 %v3227, %v3226
        %v3471 = vpack.c.b16 %v3229, %v3228
        %v3472 = vpack.c.b16 %v3231, %v3230
        %v3473 = vpack.c.b16 %v3233, %v3232
        %v3474 = vpack.c.b16 %v3235, %v3234
        %v3475 = vpack.c.b16 %v3237, %v3236
        %v3476 = vpack.c.b16 %v3239, %v3238
        %v3477 = vpack.c.b16 %v3241, %v3240
        %v3478 = vpack.c.b16 %v3243, %v3242
        %v3479 = vpack.c.b16 %v3245, %v3244
        %v3480 = vpack.c.b16 %v3247, %v3246
        %v3481 = vpack.c.b16 %v3249, %v3248
        %v3482 = vpack.c.b16 %v3251, %v3250
        %v3483 = vpack.c.b16 %v3253, %v3252
        %v3484 = vpack.c.b16 %v3255, %v3254
        %v3485 = vpack.c.b16 %v3257, %v3256
        %v3486 = vpack.c.b16 %v3259, %v3258
        %v3487 = vpack.c.b16 %v3261, %v3260
        %v3488 = vpack.c.b16 %v3263, %v3262
        %v3489 = vpack.c.b16 %v3265, %v3264
        %v3490 = vpack.c.b16 %v3267, %v3266
        %v3491 = vpack.c.b16 %v3269, %v3268
        %v3492 = vpack.c.b16 %v3271, %v3270
        %v3493 = vpack.c.b16 %v3273, %v3272
        %v3494 = vpack.c.b16 %v3275, %v3274
        %v3495 = vpack.c.b16 %v3277, %v3276
        %v3496 = vpack.c.b16 %v3279, %v3278
        %v3497 = vpack.c.b16 %v3281, %v3280
        %v3498 = vpack.c.b16 %v3283, %v3282
        %v3499 = vpack.c.b16 %v3285, %v3284
        %v3500 = vpack.c.b16 %v3287, %v3286
        %v3501 = vpack.c.b16 %v3289, %v3288
        %v3502 = vpack.c.b16 %v3291, %v3290
        %v3503 = vpack.c.b16 %v3293, %v3292
        %v3504 = vpack.c.b16 %v3295, %v3294
        %v3505 = vpack.c.b16 %v3297, %v3296
        %v3506 = vpack.c.b16 %v3299, %v3298
        %v3507 = vpack.c.b16 %v3301, %v3300
        %v3508 = vpack.c.b16 %v3303, %v3302
        %v3509 = vpack.c.b16 %v3305, %v3304
        %v3510 = vpack.c.b16 %v3307, %v3306
        %v3511 = vpack.c.b16 %v3309, %v3308
        %v3512 = vpack.c.b16 %v3311, %v3310
        %v3513 = vpack.c.b16 %v3313, %v3312
        %v3514 = vpack.c.b16 %v3315, %v3314
        %v3515 = vpack.c.b16 %v3317, %v3316
        %v3516 = vpack.c.b16 %v3319, %v3318
        %v3517 = vpack.c.b16 %v3321, %v3320
        %v3518 = vpack.c.b16 %v3323, %v3322
        %v3519 = vpack.c.b16 %v3325, %v3324
        %v3520 = vpack.c.b16 %v3327, %v3326
        %v3521 = vpack.c.b16 %v3329, %v3328
        %v3522 = vpack.c.b16 %v3331, %v3330
        %v3523 = vpack.c.b16 %v3333, %v3332
        %v3524 = vpack.c.b16 %v3335, %v3334
        %v3525 = vpack.c.b16 %v3337, %v3336
        %v3526 = vpack.c.b16 %v3339, %v3338
        %v3527 = vpack.c.b16 %v3341, %v3340
        %v3528 = vpack.c.b16 %v3343, %v3342
        %v3529 = vpack.c.b16 %v3345, %v3344
        %v3530 = vpack.c.b16 %v3347, %v3346
        %v3531 = vpack.c.b16 %v3349, %v3348
        %v3532 = vpack.c.b16 %v3351, %v3350
        %v3533 = vpack.c.b16 %v3353, %v3352
        %v3534 = vpack.c.b16 %v3355, %v3354
        %v3535 = vpack.c.b16 %v3357, %v3356
        %v3536 = vpack.c.b16 %v3359, %v3358
        %v3537 = vpack.c.b16 %v3361, %v3360
        %v3538 = vpack.c.b16 %v3363, %v3362
        %v3539 = vpack.c.b16 %v3365, %v3364
        %v3540 = vpack.c.b16 %v3367, %v3366
        %v3541 = vpack.c.b16 %v3369, %v3368
        %v3542 = vpack.c.b16 %v3371, %v3370
        %v3543 = vpack.c.b16 %v3373, %v3372
        %v3544 = vpack.c.b16 %v3375, %v3374
        %v3545 = vpack.c.b16 %v3377, %v3376
        %v3546 = vpack.c.b16 %v3379, %v3378
        %v3547 = vpack.c.b16 %v3381, %v3380
        %v3548 = vpack.c.b16 %v3383, %v3382
        %v3549 = vpack.c.b16 %v3385, %v3384
        %v3550 = vpack.c.b16 %v3387, %v3386
        %v3551 = vpack.c.b16 %v3389, %v3388
        %v3552 = vpack.c.b16 %v3391, %v3390
        %v3553 = vpack.c.b16 %v3393, %v3392
        %v3554 = vpack.c.b16 %v3395, %v3394
        %v3555 = vpack.c.b16 %v3397, %v3396
        %v3556 = vpack.c.b16 %v3399, %v3398
        %v3557 = vpack.c.b16 %v3401, %v3400
        %v3558 = vpack.c.b16 %v3403, %v3402
        %v3559 = vpack.c.b16 %v3405, %v3404
        %v3560 = vpack.c.b16 %v3407, %v3406
        %v3561 = vpack.c.b16 %v3409, %v3408
        %v3562 = vpack.c.b16 %v3411, %v3410
        %v3563 = vpack.c.b16 %v3413, %v3412
        %v3564 = vpack.c.b16 %v3415, %v3414
        %v3565 = vpack.c.b16 %v3417, %v3416
        %v3566 = vpack.c.b16 %v3419, %v3418
        %v3567 = vpack.c.b16 %v3421, %v3420
        %v3568 = vpack.c.b16 %v3423, %v3422
        %v3569 = vpack.c.b16 %v3425, %v3424
        %v3570 = vpack.c.b16 %v3427, %v3426
        %v3571 = vpack.c.b16 %v3429, %v3428
        %v3572 = vpack.c.b16 %v3431, %v3430
        %v3573 = vpack.c.b16 %v3433, %v3432
        %v3574 = vpack.c.b16 %v3435, %v3434
        %v3575 = vpack.c.b16 %v3437, %v3436
        %v3576 = vpack.c.b16 %v3439, %v3438
        %v3577 = vpack.c.b16 %v3441, %v3440
        %v3578 = vpack.c.b16 %v3443, %v3442
        %v3579 = vpack.c.b16 %v3445, %v3444
        %v3580 = vpack.c.b16 %v3447, %v3446
        %v3581 = vpack.c.b16 %v3449, %v3448
        %v3582 = vpack.c.b16 %v3451, %v3450
        %v3583 = vpack.c.b16 %v3453, %v3452
        %v3584 = vpack.c.b16 %v3455, %v3454
        %v3585 = vpack.c.b16 %v3457, %v3456
        %3714 = vmatprep.subr.bf16.mxu0 0
        %3715 = vmatpush1.bf16.msra.mxu0 %v3458
        %3716 = vmatprep.subr.bf16.mxu0 0
        %3717 = vmatpush1.bf16.msra.mxu0 %v3459
        %3718 = vmatprep.subr.bf16.mxu0 0
        %3719 = vmatpush1.bf16.msra.mxu0 %v3460
        %3720 = vmatprep.subr.bf16.mxu0 0
        %3721 = vmatpush1.bf16.msra.mxu0 %v3461
        %3722 = vmatprep.subr.bf16.mxu0 0
        %3723 = vmatpush1.bf16.msra.mxu0 %v3462
        %3724 = vmatprep.subr.bf16.mxu0 0
        %3725 = vmatpush1.bf16.msra.mxu0 %v3463
        %3726 = vmatprep.subr.bf16.mxu0 0
        %3727 = vmatpush1.bf16.msra.mxu0 %v3464
        %3728 = vmatprep.subr.bf16.mxu0 0
        %3729 = vmatpush1.bf16.msra.mxu0 %v3465
        %3730 = vmatprep.subr.bf16.mxu0 0
        %3731 = vmatpush1.bf16.msra.mxu0 %v3466
        %3732 = vmatprep.subr.bf16.mxu0 0
        %3733 = vmatpush1.bf16.msra.mxu0 %v3467
        %3734 = vmatprep.subr.bf16.mxu0 0
        %3735 = vmatpush1.bf16.msra.mxu0 %v3468
        %3736 = vmatprep.subr.bf16.mxu0 0
        %3737 = vmatpush1.bf16.msra.mxu0 %v3469
        %3738 = vmatprep.subr.bf16.mxu0 0
        %3739 = vmatpush1.bf16.msra.mxu0 %v3470
        %3740 = vmatprep.subr.bf16.mxu0 0
        %3741 = vmatpush1.bf16.msra.mxu0 %v3471
        %3742 = vmatprep.subr.bf16.mxu0 0
        %3743 = vmatpush1.bf16.msra.mxu0 %v3472
        %3744 = vmatprep.subr.bf16.mxu0 0
        %3745 = vmatpush1.bf16.msra.mxu0 %v3473
        %3746 = vmatprep.mubr.bf16.mxu0 %v2668
        %3747 = vmatmul.mubr.bf16.gmra.mrb[0].mxu0 %v2667
        %v3748 = vpop.f32.mrb[0].mxu0
        %v3749 = vadd.f32 %v2944, %v3748
        %v3750 = vpop.f32.mrb[0].mxu0
        %v3751 = vpop.f32.mrb[0].mxu0
        %v3752 = vpop.f32.mrb[0].mxu0
        %3753 = vdwg.mxu0
        %3754 = vmatprep.subr.bf16.mxu0 0
        %3755 = vmatpush1.bf16.msra.mxu0 %v3474
        %3756 = vmatprep.subr.bf16.mxu0 0
        %3757 = vmatpush1.bf16.msra.mxu0 %v3475
        %3758 = vmatprep.subr.bf16.mxu0 0
        %3759 = vmatpush1.bf16.msra.mxu0 %v3476
        %3760 = vmatprep.subr.bf16.mxu0 0
        %3761 = vmatpush1.bf16.msra.mxu0 %v3477
        %3762 = vmatprep.subr.bf16.mxu0 0
        %3763 = vmatpush1.bf16.msra.mxu0 %v3478
        %3764 = vmatprep.subr.bf16.mxu0 0
        %3765 = vmatpush1.bf16.msra.mxu0 %v3479
        %3766 = vmatprep.subr.bf16.mxu0 0
        %3767 = vmatpush1.bf16.msra.mxu0 %v3480
        %3768 = vmatprep.subr.bf16.mxu0 0
        %3769 = vmatpush1.bf16.msra.mxu0 %v3481
        %3770 = vmatprep.subr.bf16.mxu0 0
        %3771 = vmatpush1.bf16.msra.mxu0 %v3482
        %3772 = vmatprep.subr.bf16.mxu0 0
        %3773 = vmatpush1.bf16.msra.mxu0 %v3483
        %3774 = vmatprep.subr.bf16.mxu0 0
        %3775 = vmatpush1.bf16.msra.mxu0 %v3484
        %3776 = vmatprep.subr.bf16.mxu0 0
        %3777 = vmatpush1.bf16.msra.mxu0 %v3485
        %3778 = vmatprep.subr.bf16.mxu0 0
        %3779 = vmatpush1.bf16.msra.mxu0 %v3486
        %3780 = vmatprep.subr.bf16.mxu0 0
        %3781 = vmatpush1.bf16.msra.mxu0 %v3487
        %3782 = vmatprep.subr.bf16.mxu0 0
        %3783 = vmatpush1.bf16.msra.mxu0 %v3488
        %3784 = vmatprep.subr.bf16.mxu0 0
        %3785 = vmatpush1.bf16.msra.mxu0 %v3489
        %3786 = vmatprep.mubr.bf16.mxu0 %v2670
        %3787 = vmatmul.mubr.bf16.gmra.mrb[0].mxu0 %v2669
        %v3788 = vpop.f32.mrb[0].mxu0
        %v3789 = vadd.f32 %v3749, %v3788
        %v3790 = vpop.f32.mrb[0].mxu0
        %v3791 = vpop.f32.mrb[0].mxu0
        %v3792 = vpop.f32.mrb[0].mxu0
        %3793 = vdwg.mxu0
        %3794 = vmatprep.subr.bf16.mxu0 0
        %3795 = vmatpush1.bf16.msra.mxu0 %v3490
        %3796 = vmatprep.subr.bf16.mxu0 0
        %3797 = vmatpush1.bf16.msra.mxu0 %v3491
        %3798 = vmatprep.subr.bf16.mxu0 0
        %3799 = vmatpush1.bf16.msra.mxu0 %v3492
        %3800 = vmatprep.subr.bf16.mxu0 0
        %3801 = vmatpush1.bf16.msra.mxu0 %v3493
        %3802 = vmatprep.subr.bf16.mxu0 0
        %3803 = vmatpush1.bf16.msra.mxu0 %v3494
        %3804 = vmatprep.subr.bf16.mxu0 0
        %3805 = vmatpush1.bf16.msra.mxu0 %v3495
        %3806 = vmatprep.subr.bf16.mxu0 0
        %3807 = vmatpush1.bf16.msra.mxu0 %v3496
        %3808 = vmatprep.subr.bf16.mxu0 0
        %3809 = vmatpush1.bf16.msra.mxu0 %v3497
        %3810 = vmatprep.subr.bf16.mxu0 0
        %3811 = vmatpush1.bf16.msra.mxu0 %v3498
        %3812 = vmatprep.subr.bf16.mxu0 0
        %3813 = vmatpush1.bf16.msra.mxu0 %v3499
        %3814 = vmatprep.subr.bf16.mxu0 0
        %3815 = vmatpush1.bf16.msra.mxu0 %v3500
        %3816 = vmatprep.subr.bf16.mxu0 0
        %3817 = vmatpush1.bf16.msra.mxu0 %v3501
        %3818 = vmatprep.subr.bf16.mxu0 0
        %3819 = vmatpush1.bf16.msra.mxu0 %v3502
        %3820 = vmatprep.subr.bf16.mxu0 0
        %3821 = vmatpush1.bf16.msra.mxu0 %v3503
        %3822 = vmatprep.subr.bf16.mxu0 0
        %3823 = vmatpush1.bf16.msra.mxu0 %v3504
        %3824 = vmatprep.subr.bf16.mxu0 0
        %3825 = vmatpush1.bf16.msra.mxu0 %v3505
        %3826 = vmatprep.mubr.bf16.mxu0 %v2672
        %3827 = vmatmul.mubr.bf16.gmra.mrb[0].mxu0 %v2671
        %v3828 = vpop.f32.mrb[0].mxu0
        %v3829 = vadd.f32 %v3789, %v3828
        %v3830 = vpop.f32.mrb[0].mxu0
        %v3831 = vpop.f32.mrb[0].mxu0
        %v3832 = vpop.f32.mrb[0].mxu0
        %3833 = vdwg.mxu0
        %3834 = vmatprep.subr.bf16.mxu0 0
        %3835 = vmatpush1.bf16.msra.mxu0 %v3506
        %3836 = vmatprep.subr.bf16.mxu0 0
        %3837 = vmatpush1.bf16.msra.mxu0 %v3507
        %3838 = vmatprep.subr.bf16.mxu0 0
        %3839 = vmatpush1.bf16.msra.mxu0 %v3508
        %3840 = vmatprep.subr.bf16.mxu0 0
        %3841 = vmatpush1.bf16.msra.mxu0 %v3509
        %3842 = vmatprep.subr.bf16.mxu0 0
        %3843 = vmatpush1.bf16.msra.mxu0 %v3510
        %3844 = vmatprep.subr.bf16.mxu0 0
        %3845 = vmatpush1.bf16.msra.mxu0 %v3511
        %3846 = vmatprep.subr.bf16.mxu0 0
        %3847 = vmatpush1.bf16.msra.mxu0 %v3512
        %3848 = vmatprep.subr.bf16.mxu0 0
        %3849 = vmatpush1.bf16.msra.mxu0 %v3513
        %3850 = vmatprep.subr.bf16.mxu0 0
        %3851 = vmatpush1.bf16.msra.mxu0 %v3514
        %3852 = vmatprep.subr.bf16.mxu0 0
        %3853 = vmatpush1.bf16.msra.mxu0 %v3515
        %3854 = vmatprep.subr.bf16.mxu0 0
        %3855 = vmatpush1.bf16.msra.mxu0 %v3516
        %3856 = vmatprep.subr.bf16.mxu0 0
        %3857 = vmatpush1.bf16.msra.mxu0 %v3517
        %3858 = vmatprep.subr.bf16.mxu0 0
        %3859 = vmatpush1.bf16.msra.mxu0 %v3518
        %3860 = vmatprep.subr.bf16.mxu0 0
        %3861 = vmatpush1.bf16.msra.mxu0 %v3519
        %3862 = vmatprep.subr.bf16.mxu0 0
        %3863 = vmatpush1.bf16.msra.mxu0 %v3520
        %3864 = vmatprep.subr.bf16.mxu0 0
        %3865 = vmatpush1.bf16.msra.mxu0 %v3521
        %3866 = vmatprep.mubr.bf16.mxu0 %v2674
        %3867 = vmatmul.mubr.bf16.gmra.mrb[0].mxu0 %v2673
        %v3868 = vpop.f32.mrb[0].mxu0
        %v3869 = vadd.f32 %v3829, %v3868
        %v3870 = vpop.f32.mrb[0].mxu0
        %v3871 = vpop.f32.mrb[0].mxu0
        %v3872 = vpop.f32.mrb[0].mxu0
        %3873 = vdwg.mxu0
        %3874 = vmatprep.subr.bf16.mxu0 0
        %3875 = vmatpush1.bf16.msra.mxu0 %v3522
        %3876 = vmatprep.subr.bf16.mxu0 0
        %3877 = vmatpush1.bf16.msra.mxu0 %v3523
        %3878 = vmatprep.subr.bf16.mxu0 0
        %3879 = vmatpush1.bf16.msra.mxu0 %v3524
        %3880 = vmatprep.subr.bf16.mxu0 0
        %3881 = vmatpush1.bf16.msra.mxu0 %v3525
        %3882 = vmatprep.subr.bf16.mxu0 0
        %3883 = vmatpush1.bf16.msra.mxu0 %v3526
        %3884 = vmatprep.subr.bf16.mxu0 0
        %3885 = vmatpush1.bf16.msra.mxu0 %v3527
        %3886 = vmatprep.subr.bf16.mxu0 0
        %3887 = vmatpush1.bf16.msra.mxu0 %v3528
        %3888 = vmatprep.subr.bf16.mxu0 0
        %3889 = vmatpush1.bf16.msra.mxu0 %v3529
        %3890 = vmatprep.subr.bf16.mxu0 0
        %3891 = vmatpush1.bf16.msra.mxu0 %v3530
        %3892 = vmatprep.subr.bf16.mxu0 0
        %3893 = vmatpush1.bf16.msra.mxu0 %v3531
        %3894 = vmatprep.subr.bf16.mxu0 0
        %3895 = vmatpush1.bf16.msra.mxu0 %v3532
        %3896 = vmatprep.subr.bf16.mxu0 0
        %3897 = vmatpush1.bf16.msra.mxu0 %v3533
        %3898 = vmatprep.subr.bf16.mxu0 0
        %3899 = vmatpush1.bf16.msra.mxu0 %v3534
        %3900 = vmatprep.subr.bf16.mxu0 0
        %3901 = vmatpush1.bf16.msra.mxu0 %v3535
        %3902 = vmatprep.subr.bf16.mxu0 0
        %3903 = vmatpush1.bf16.msra.mxu0 %v3536
        %3904 = vmatprep.subr.bf16.mxu0 0
        %3905 = vmatpush1.bf16.msra.mxu0 %v3537
        %3906 = vmatprep.mubr.bf16.mxu0 %v2676
        %3907 = vmatmul.mubr.bf16.gmra.mrb[0].mxu0 %v2675
        %v3908 = vpop.f32.mrb[0].mxu0
        %v3909 = vadd.f32 %v3869, %v3908
        %v3910 = vpop.f32.mrb[0].mxu0
        %v3911 = vpop.f32.mrb[0].mxu0
        %v3912 = vpop.f32.mrb[0].mxu0
        %3913 = vdwg.mxu0
        %3914 = vmatprep.subr.bf16.mxu0 0
        %3915 = vmatpush1.bf16.msra.mxu0 %v3538
        %3916 = vmatprep.subr.bf16.mxu0 0
        %3917 = vmatpush1.bf16.msra.mxu0 %v3539
        %3918 = vmatprep.subr.bf16.mxu0 0
        %3919 = vmatpush1.bf16.msra.mxu0 %v3540
        %3920 = vmatprep.subr.bf16.mxu0 0
        %3921 = vmatpush1.bf16.msra.mxu0 %v3541
        %3922 = vmatprep.subr.bf16.mxu0 0
        %3923 = vmatpush1.bf16.msra.mxu0 %v3542
        %3924 = vmatprep.subr.bf16.mxu0 0
        %3925 = vmatpush1.bf16.msra.mxu0 %v3543
        %3926 = vmatprep.subr.bf16.mxu0 0
        %3927 = vmatpush1.bf16.msra.mxu0 %v3544
        %3928 = vmatprep.subr.bf16.mxu0 0
        %3929 = vmatpush1.bf16.msra.mxu0 %v3545
        %3930 = vmatprep.subr.bf16.mxu0 0
        %3931 = vmatpush1.bf16.msra.mxu0 %v3546
        %3932 = vmatprep.subr.bf16.mxu0 0
        %3933 = vmatpush1.bf16.msra.mxu0 %v3547
        %3934 = vmatprep.subr.bf16.mxu0 0
        %3935 = vmatpush1.bf16.msra.mxu0 %v3548
        %3936 = vmatprep.subr.bf16.mxu0 0
        %3937 = vmatpush1.bf16.msra.mxu0 %v3549
        %3938 = vmatprep.subr.bf16.mxu0 0
        %3939 = vmatpush1.bf16.msra.mxu0 %v3550
        %3940 = vmatprep.subr.bf16.mxu0 0
        %3941 = vmatpush1.bf16.msra.mxu0 %v3551
        %3942 = vmatprep.subr.bf16.mxu0 0
        %3943 = vmatpush1.bf16.msra.mxu0 %v3552
        %3944 = vmatprep.subr.bf16.mxu0 0
        %3945 = vmatpush1.bf16.msra.mxu0 %v3553
        %3946 = vmatprep.mubr.bf16.mxu0 %v2678
        %3947 = vmatmul.mubr.bf16.gmra.mrb[0].mxu0 %v2677
        %v3948 = vpop.f32.mrb[0].mxu0
        %v3949 = vadd.f32 %v3909, %v3948
        %v3950 = vpop.f32.mrb[0].mxu0
        %v3951 = vpop.f32.mrb[0].mxu0
        %v3952 = vpop.f32.mrb[0].mxu0
        %3953 = vdwg.mxu0
        %3954 = vmatprep.subr.bf16.mxu0 0
        %3955 = vmatpush1.bf16.msra.mxu0 %v3554
        %3956 = vmatprep.subr.bf16.mxu0 0
        %3957 = vmatpush1.bf16.msra.mxu0 %v3555
        %3958 = vmatprep.subr.bf16.mxu0 0
        %3959 = vmatpush1.bf16.msra.mxu0 %v3556
        %3960 = vmatprep.subr.bf16.mxu0 0
        %3961 = vmatpush1.bf16.msra.mxu0 %v3557
        %3962 = vmatprep.subr.bf16.mxu0 0
        %3963 = vmatpush1.bf16.msra.mxu0 %v3558
        %3964 = vmatprep.subr.bf16.mxu0 0
        %3965 = vmatpush1.bf16.msra.mxu0 %v3559
        %3966 = vmatprep.subr.bf16.mxu0 0
        %3967 = vmatpush1.bf16.msra.mxu0 %v3560
        %3968 = vmatprep.subr.bf16.mxu0 0
        %3969 = vmatpush1.bf16.msra.mxu0 %v3561
        %3970 = vmatprep.subr.bf16.mxu0 0
        %3971 = vmatpush1.bf16.msra.mxu0 %v3562
        %3972 = vmatprep.subr.bf16.mxu0 0
        %3973 = vmatpush1.bf16.msra.mxu0 %v3563
        %3974 = vmatprep.subr.bf16.mxu0 0
        %3975 = vmatpush1.bf16.msra.mxu0 %v3564
        %3976 = vmatprep.subr.bf16.mxu0 0
        %3977 = vmatpush1.bf16.msra.mxu0 %v3565
        %3978 = vmatprep.subr.bf16.mxu0 0
        %3979 = vmatpush1.bf16.msra.mxu0 %v3566
        %3980 = vmatprep.subr.bf16.mxu0 0
        %3981 = vmatpush1.bf16.msra.mxu0 %v3567
        %3982 = vmatprep.subr.bf16.mxu0 0
        %3983 = vmatpush1.bf16.msra.mxu0 %v3568
        %3984 = vmatprep.subr.bf16.mxu0 0
        %3985 = vmatpush1.bf16.msra.mxu0 %v3569
        %3986 = vmatprep.mubr.bf16.mxu0 %v2680
        %3987 = vmatmul.mubr.bf16.gmra.mrb[0].mxu0 %v2679
        %v3988 = vpop.f32.mrb[0].mxu0
        %v3989 = vadd.f32 %v3949, %v3988
        %v3990 = vpop.f32.mrb[0].mxu0
        %v3991 = vpop.f32.mrb[0].mxu0
        %v3992 = vpop.f32.mrb[0].mxu0
        %3993 = vdwg.mxu0
        %3994 = vmatprep.subr.bf16.mxu0 0
        %3995 = vmatpush1.bf16.msra.mxu0 %v3570
        %3996 = vmatprep.subr.bf16.mxu0 0
        %3997 = vmatpush1.bf16.msra.mxu0 %v3571
        %3998 = vmatprep.subr.bf16.mxu0 0
        %3999 = vmatpush1.bf16.msra.mxu0 %v3572
        %4000 = vmatprep.subr.bf16.mxu0 0
        %4001 = vmatpush1.bf16.msra.mxu0 %v3573
        %4002 = vmatprep.subr.bf16.mxu0 0
        %4003 = vmatpush1.bf16.msra.mxu0 %v3574
        %4004 = vmatprep.subr.bf16.mxu0 0
        %4005 = vmatpush1.bf16.msra.mxu0 %v3575
        %4006 = vmatprep.subr.bf16.mxu0 0
        %4007 = vmatpush1.bf16.msra.mxu0 %v3576
        %4008 = vmatprep.subr.bf16.mxu0 0
        %4009 = vmatpush1.bf16.msra.mxu0 %v3577
        %4010 = vmatprep.subr.bf16.mxu0 0
        %4011 = vmatpush1.bf16.msra.mxu0 %v3578
        %4012 = vmatprep.subr.bf16.mxu0 0
        %4013 = vmatpush1.bf16.msra.mxu0 %v3579
        %4014 = vmatprep.subr.bf16.mxu0 0
        %4015 = vmatpush1.bf16.msra.mxu0 %v3580
        %4016 = vmatprep.subr.bf16.mxu0 0
        %4017 = vmatpush1.bf16.msra.mxu0 %v3581
        %4018 = vmatprep.subr.bf16.mxu0 0
        %4019 = vmatpush1.bf16.msra.mxu0 %v3582
        %4020 = vmatprep.subr.bf16.mxu0 0
        %4021 = vmatpush1.bf16.msra.mxu0 %v3583
        %4022 = vmatprep.subr.bf16.mxu0 0
        %4023 = vmatpush1.bf16.msra.mxu0 %v3584
        %4024 = vmatprep.subr.bf16.mxu0 0
        %4025 = vmatpush1.bf16.msra.mxu0 %v3585
        %4026 = vmatprep.mubr.bf16.mxu0 %v2682
        %4027 = vmatmul.mubr.bf16.gmra.mrb[0].mxu0 %v2681
        %v4028 = vpop.f32.mrb[0].mxu0
        %v4029 = vadd.f32 %v3989, %v4028
        %v4030 = vpop.f32.mrb[0].mxu0
        %v4031 = vpop.f32.mrb[0].mxu0
        %v4032 = vpop.f32.mrb[0].mxu0
        %4033 = vdwg.mxu0
        %v4034 = vadd.f32 %v2006, %v4029
        %4035 = vst.msk [vmem:[%s608] sm:$0xff] %vm629, %v4034
        %s4036 = sand.u32 %s433, 1
        %s4037 = scalar_lea.sflag [#allocation3], %s4036
        %s4038 = sand.u32 %s433, 1
        %s4039 = smul.addr %s4038, 8
        %s4040 = scalar_lea.vmem [#allocation2], %s4039
        %s4041 = sand.u32 %s459, 1
        %s4042 = scalar_lea.sflag [#allocation5], %s4041
        %s4043 = sand.u32 %s459, 1
        %s4044 = smul.addr %s4043, 32
        %s4045 = scalar_lea.vmem [#allocation4], %s4044
        // Predicated region
        $region93: #{tpu_custom_call.1} parent=91 // pred_check
          %p4046 = pneg %p443
        $region94: #{tpu_custom_call.1} parent=91 // pred_check_branch
          %4048 = sbr.rel (%p4046) target = $region96
        $region95: #{tpu_custom_call.1} parent=91 // pred_region
          %s4050 = ssub.s32 128, 128
          %4051 = vsyncadd %s4037, %s4050
          %s4052 = smul.addr %s37, 128
          %s4053 = scalar_lea.hbm %s18, %s4052
          %s4055 = sshll.u32 %s4040, 4
          %s4056 = int_to_ptr.vmem [resolvable:$true] %s4055
          %4058 = dma.vmem_to_hbm [thread:$0]  %s4056, 128, %s4053, %s4037
        $region96: #{tpu_custom_call.1} parent=91 // pred_fallthru
          _
        // Predicated region
        $region97: #{tpu_custom_call.1} parent=91 // pred_check
          %p4059 = pneg %p469
        $region98: #{tpu_custom_call.1} parent=91 // pred_check_branch
          %4061 = sbr.rel (%p4059) target = $region100
        $region99: #{tpu_custom_call.1} parent=91 // pred_region
          %s4063 = ssub.s32 512, 512
          %4064 = vsyncadd %s4042, %s4063
          %s4065 = smul.addr %s37, 4
          %s4066 = smul.addr %s4065, 128
          %s4067 = scalar_lea.hbm %s19, %s4066
          %s4068 = sshll.u32 %s4045, 4
          %s4069 = int_to_ptr.vmem [resolvable:$true] %s4068
          %4074 = dma.vmem_to_hbm [thread:$0]  %s4069, 512, %s4067, %s4042, 128, 128, 8
        $region100: #{tpu_custom_call.1} parent=91 // pred_fallthru
          _
      $region92: #{tpu_custom_call.1} parent=5 // pred_fallthru
        _
      %p4075 = scmp.le.s32.totalorder 2, %s32
      // Predicated region
      $region101: #{tpu_custom_call.1} parent=5 // pred_check
        %p4076 = pneg %p4075
      $region102: #{tpu_custom_call.1} parent=5 // pred_check_branch
        %4078 = sbr.rel (%p4076) target = $region104
      $region103: #{tpu_custom_call.1} parent=5 // pred_region
        %s4079 = ssub.s32 %s32, 2
        // Predicated region
        $region105: #{tpu_custom_call.1} parent=103 // pred_check
          %p4080 = pneg %p449
        $region106: #{tpu_custom_call.1} parent=103 // pred_check_branch
          %4082 = sbr.rel (%p4080) target = $region108
        $region107: #{tpu_custom_call.1} parent=103 // pred_region
          %s4083 = sand.u32 %s434, 1
          %s4084 = scalar_lea.sflag [#allocation3], %s4083
          %s4085 = sand.u32 %s434, 1
          %s4086 = smul.addr %s4085, 8
          %s4087 = scalar_lea.vmem [#allocation2], %s4086
          %4088 = dma.done %s4084, 128
        $region108: #{tpu_custom_call.1} parent=103 // pred_fallthru
          _
        // Predicated region
        $region109: #{tpu_custom_call.1} parent=103 // pred_check
          %p4089 = pneg %p475
        $region110: #{tpu_custom_call.1} parent=103 // pred_check_branch
          %4091 = sbr.rel (%p4089) target = $region112
        $region111: #{tpu_custom_call.1} parent=103 // pred_region
          %s4092 = sand.u32 %s460, 1
          %s4093 = scalar_lea.sflag [#allocation5], %s4092
          %s4094 = sand.u32 %s460, 1
          %s4095 = smul.addr %s4094, 32
          %s4096 = scalar_lea.vmem [#allocation4], %s4095
          %4097 = dma.done %s4093, 512
        $region112: #{tpu_custom_call.1} parent=103 // pred_fallthru
          _
      $region104: #{tpu_custom_call.1} parent=5 // pred_fallthru
        _
    $region6: #{tpu_custom_call.1} parent=1 // loop_footer
      %s36 = sadd.s32 1, %s32
    $region7: #{tpu_custom_call.1} parent=1 // loop_footer_branch
      %31 = sbr.rel target = $region3
    $region8: #{tpu_custom_call.1} parent=1 // loop_exit
      _
    %4098 = vsyncpa [#allocation3], 1
    %s4099 = scalar_lea.sflag [#allocation3], 1
    %4100 = vsyncpa %s4099, 1
    %4101 = vsyncpa [#allocation5], 1
    %s4102 = scalar_lea.sflag [#allocation5], 1
    %4103 = vsyncpa %s4102, 1

</llo_original>
